<compile_context>
chip_gen: v7x
topology: tpu7x:2x2x1
jax: 0.10.0
libtpu: 0.0.40
codegen_flags: <defaults>
</compile_context>

<pallas_src>
import jax
import jax.numpy as jnp
from jax.experimental import pallas as pl
from jax.experimental.pallas import tpu as pltpu

# ----------------------------- config ---------------------------------------
B = 2            # batch
S = 8            # encoder (source) sequence length
T = 8            # decoder (target) sequence length
D = 32           # hidden size
H = 2            # attention heads
HD = D // H      # head dim
FF = 64          # feed-forward size
V = 64           # vocab size
N_LAYERS = 2     # encoder layers == decoder layers
NEG = -1e9       # additive mask value
EPS = 1e-12      # LayerNorm eps (BERT default)
SCALE = 1.0 / float(HD) ** 0.5
LANE = 128       # TPU lane width (blob last dim / padded LM-head width)
CDT = jnp.bfloat16   # MXU operand dtype (f32 accumulation everywhere)


# --------------------------- static blob layouts ------------------------------
def _build_layouts():
    # Weight blob: each matrix occupies rows [off:off+nr], cols [0:nc] of a (W_ROWS,128)
    # array.  All row counts are multiples of 8 so offsets stay sublane-aligned.
    w_entries = []

    def w_add(name, nr, nc):
        w_entries.append((name, nr, nc))

    w_add("enc_tok_emb", V, D)
    w_add("enc_pos_emb", S, D)
    w_add("dec_tok_emb", V, D)
    w_add("dec_pos_emb", T, D)
    for l in range(N_LAYERS):
        w_add(f"enc{l}_wqkv", D, 3 * D)
        w_add(f"enc{l}_wo", D, D)
        w_add(f"enc{l}_w1", D, FF)
        w_add(f"enc{l}_w2", FF, D)
    for l in range(N_LAYERS):
        w_add(f"dec{l}_wqkv", D, 3 * D)
        w_add(f"dec{l}_wo_s", D, D)
        w_add(f"dec{l}_wq_c", D, D)
        w_add(f"dec{l}_wkv_c", D, 2 * D)
        w_add(f"dec{l}_wo_c", D, D)
        w_add(f"dec{l}_w1", D, FF)
        w_add(f"dec{l}_w2", FF, D)
    w_add("lm_w", D, LANE)                       # LM head padded to 128 lanes

    w_layout, off = {}, 0
    for name, nr, nc in w_entries:
        w_layout[name] = (off, nr, nc)
        off += nr
    w_rows = ((off + 7) // 8) * 8

    # Vector blob: one row per bias / LN parameter vector, cols [0:nc].
    v_names = ["enc_emb_ln_g", "enc_emb_ln_b", "dec_emb_ln_g", "dec_emb_ln_b"]
    v_sizes = [D, D, D, D]
    for l in range(N_LAYERS):
        v_names += [f"enc{l}_bqkv", f"enc{l}_bo", f"enc{l}_b1", f"enc{l}_b2",
                    f"enc{l}_ln1_g", f"enc{l}_ln1_b", f"enc{l}_ln2_g", f"enc{l}_ln2_b"]
        v_sizes += [3 * D, D, FF, D, D, D, D, D]
    for l in range(N_LAYERS):
        v_names += [f"dec{l}_bqkv", f"dec{l}_bo_s", f"dec{l}_bq_c", f"dec{l}_bkv_c",
                    f"dec{l}_bo_c", f"dec{l}_b1", f"dec{l}_b2",
                    f"dec{l}_ln1_g", f"dec{l}_ln1_b", f"dec{l}_lnc_g", f"dec{l}_lnc_b",
                    f"dec{l}_ln2_g", f"dec{l}_ln2_b"]
        v_sizes += [3 * D, D, D, 2 * D, D, FF, D, D, D, D, D, D, D]
    v_names.append("lm_b")
    v_sizes.append(LANE)

    v_layout = {name: (i, sz) for i, (name, sz) in enumerate(zip(v_names, v_sizes))}
    v_rows = ((len(v_names) + 7) // 8) * 8
    return w_layout, w_rows, v_layout, v_rows


W_LAYOUT, W_ROWS, V_LAYOUT, V_ROWS = _build_layouts()


# --------------------------- fused kernel ------------------------------------
def _rrs_fused_kernel(ids_e_ref, am_ref, ids_d_ref, dam_ref, w_ref, v_ref, out_ref):
    f32 = jnp.float32

    # ---- static-offset slices into the packed blobs (zero-cost views + loads) ----
    def wmat(name):
        off, nr, nc = W_LAYOUT[name]
        return w_ref[off:off + nr, :nc]                       # bf16 (nr, nc)

    def vrow(name):
        off, nc = V_LAYOUT[name]
        return v_ref[off:off + 1, :nc]                        # f32 (1, nc)

    # ---- MXU matmuls: bf16 operands, f32 accumulation ----
    def mxdot(a, b):                                          # (m,k) @ (k,n)
        return jnp.dot(a.astype(CDT), b.astype(CDT), preferred_element_type=f32)

    def mxdot_nt(a, b):                                       # contract last dims: (m,k),(n,k)->(m,n)
        return jax.lax.dot_general(a.astype(CDT), b.astype(CDT),
                                   (((1,), (1,)), ((), ())),
                                   preferred_element_type=f32)

    # ---- fused building blocks (all values VMEM-resident, f32 VPU math) ----
    def layer_norm(x, pfx):                                   # single-pass mean / var
        s = jnp.sum(x, axis=-1, keepdims=True)
        ss = jnp.sum(x * x, axis=-1, keepdims=True)
        mu = s * (1.0 / D)
        var = ss * (1.0 / D) - mu * mu
        return (x - mu) * jax.lax.rsqrt(var + EPS) * vrow(pfx + "_g") + vrow(pfx + "_b")

    def gelu(v):                                              # tanh approximation
        c = 0.7978845608028654                                # sqrt(2/pi)
        return 0.5 * v * (1.0 + jnp.tanh(c * (v + 0.044715 * v * v * v)))

    def softmax(sc):                                          # masked rows stay finite
        sc = sc - jnp.max(sc, axis=-1, keepdims=True)
        p = jnp.exp(sc)
        return p * pl.reciprocal(jnp.sum(p, axis=-1, keepdims=True), approx=True)

    def attention(q_all, kv_all, bias, wo_name, bo_name):
        # q_all: (nq, D) biased+scaled queries, heads concatenated along lanes.
        # kv_all: (nk, 2D) = [K | V], heads concatenated along lanes.
        ctx = []
        for h in range(H):
            q = q_all[:, h * HD:(h + 1) * HD]
            k = kv_all[:, h * HD:(h + 1) * HD]
            v = kv_all[:, D + h * HD:D + (h + 1) * HD]
            p = softmax(mxdot_nt(q, k) + bias)                # no explicit K transpose
            ctx.append(mxdot(p, v))
        ctx = jnp.concatenate(ctx, axis=-1)                   # (nq, D)
        return mxdot(ctx, wmat(wo_name)) + vrow(bo_name)      # single fused output proj

    def embed(ids, n, tok_name, pos_name):
        # in-kernel embedding: one-hot (n,V) matmul against the resident table
        onehot = (ids.reshape(n, 1) ==
                  jax.lax.broadcasted_iota(jnp.int32, (n, V), 1)).astype(f32)
        return mxdot(onehot, wmat(tok_name)) + wmat(pos_name).astype(f32)

    # ---- additive attention masks built in-kernel (per-batch) ----
    am = am_ref[...].reshape(1, S)                            # (1, S) keep-mask
    dam = dam_ref[...].reshape(1, T)                          # (1, T)
    enc_bias = (1.0 - am) * NEG                               # (1, S), key padding
    row = jax.lax.broadcasted_iota(jnp.int32, (T, T), 0)
    col = jax.lax.broadcasted_iota(jnp.int32, (T, T), 1)
    causal = (col <= row).astype(f32)
    dec_bias = (1.0 - causal * dam) * NEG                     # (T, T)

    # ---------------------------- encoder ------------------------------------
    x = embed(ids_e_ref[...], S, "enc_tok_emb", "enc_pos_emb")      # (S, D)
    x = layer_norm(x, "enc_emb_ln")
    for l in range(N_LAYERS):
        qkv = mxdot(x, wmat(f"enc{l}_wqkv")) + vrow(f"enc{l}_bqkv")  # (S, 3D) fused QKV
        a = attention(qkv[:, :D] * SCALE, qkv[:, D:], enc_bias,
                      f"enc{l}_wo", f"enc{l}_bo")
        x = layer_norm(x + a, f"enc{l}_ln1")
        mid = gelu(mxdot(x, wmat(f"enc{l}_w1")) + vrow(f"enc{l}_b1"))
        f = mxdot(mid, wmat(f"enc{l}_w2")) + vrow(f"enc{l}_b2")
        x = layer_norm(x + f, f"enc{l}_ln2")
    enc_out = x                                                      # (S, D)

    # ---------------------------- decoder ------------------------------------
    y = embed(ids_d_ref[...], T, "dec_tok_emb", "dec_pos_emb")       # (T, D)
    y = layer_norm(y, "dec_emb_ln")
    for l in range(N_LAYERS):
        # masked self-attention (fused QKV)
        qkv = mxdot(y, wmat(f"dec{l}_wqkv")) + vrow(f"dec{l}_bqkv")
        a = attention(qkv[:, :D] * SCALE, qkv[:, D:], dec_bias,
                      f"dec{l}_wo_s", f"dec{l}_bo_s")
        y = layer_norm(y + a, f"dec{l}_ln1")
        # cross-attention over encoder output (fused KV)
        qc = (mxdot(y, wmat(f"dec{l}_wq_c")) + vrow(f"dec{l}_bq_c")) * SCALE
        kvc = mxdot(enc_out, wmat(f"dec{l}_wkv_c")) + vrow(f"dec{l}_bkv_c")
        c = attention(qc, kvc, enc_bias, f"dec{l}_wo_c", f"dec{l}_bo_c")
        y = layer_norm(y + c, f"dec{l}_lnc")
        # feed-forward
        mid = gelu(mxdot(y, wmat(f"dec{l}_w1")) + vrow(f"dec{l}_b1"))
        f = mxdot(mid, wmat(f"dec{l}_w2")) + vrow(f"dec{l}_b2")
        y = layer_norm(y + f, f"dec{l}_ln2")

    # ------------------ LM head (lane-dense 128-wide store) -------------------
    out_ref[...] = mxdot(y, wmat("lm_w")) + vrow("lm_b")             # (T, 128)


# --------------------------- forward wrapper ----------------------------------
@jax.jit
def rrs_forward(wblob, vblob, input_ids, attention_mask,
                decoder_input_ids, decoder_attention_mask):
    # ids laid out with sequence on sublanes (B,S,1); masks with sequence on lanes (B,1,S)
    ids_e = input_ids.astype(jnp.int32).reshape(B, S, 1)
    am = attention_mask.astype(jnp.float32).reshape(B, 1, S)
    ids_d = decoder_input_ids.astype(jnp.int32).reshape(B, T, 1)
    dam = decoder_attention_mask.astype(jnp.float32).reshape(B, 1, T)

    out = pl.pallas_call(
        _rrs_fused_kernel,
        out_shape=jax.ShapeDtypeStruct((B * T, LANE), jnp.float32),
        grid_spec=pltpu.PrefetchScalarGridSpec(
            num_scalar_prefetch=0,
            grid=(B,),                                     # batch-parallel (2 TCs on v7x)
            in_specs=[
                pl.BlockSpec((1, S, 1), lambda b: (b, 0, 0)),     # encoder ids
                pl.BlockSpec((1, 1, S), lambda b: (b, 0, 0)),     # encoder mask
                pl.BlockSpec((1, T, 1), lambda b: (b, 0, 0)),     # decoder ids
                pl.BlockSpec((1, 1, T), lambda b: (b, 0, 0)),     # decoder mask
                pl.BlockSpec((W_ROWS, LANE), lambda b: (0, 0)),   # weight blob (resident)
                pl.BlockSpec((V_ROWS, LANE), lambda b: (0, 0)),   # bias/LN blob (resident)
            ],
            out_specs=pl.BlockSpec((T, LANE), lambda b: (b, 0)),
        ),
        compiler_params=pltpu.CompilerParams(
            dimension_semantics=("parallel",),
            vmem_limit_bytes=8 * 1024 * 1024,
        ),
    )(ids_e, am, ids_d, dam, wblob, vblob)
    return out[:, :V].reshape(B, T, V)                      # drop lane padding in XLA


# --------------------------- parameter packing ---------------------------------
def pack_params(P):
    """Pack the per-tensor params into the two lane-dense blobs used by the kernel."""
    wblob = jnp.zeros((W_ROWS, LANE), jnp.float32)
    vblob = jnp.zeros((V_ROWS, LANE), jnp.float32)

    def wput(blob, name, arr):
        off, nr, nc = W_LAYOUT[name]
        arr = jnp.asarray(arr, jnp.float32)
        assert arr.shape == (nr, nc), (name, arr.shape, (nr, nc))
        return blob.at[off:off + nr, :nc].set(arr)

    def vput(blob, name, arr):
        off, nc = V_LAYOUT[name]
        arr = jnp.asarray(arr, jnp.float32)
        assert arr.shape == (nc,), (name, arr.shape, nc)
        return blob.at[off, :nc].set(arr)

    wblob = wput(wblob, "enc_tok_emb", P["enc_tok_emb"])
    wblob = wput(wblob, "enc_pos_emb", P["enc_pos_emb"])
    wblob = wput(wblob, "dec_tok_emb", P["dec_tok_emb"])
    wblob = wput(wblob, "dec_pos_emb", P["dec_pos_emb"])
    for l in range(N_LAYERS):
        wblob = wput(wblob, f"enc{l}_wqkv", P["enc_wqkv"][l])
        wblob = wput(wblob, f"enc{l}_wo", P["enc_wo"][l])
        wblob = wput(wblob, f"enc{l}_w1", P["enc_w1"][l])
        wblob = wput(wblob, f"enc{l}_w2", P["enc_w2"][l])
    for l in range(N_LAYERS):
        wblob = wput(wblob, f"dec{l}_wqkv", P["dec_wqkv"][l])
        wblob = wput(wblob, f"dec{l}_wo_s", P["dec_wo_s"][l])
        wblob = wput(wblob, f"dec{l}_wq_c", P["dec_wq_c"][l])
        wblob = wput(wblob, f"dec{l}_wkv_c", P["dec_wkv_c"][l])
        wblob = wput(wblob, f"dec{l}_wo_c", P["dec_wo_c"][l])
        wblob = wput(wblob, f"dec{l}_w1", P["dec_w1"][l])
        wblob = wput(wblob, f"dec{l}_w2", P["dec_w2"][l])
    wblob = wput(wblob, "lm_w", jnp.pad(P["lm_w"], ((0, 0), (0, LANE - V))))

    vblob = vput(vblob, "enc_emb_ln_g", P["enc_emb_ln_g"])
    vblob = vput(vblob, "enc_emb_ln_b", P["enc_emb_ln_b"])
    vblob = vput(vblob, "dec_emb_ln_g", P["dec_emb_ln_g"])
    vblob = vput(vblob, "dec_emb_ln_b", P["dec_emb_ln_b"])
    for l in range(N_LAYERS):
        vblob = vput(vblob, f"enc{l}_bqkv", P["enc_bqkv"][l])
        vblob = vput(vblob, f"enc{l}_bo", P["enc_bo"][l])
        vblob = vput(vblob, f"enc{l}_b1", P["enc_b1"][l])
        vblob = vput(vblob, f"enc{l}_b2", P["enc_b2"][l])
        vblob = vput(vblob, f"enc{l}_ln1_g", P["enc_ln1_g"][l])
        vblob = vput(vblob, f"enc{l}_ln1_b", P["enc_ln1_b"][l])
        vblob = vput(vblob, f"enc{l}_ln2_g", P["enc_ln2_g"][l])
        vblob = vput(vblob, f"enc{l}_ln2_b", P["enc_ln2_b"][l])
    for l in range(N_LAYERS):
        vblob = vput(vblob, f"dec{l}_bqkv", P["dec_bqkv"][l])
        vblob = vput(vblob, f"dec{l}_bo_s", P["dec_bo_s"][l])
        vblob = vput(vblob, f"dec{l}_bq_c", P["dec_bq_c"][l])
        vblob = vput(vblob, f"dec{l}_bkv_c", P["dec_bkv_c"][l])
        vblob = vput(vblob, f"dec{l}_bo_c", P["dec_bo_c"][l])
        vblob = vput(vblob, f"dec{l}_b1", P["dec_b1"][l])
        vblob = vput(vblob, f"dec{l}_b2", P["dec_b2"][l])
        vblob = vput(vblob, f"dec{l}_ln1_g", P["dec_ln1_g"][l])
        vblob = vput(vblob, f"dec{l}_ln1_b", P["dec_ln1_b"][l])
        vblob = vput(vblob, f"dec{l}_lnc_g", P["dec_lnc_g"][l])
        vblob = vput(vblob, f"dec{l}_lnc_b", P["dec_lnc_b"][l])
        vblob = vput(vblob, f"dec{l}_ln2_g", P["dec_ln2_g"][l])
        vblob = vput(vblob, f"dec{l}_ln2_b", P["dec_ln2_b"][l])
    vblob = vput(vblob, "lm_b", jnp.pad(P["lm_b"], (0, LANE - V)))

    # Weight blob in bf16 (MXU-native, half the DMA bytes); biases/LN stay f32.
    return wblob.astype(jnp.bfloat16), vblob


# --------------------------- pure-JAX reference --------------------------------
def rrs_reference(P, input_ids, attention_mask, decoder_input_ids, decoder_attention_mask):
    """Plain-jnp f32 reference implementing the same math as the fused kernel."""
    f32 = jnp.float32

    def layer_norm(x, g, b):
        mu = x.mean(-1, keepdims=True)
        var = ((x - mu) ** 2).mean(-1, keepdims=True)
        return (x - mu) / jnp.sqrt(var + EPS) * g + b

    def gelu(v):
        c = 0.7978845608028654
        return 0.5 * v * (1.0 + jnp.tanh(c * (v + 0.044715 * v ** 3)))

    def attention(q_all, kv_all, bias, wo, bo):
        outs = []
        for h in range(H):
            q = q_all[..., h * HD:(h + 1) * HD]
            k = kv_all[..., h * HD:(h + 1) * HD]
            v = kv_all[..., D + h * HD:D + (h + 1) * HD]
            s = jnp.einsum("bqd,bkd->bqk", q, k) + bias
            p = jax.nn.softmax(s, axis=-1)
            outs.append(jnp.einsum("bqk,bkd->bqd", p, v))
        return jnp.concatenate(outs, -1) @ wo + bo

    am = attention_mask.astype(f32)
    dam = decoder_attention_mask.astype(f32)
    enc_bias = ((1.0 - am) * NEG)[:, None, :]
    causal = jnp.tril(jnp.ones((T, T), f32))
    dec_bias = (1.0 - causal[None] * dam[:, None, :]) * NEG

    x = jnp.take(P["enc_tok_emb"], input_ids, axis=0) + P["enc_pos_emb"][None]
    x = layer_norm(x, P["enc_emb_ln_g"], P["enc_emb_ln_b"])
    for l in range(N_LAYERS):
        qkv = x @ P["enc_wqkv"][l] + P["enc_bqkv"][l]
        a = attention(qkv[..., :D] * SCALE, qkv[..., D:], enc_bias,
                      P["enc_wo"][l], P["enc_bo"][l])
        x = layer_norm(x + a, P["enc_ln1_g"][l], P["enc_ln1_b"][l])
        f = gelu(x @ P["enc_w1"][l] + P["enc_b1"][l]) @ P["enc_w2"][l] + P["enc_b2"][l]
        x = layer_norm(x + f, P["enc_ln2_g"][l], P["enc_ln2_b"][l])
    enc_out = x

    y = jnp.take(P["dec_tok_emb"], decoder_input_ids, axis=0) + P["dec_pos_emb"][None]
    y = layer_norm(y, P["dec_emb_ln_g"], P["dec_emb_ln_b"])
    for l in range(N_LAYERS):
        qkv = y @ P["dec_wqkv"][l] + P["dec_bqkv"][l]
        a = attention(qkv[..., :D] * SCALE, qkv[..., D:], dec_bias,
                      P["dec_wo_s"][l], P["dec_bo_s"][l])
        y = layer_norm(y + a, P["dec_ln1_g"][l], P["dec_ln1_b"][l])
        qc = (y @ P["dec_wq_c"][l] + P["dec_bq_c"][l]) * SCALE
        kvc = enc_out @ P["dec_wkv_c"][l] + P["dec_bkv_c"][l]
        c = attention(qc, kvc, enc_bias, P["dec_wo_c"][l], P["dec_bo_c"][l])
        y = layer_norm(y + c, P["dec_lnc_g"][l], P["dec_lnc_b"][l])
        f = gelu(y @ P["dec_w1"][l] + P["dec_b1"][l]) @ P["dec_w2"][l] + P["dec_b2"][l]
        y = layer_norm(y + f, P["dec_ln2_g"][l], P["dec_ln2_b"][l])

    return y @ P["lm_w"] + P["lm_b"]


# --------------------------- params -------------------------------------------
def init_params(key):
    ks = iter(jax.random.split(key, 96))

    def rnd(shape, scale=0.02):
        return (scale * jax.random.normal(next(ks), shape)).astype(jnp.float32)

    L = N_LAYERS
    return dict(
        enc_tok_emb=rnd((V, D)), enc_pos_emb=rnd((S, D)),
        dec_tok_emb=rnd((V, D)), dec_pos_emb=rnd((T, D)),
        enc_emb_ln_g=1.0 + rnd((D,)), enc_emb_ln_b=rnd((D,)),
        dec_emb_ln_g=1.0 + rnd((D,)), dec_emb_ln_b=rnd((D,)),
        # encoder layers (head-fused weight layout: Q|K|V along the output axis)
        enc_wqkv=rnd((L, D, 3 * D)), enc_bqkv=rnd((L, 3 * D)),
        enc_wo=rnd((L, D, D)), enc_bo=rnd((L, D)),
        enc_w1=rnd((L, D, FF)), enc_b1=rnd((L, FF)),
        enc_w2=rnd((L, FF, D)), enc_b2=rnd((L, D)),
        enc_ln1_g=1.0 + rnd((L, D)), enc_ln1_b=rnd((L, D)),
        enc_ln2_g=1.0 + rnd((L, D)), enc_ln2_b=rnd((L, D)),
        # decoder layers
        dec_wqkv=rnd((L, D, 3 * D)), dec_bqkv=rnd((L, 3 * D)),
        dec_wo_s=rnd((L, D, D)), dec_bo_s=rnd((L, D)),
        dec_wq_c=rnd((L, D, D)), dec_bq_c=rnd((L, D)),
        dec_wkv_c=rnd((L, D, 2 * D)), dec_bkv_c=rnd((L, 2 * D)),
        dec_wo_c=rnd((L, D, D)), dec_bo_c=rnd((L, D)),
        dec_w1=rnd((L, D, FF)), dec_b1=rnd((L, FF)),
        dec_w2=rnd((L, FF, D)), dec_b2=rnd((L, D)),
        dec_ln1_g=1.0 + rnd((L, D)), dec_ln1_b=rnd((L, D)),
        dec_lnc_g=1.0 + rnd((L, D)), dec_lnc_b=rnd((L, D)),
        dec_ln2_g=1.0 + rnd((L, D)), dec_ln2_b=rnd((L, D)),
        # LM head
        lm_w=rnd((D, V)), lm_b=rnd((V,)),
    )


# --------------------------- main ----------------------------------------------
if __name__ == "__main__":
    key = jax.random.PRNGKey(0)
    k_src, k_tgt = jax.random.split(key, 2)

    input_ids = jax.random.randint(k_src, (B, S), 0, V, dtype=jnp.int32)
    attention_mask = jnp.ones((B, S), jnp.int32).at[1, 6:].set(0)
    decoder_input_ids = jax.random.randint(k_tgt, (B, T), 0, V, dtype=jnp.int32)
    decoder_attention_mask = jnp.ones((B, T), jnp.int32).at[0, 7:].set(0)

    params = init_params(jax.random.PRNGKey(42))
    wblob, vblob = pack_params(params)

    logits = rrs_forward(wblob, vblob, input_ids, attention_mask,
                         decoder_input_ids, decoder_attention_mask)
    jax.block_until_ready(logits)
    assert logits.shape == (B, T, V), logits.shape
    assert bool(jnp.all(jnp.isfinite(logits)))

    # correctness check against the pure-JAX f32 reference
    ref = rrs_reference(params, input_ids, attention_mask,
                        decoder_input_ids, decoder_attention_mask)
    err = float(jnp.max(jnp.abs(logits - ref)))
    assert err < 2e-2, f"kernel/reference mismatch: max|diff|={err}"
    print("KERNEL_OK")
</pallas_src>

<mosaic_0001>
module attributes {stable_mosaic.version = 11 : i64} {
  func.func @_rrs_fused_kernel(%arg0: i32, %arg1: memref<1x8x1xi32, #tpu.memory_space<vmem>>, %arg2: memref<1x1x8xf32, #tpu.memory_space<vmem>>, %arg3: memref<1x8x1xi32, #tpu.memory_space<vmem>>, %arg4: memref<1x1x8xf32, #tpu.memory_space<vmem>>, %arg5: memref<1008x128xbf16, #tpu.memory_space<vmem>>, %arg6: memref<48x128xf32, #tpu.memory_space<vmem>>, %arg7: memref<8x128xf32, #tpu.memory_space<vmem>>) attributes {dimension_semantics = [#tpu.dimension_semantics<parallel>], iteration_bounds = array<i64: 2>, scalar_prefetch = 0 : i64, scratch_operands = 0 : i64, tpu.core_type = #tpu.core_type<tc>, window_params = [{transform_indices = @transform_0, window_bounds = array<i64: 1, 8, 1>}, {transform_indices = @transform_1, window_bounds = array<i64: 1, 1, 8>}, {transform_indices = @transform_2, window_bounds = array<i64: 1, 8, 1>}, {transform_indices = @transform_3, window_bounds = array<i64: 1, 1, 8>}, {pipeline_mode = #tpu.pipeline_mode<synchronous>, transform_indices = @transform_4, window_bounds = array<i64: 1008, 128>}, {pipeline_mode = #tpu.pipeline_mode<synchronous>, transform_indices = @transform_5, window_bounds = array<i64: 48, 128>}, {transform_indices = @transform_6, window_bounds = array<i64: 8, 128>}]} {
    %c0 = arith.constant 0 : index
    %c0_0 = arith.constant 0 : index
    %c0_1 = arith.constant 0 : index
    %0 = vector.load %arg2[%c0, %c0_0, %c0_1] : memref<1x1x8xf32, #tpu.memory_space<vmem>>, vector<1x1x8xf32>
    %1 = vector.shape_cast %0 : vector<1x1x8xf32> to vector<1x8xf32>
    %c0_2 = arith.constant 0 : index
    %c0_3 = arith.constant 0 : index
    %c0_4 = arith.constant 0 : index
    %2 = vector.load %arg4[%c0_2, %c0_3, %c0_4] : memref<1x1x8xf32, #tpu.memory_space<vmem>>, vector<1x1x8xf32>
    %3 = vector.shape_cast %2 : vector<1x1x8xf32> to vector<1x8xf32>
    %cst = arith.constant 1.000000e+00 : f32
    %4 = vector.broadcast %cst : f32 to vector<1x8xf32>
    %5 = arith.subf %4, %1 : vector<1x8xf32>
    %cst_5 = arith.constant -1.000000e+09 : f32
    %6 = vector.broadcast %cst_5 : f32 to vector<1x8xf32>
    %7 = arith.mulf %5, %6 : vector<1x8xf32>
    %8 = tpu.iota {dimensions = array<i32: 0>} : vector<8x8xi32>
    %9 = tpu.iota {dimensions = array<i32: 1>} : vector<8x8xi32>
    %10 = arith.cmpi sle, %9, %8 : vector<8x8xi32>
    %11 = arith.extui %10 : vector<8x8xi1> to vector<8x8xi32>
    %12 = arith.sitofp %11 : vector<8x8xi32> to vector<8x8xf32>
    %13 = vector.broadcast %3 : vector<1x8xf32> to vector<8x8xf32>
    %14 = arith.mulf %12, %13 : vector<8x8xf32>
    %cst_6 = arith.constant 1.000000e+00 : f32
    %15 = vector.broadcast %cst_6 : f32 to vector<8x8xf32>
    %16 = arith.subf %15, %14 : vector<8x8xf32>
    %cst_7 = arith.constant -1.000000e+09 : f32
    %17 = vector.broadcast %cst_7 : f32 to vector<8x8xf32>
    %18 = arith.mulf %16, %17 : vector<8x8xf32>
    %c0_8 = arith.constant 0 : index
    %c0_9 = arith.constant 0 : index
    %c0_10 = arith.constant 0 : index
    %19 = vector.load %arg1[%c0_8, %c0_9, %c0_10] : memref<1x8x1xi32, #tpu.memory_space<vmem>>, vector<1x8x1xi32>
    %20 = vector.shape_cast %19 : vector<1x8x1xi32> to vector<8x1xi32>
    %21 = tpu.iota {dimensions = array<i32: 1>} : vector<8x64xi32>
    %22 = vector.broadcast %20 : vector<8x1xi32> to vector<8x64xi32>
    %23 = arith.cmpi eq, %22, %21 : vector<8x64xi32>
    %24 = arith.extui %23 : vector<8x64xi1> to vector<8x64xi32>
    %25 = arith.sitofp %24 : vector<8x64xi32> to vector<8x64xf32>
    %c0_11 = arith.constant 0 : index
    %c0_12 = arith.constant 0 : index
    %26 = vector.load %arg5[%c0_11, %c0_12] : memref<1008x128xbf16, #tpu.memory_space<vmem>>, vector<64x32xbf16>
    %27 = arith.truncf %25 : vector<8x64xf32> to vector<8x64xbf16>
    %cst_13 = arith.constant dense<0.000000e+00> : vector<8x32xf32>
    %28 = tpu.matmul %27, %26, %cst_13 {dimension_numbers = #tpu.dot_dimension_numbers<[1], [0], [0], [1], [0, 0, 1, 1], [], []>} : vector<8x64xbf16>, vector<64x32xbf16>, vector<8x32xf32> -> vector<8x32xf32>
    %c64 = arith.constant 64 : index
    %c0_14 = arith.constant 0 : index
    %29 = vector.load %arg5[%c64, %c0_14] : memref<1008x128xbf16, #tpu.memory_space<vmem>>, vector<8x32xbf16>
    %30 = arith.extf %29 : vector<8x32xbf16> to vector<8x32xf32>
    %31 = arith.addf %28, %30 : vector<8x32xf32>
    %cst_15 = arith.constant dense<0.000000e+00> : vector<8xf32>
    %32 = vector.multi_reduction <add>, %31, %cst_15 [1] : vector<8x32xf32> to vector<8xf32>
    %33 = vector.shape_cast %32 : vector<8xf32> to vector<8x1xf32>
    %34 = arith.mulf %31, %31 : vector<8x32xf32>
    %cst_16 = arith.constant dense<0.000000e+00> : vector<8xf32>
    %35 = vector.multi_reduction <add>, %34, %cst_16 [1] : vector<8x32xf32> to vector<8xf32>
    %36 = vector.shape_cast %35 : vector<8xf32> to vector<8x1xf32>
    %cst_17 = arith.constant 3.125000e-02 : f32
    %37 = vector.broadcast %cst_17 : f32 to vector<8x1xf32>
    %38 = arith.mulf %33, %37 : vector<8x1xf32>
    %cst_18 = arith.constant 3.125000e-02 : f32
    %39 = vector.broadcast %cst_18 : f32 to vector<8x1xf32>
    %40 = arith.mulf %36, %39 : vector<8x1xf32>
    %41 = arith.mulf %38, %38 : vector<8x1xf32>
    %42 = arith.subf %40, %41 : vector<8x1xf32>
    %43 = vector.broadcast %38 : vector<8x1xf32> to vector<8x32xf32>
    %44 = arith.subf %31, %43 : vector<8x32xf32>
    %cst_19 = arith.constant 9.99999996E-13 : f32
    %45 = vector.broadcast %cst_19 : f32 to vector<8x1xf32>
    %46 = arith.addf %42, %45 : vector<8x1xf32>
    %47 = math.rsqrt %46 : vector<8x1xf32>
    %48 = vector.broadcast %47 : vector<8x1xf32> to vector<8x32xf32>
    %49 = arith.mulf %44, %48 : vector<8x32xf32>
    %c0_20 = arith.constant 0 : index
    %c0_21 = arith.constant 0 : index
    %50 = vector.load %arg6[%c0_20, %c0_21] : memref<48x128xf32, #tpu.memory_space<vmem>>, vector<1x32xf32>
    %51 = vector.broadcast %50 : vector<1x32xf32> to vector<8x32xf32>
    %52 = arith.mulf %49, %51 : vector<8x32xf32>
    %c1 = arith.constant 1 : index
    %c0_22 = arith.constant 0 : index
    %53 = vector.load %arg6[%c1, %c0_22] : memref<48x128xf32, #tpu.memory_space<vmem>>, vector<1x32xf32>
    %54 = vector.broadcast %53 : vector<1x32xf32> to vector<8x32xf32>
    %55 = arith.addf %52, %54 : vector<8x32xf32>
    %c144 = arith.constant 144 : index
    %c0_23 = arith.constant 0 : index
    %56 = vector.load %arg5[%c144, %c0_23] : memref<1008x128xbf16, #tpu.memory_space<vmem>>, vector<32x96xbf16>
    %57 = arith.truncf %55 : vector<8x32xf32> to vector<8x32xbf16>
    %cst_24 = arith.constant dense<0.000000e+00> : vector<8x96xf32>
    %58 = tpu.matmul %57, %56, %cst_24 {dimension_numbers = #tpu.dot_dimension_numbers<[1], [0], [0], [1], [0, 0, 1, 1], [], []>} : vector<8x32xbf16>, vector<32x96xbf16>, vector<8x96xf32> -> vector<8x96xf32>
    %c4 = arith.constant 4 : index
    %c0_25 = arith.constant 0 : index
    %59 = vector.load %arg6[%c4, %c0_25] : memref<48x128xf32, #tpu.memory_space<vmem>>, vector<1x96xf32>
    %60 = vector.broadcast %59 : vector<1x96xf32> to vector<8x96xf32>
    %61 = arith.addf %58, %60 : vector<8x96xf32>
    %62 = vector.extract_strided_slice %61 {offsets = [0, 0], sizes = [8, 32], strides = [1, 1]} : vector<8x96xf32> to vector<8x32xf32>
    %cst_26 = arith.constant 2.500000e-01 : f32
    %63 = vector.broadcast %cst_26 : f32 to vector<8x32xf32>
    %64 = arith.mulf %62, %63 : vector<8x32xf32>
    %65 = vector.extract_strided_slice %61 {offsets = [0, 32], sizes = [8, 64], strides = [1, 1]} : vector<8x96xf32> to vector<8x64xf32>
    %66 = vector.extract_strided_slice %64 {offsets = [0, 0], sizes = [8, 16], strides = [1, 1]} : vector<8x32xf32> to vector<8x16xf32>
    %67 = vector.extract_strided_slice %65 {offsets = [0, 0], sizes = [8, 16], strides = [1, 1]} : vector<8x64xf32> to vector<8x16xf32>
    %68 = vector.extract_strided_slice %65 {offsets = [0, 32], sizes = [8, 16], strides = [1, 1]} : vector<8x64xf32> to vector<8x16xf32>
    %69 = arith.truncf %66 : vector<8x16xf32> to vector<8x16xbf16>
    %70 = arith.truncf %67 : vector<8x16xf32> to vector<8x16xbf16>
    %cst_27 = arith.constant dense<0.000000e+00> : vector<8x8xf32>
    %71 = tpu.matmul %69, %70, %cst_27 {dimension_numbers = #tpu.dot_dimension_numbers<[1], [1], [0], [0], [0, 0, 1, 0], [], []>} : vector<8x16xbf16>, vector<8x16xbf16>, vector<8x8xf32> -> vector<8x8xf32>
    %72 = vector.broadcast %7 : vector<1x8xf32> to vector<8x8xf32>
    %73 = arith.addf %71, %72 : vector<8x8xf32>
    %cst_28 = arith.constant dense<0xFF800000> : vector<8xf32>
    %74 = vector.multi_reduction <maximumf>, %73, %cst_28 [1] : vector<8x8xf32> to vector<8xf32>
    %75 = vector.shape_cast %74 : vector<8xf32> to vector<8x1xf32>
    %76 = vector.broadcast %75 : vector<8x1xf32> to vector<8x8xf32>
    %77 = arith.subf %73, %76 : vector<8x8xf32>
    %78 = math.exp %77 : vector<8x8xf32>
    %cst_29 = arith.constant dense<0.000000e+00> : vector<8xf32>
    %79 = vector.multi_reduction <add>, %78, %cst_29 [1] : vector<8x8xf32> to vector<8xf32>
    %80 = vector.shape_cast %79 : vector<8xf32> to vector<8x1xf32>
    %81 = tpu.reciprocal %80 {approx = true} : vector<8x1xf32> -> vector<8x1xf32>
    %82 = vector.broadcast %81 : vector<8x1xf32> to vector<8x8xf32>
    %83 = arith.mulf %78, %82 : vector<8x8xf32>
    %84 = arith.truncf %83 : vector<8x8xf32> to vector<8x8xbf16>
    %85 = arith.truncf %68 : vector<8x16xf32> to vector<8x16xbf16>
    %cst_30 = arith.constant dense<0.000000e+00> : vector<8x16xf32>
    %86 = tpu.matmul %84, %85, %cst_30 {dimension_numbers = #tpu.dot_dimension_numbers<[1], [0], [0], [1], [0, 0, 1, 1], [], []>} : vector<8x8xbf16>, vector<8x16xbf16>, vector<8x16xf32> -> vector<8x16xf32>
    %87 = vector.extract_strided_slice %64 {offsets = [0, 16], sizes = [8, 16], strides = [1, 1]} : vector<8x32xf32> to vector<8x16xf32>
    %88 = vector.extract_strided_slice %65 {offsets = [0, 16], sizes = [8, 16], strides = [1, 1]} : vector<8x64xf32> to vector<8x16xf32>
    %89 = vector.extract_strided_slice %65 {offsets = [0, 48], sizes = [8, 16], strides = [1, 1]} : vector<8x64xf32> to vector<8x16xf32>
    %90 = arith.truncf %87 : vector<8x16xf32> to vector<8x16xbf16>
    %91 = arith.truncf %88 : vector<8x16xf32> to vector<8x16xbf16>
    %cst_31 = arith.constant dense<0.000000e+00> : vector<8x8xf32>
    %92 = tpu.matmul %90, %91, %cst_31 {dimension_numbers = #tpu.dot_dimension_numbers<[1], [1], [0], [0], [0, 0, 1, 0], [], []>} : vector<8x16xbf16>, vector<8x16xbf16>, vector<8x8xf32> -> vector<8x8xf32>
    %93 = vector.broadcast %7 : vector<1x8xf32> to vector<8x8xf32>
    %94 = arith.addf %92, %93 : vector<8x8xf32>
    %cst_32 = arith.constant dense<0xFF800000> : vector<8xf32>
    %95 = vector.multi_reduction <maximumf>, %94, %cst_32 [1] : vector<8x8xf32> to vector<8xf32>
    %96 = vector.shape_cast %95 : vector<8xf32> to vector<8x1xf32>
    %97 = vector.broadcast %96 : vector<8x1xf32> to vector<8x8xf32>
    %98 = arith.subf %94, %97 : vector<8x8xf32>
    %99 = math.exp %98 : vector<8x8xf32>
    %cst_33 = arith.constant dense<0.000000e+00> : vector<8xf32>
    %100 = vector.multi_reduction <add>, %99, %cst_33 [1] : vector<8x8xf32> to vector<8xf32>
    %101 = vector.shape_cast %100 : vector<8xf32> to vector<8x1xf32>
    %102 = tpu.reciprocal %101 {approx = true} : vector<8x1xf32> -> vector<8x1xf32>
    %103 = vector.broadcast %102 : vector<8x1xf32> to vector<8x8xf32>
    %104 = arith.mulf %99, %103 : vector<8x8xf32>
    %105 = arith.truncf %104 : vector<8x8xf32> to vector<8x8xbf16>
    %106 = arith.truncf %89 : vector<8x16xf32> to vector<8x16xbf16>
    %cst_34 = arith.constant dense<0.000000e+00> : vector<8x16xf32>
    %107 = tpu.matmul %105, %106, %cst_34 {dimension_numbers = #tpu.dot_dimension_numbers<[1], [0], [0], [1], [0, 0, 1, 1], [], []>} : vector<8x8xbf16>, vector<8x16xbf16>, vector<8x16xf32> -> vector<8x16xf32>
    %108 = tpu.concatenate %86, %107 in 1 : vector<8x16xf32>, vector<8x16xf32> -> vector<8x32xf32>
    %c176 = arith.constant 176 : index
    %c0_35 = arith.constant 0 : index
    %109 = vector.load %arg5[%c176, %c0_35] : memref<1008x128xbf16, #tpu.memory_space<vmem>>, vector<32x32xbf16>
    %110 = arith.truncf %108 : vector<8x32xf32> to vector<8x32xbf16>
    %cst_36 = arith.constant dense<0.000000e+00> : vector<8x32xf32>
    %111 = tpu.matmul %110, %109, %cst_36 {dimension_numbers = #tpu.dot_dimension_numbers<[1], [0], [0], [1], [0, 0, 1, 1], [], []>} : vector<8x32xbf16>, vector<32x32xbf16>, vector<8x32xf32> -> vector<8x32xf32>
    %c5 = arith.constant 5 : index
    %c0_37 = arith.constant 0 : index
    %112 = vector.load %arg6[%c5, %c0_37] : memref<48x128xf32, #tpu.memory_space<vmem>>, vector<1x32xf32>
    %113 = vector.broadcast %112 : vector<1x32xf32> to vector<8x32xf32>
    %114 = arith.addf %111, %113 : vector<8x32xf32>
    %115 = arith.addf %55, %114 : vector<8x32xf32>
    %cst_38 = arith.constant dense<0.000000e+00> : vector<8xf32>
    %116 = vector.multi_reduction <add>, %115, %cst_38 [1] : vector<8x32xf32> to vector<8xf32>
    %117 = vector.shape_cast %116 : vector<8xf32> to vector<8x1xf32>
    %118 = arith.mulf %115, %115 : vector<8x32xf32>
    %cst_39 = arith.constant dense<0.000000e+00> : vector<8xf32>
    %119 = vector.multi_reduction <add>, %118, %cst_39 [1] : vector<8x32xf32> to vector<8xf32>
    %120 = vector.shape_cast %119 : vector<8xf32> to vector<8x1xf32>
    %cst_40 = arith.constant 3.125000e-02 : f32
    %121 = vector.broadcast %cst_40 : f32 to vector<8x1xf32>
    %122 = arith.mulf %117, %121 : vector<8x1xf32>
    %cst_41 = arith.constant 3.125000e-02 : f32
    %123 = vector.broadcast %cst_41 : f32 to vector<8x1xf32>
    %124 = arith.mulf %120, %123 : vector<8x1xf32>
    %125 = arith.mulf %122, %122 : vector<8x1xf32>
    %126 = arith.subf %124, %125 : vector<8x1xf32>
    %127 = vector.broadcast %122 : vector<8x1xf32> to vector<8x32xf32>
    %128 = arith.subf %115, %127 : vector<8x32xf32>
    %cst_42 = arith.constant 9.99999996E-13 : f32
    %129 = vector.broadcast %cst_42 : f32 to vector<8x1xf32>
    %130 = arith.addf %126, %129 : vector<8x1xf32>
    %131 = math.rsqrt %130 : vector<8x1xf32>
    %132 = vector.broadcast %131 : vector<8x1xf32> to vector<8x32xf32>
    %133 = arith.mulf %128, %132 : vector<8x32xf32>
    %c8 = arith.constant 8 : index
    %c0_43 = arith.constant 0 : index
    %134 = vector.load %arg6[%c8, %c0_43] : memref<48x128xf32, #tpu.memory_space<vmem>>, vector<1x32xf32>
    %135 = vector.broadcast %134 : vector<1x32xf32> to vector<8x32xf32>
    %136 = arith.mulf %133, %135 : vector<8x32xf32>
    %c9 = arith.constant 9 : index
    %c0_44 = arith.constant 0 : index
    %137 = vector.load %arg6[%c9, %c0_44] : memref<48x128xf32, #tpu.memory_space<vmem>>, vector<1x32xf32>
    %138 = vector.broadcast %137 : vector<1x32xf32> to vector<8x32xf32>
    %139 = arith.addf %136, %138 : vector<8x32xf32>
    %c208 = arith.constant 208 : index
    %c0_45 = arith.constant 0 : index
    %140 = vector.load %arg5[%c208, %c0_45] : memref<1008x128xbf16, #tpu.memory_space<vmem>>, vector<32x64xbf16>
    %141 = arith.truncf %139 : vector<8x32xf32> to vector<8x32xbf16>
    %cst_46 = arith.constant dense<0.000000e+00> : vector<8x64xf32>
    %142 = tpu.matmul %141, %140, %cst_46 {dimension_numbers = #tpu.dot_dimension_numbers<[1], [0], [0], [1], [0, 0, 1, 1], [], []>} : vector<8x32xbf16>, vector<32x64xbf16>, vector<8x64xf32> -> vector<8x64xf32>
    %c6 = arith.constant 6 : index
    %c0_47 = arith.constant 0 : index
    %143 = vector.load %arg6[%c6, %c0_47] : memref<48x128xf32, #tpu.memory_space<vmem>>, vector<1x64xf32>
    %144 = vector.broadcast %143 : vector<1x64xf32> to vector<8x64xf32>
    %145 = arith.addf %142, %144 : vector<8x64xf32>
    %cst_48 = arith.constant 5.000000e-01 : f32
    %146 = vector.broadcast %cst_48 : f32 to vector<8x64xf32>
    %147 = arith.mulf %146, %145 : vector<8x64xf32>
    %cst_49 = arith.constant 4.471500e-02 : f32
    %148 = vector.broadcast %cst_49 : f32 to vector<8x64xf32>
    %149 = arith.mulf %148, %145 : vector<8x64xf32>
    %150 = arith.mulf %149, %145 : vector<8x64xf32>
    %151 = arith.mulf %150, %145 : vector<8x64xf32>
    %152 = arith.addf %145, %151 : vector<8x64xf32>
    %cst_50 = arith.constant 0.797884583 : f32
    %153 = vector.broadcast %cst_50 : f32 to vector<8x64xf32>
    %154 = arith.mulf %153, %152 : vector<8x64xf32>
    %155 = math.tanh %154 : vector<8x64xf32>
    %cst_51 = arith.constant 1.000000e+00 : f32
    %156 = vector.broadcast %cst_51 : f32 to vector<8x64xf32>
    %157 = arith.addf %156, %155 : vector<8x64xf32>
    %158 = arith.mulf %147, %157 : vector<8x64xf32>
    %c240 = arith.constant 240 : index
    %c0_52 = arith.constant 0 : index
    %159 = vector.load %arg5[%c240, %c0_52] : memref<1008x128xbf16, #tpu.memory_space<vmem>>, vector<64x32xbf16>
    %160 = arith.truncf %158 : vector<8x64xf32> to vector<8x64xbf16>
    %cst_53 = arith.constant dense<0.000000e+00> : vector<8x32xf32>
    %161 = tpu.matmul %160, %159, %cst_53 {dimension_numbers = #tpu.dot_dimension_numbers<[1], [0], [0], [1], [0, 0, 1, 1], [], []>} : vector<8x64xbf16>, vector<64x32xbf16>, vector<8x32xf32> -> vector<8x32xf32>
    %c7 = arith.constant 7 : index
    %c0_54 = arith.constant 0 : index
    %162 = vector.load %arg6[%c7, %c0_54] : memref<48x128xf32, #tpu.memory_space<vmem>>, vector<1x32xf32>
    %163 = vector.broadcast %162 : vector<1x32xf32> to vector<8x32xf32>
    %164 = arith.addf %161, %163 : vector<8x32xf32>
    %165 = arith.addf %139, %164 : vector<8x32xf32>
    %cst_55 = arith.constant dense<0.000000e+00> : vector<8xf32>
    %166 = vector.multi_reduction <add>, %165, %cst_55 [1] : vector<8x32xf32> to vector<8xf32>
    %167 = vector.shape_cast %166 : vector<8xf32> to vector<8x1xf32>
    %168 = arith.mulf %165, %165 : vector<8x32xf32>
    %cst_56 = arith.constant dense<0.000000e+00> : vector<8xf32>
    %169 = vector.multi_reduction <add>, %168, %cst_56 [1] : vector<8x32xf32> to vector<8xf32>
    %170 = vector.shape_cast %169 : vector<8xf32> to vector<8x1xf32>
    %cst_57 = arith.constant 3.125000e-02 : f32
    %171 = vector.broadcast %cst_57 : f32 to vector<8x1xf32>
    %172 = arith.mulf %167, %171 : vector<8x1xf32>
    %cst_58 = arith.constant 3.125000e-02 : f32
    %173 = vector.broadcast %cst_58 : f32 to vector<8x1xf32>
    %174 = arith.mulf %170, %173 : vector<8x1xf32>
    %175 = arith.mulf %172, %172 : vector<8x1xf32>
    %176 = arith.subf %174, %175 : vector<8x1xf32>
    %177 = vector.broadcast %172 : vector<8x1xf32> to vector<8x32xf32>
    %178 = arith.subf %165, %177 : vector<8x32xf32>
    %cst_59 = arith.constant 9.99999996E-13 : f32
    %179 = vector.broadcast %cst_59 : f32 to vector<8x1xf32>
    %180 = arith.addf %176, %179 : vector<8x1xf32>
    %181 = math.rsqrt %180 : vector<8x1xf32>
    %182 = vector.broadcast %181 : vector<8x1xf32> to vector<8x32xf32>
    %183 = arith.mulf %178, %182 : vector<8x32xf32>
    %c10 = arith.constant 10 : index
    %c0_60 = arith.constant 0 : index
    %184 = vector.load %arg6[%c10, %c0_60] : memref<48x128xf32, #tpu.memory_space<vmem>>, vector<1x32xf32>
    %185 = vector.broadcast %184 : vector<1x32xf32> to vector<8x32xf32>
    %186 = arith.mulf %183, %185 : vector<8x32xf32>
    %c11 = arith.constant 11 : index
    %c0_61 = arith.constant 0 : index
    %187 = vector.load %arg6[%c11, %c0_61] : memref<48x128xf32, #tpu.memory_space<vmem>>, vector<1x32xf32>
    %188 = vector.broadcast %187 : vector<1x32xf32> to vector<8x32xf32>
    %189 = arith.addf %186, %188 : vector<8x32xf32>
    %c304 = arith.constant 304 : index
    %c0_62 = arith.constant 0 : index
    %190 = vector.load %arg5[%c304, %c0_62] : memref<1008x128xbf16, #tpu.memory_space<vmem>>, vector<32x96xbf16>
    %191 = arith.truncf %189 : vector<8x32xf32> to vector<8x32xbf16>
    %cst_63 = arith.constant dense<0.000000e+00> : vector<8x96xf32>
    %192 = tpu.matmul %191, %190, %cst_63 {dimension_numbers = #tpu.dot_dimension_numbers<[1], [0], [0], [1], [0, 0, 1, 1], [], []>} : vector<8x32xbf16>, vector<32x96xbf16>, vector<8x96xf32> -> vector<8x96xf32>
    %c12 = arith.constant 12 : index
    %c0_64 = arith.constant 0 : index
    %193 = vector.load %arg6[%c12, %c0_64] : memref<48x128xf32, #tpu.memory_space<vmem>>, vector<1x96xf32>
    %194 = vector.broadcast %193 : vector<1x96xf32> to vector<8x96xf32>
    %195 = arith.addf %192, %194 : vector<8x96xf32>
    %196 = vector.extract_strided_slice %195 {offsets = [0, 0], sizes = [8, 32], strides = [1, 1]} : vector<8x96xf32> to vector<8x32xf32>
    %cst_65 = arith.constant 2.500000e-01 : f32
    %197 = vector.broadcast %cst_65 : f32 to vector<8x32xf32>
    %198 = arith.mulf %196, %197 : vector<8x32xf32>
    %199 = vector.extract_strided_slice %195 {offsets = [0, 32], sizes = [8, 64], strides = [1, 1]} : vector<8x96xf32> to vector<8x64xf32>
    %200 = vector.extract_strided_slice %198 {offsets = [0, 0], sizes = [8, 16], strides = [1, 1]} : vector<8x32xf32> to vector<8x16xf32>
    %201 = vector.extract_strided_slice %199 {offsets = [0, 0], sizes = [8, 16], strides = [1, 1]} : vector<8x64xf32> to vector<8x16xf32>
    %202 = vector.extract_strided_slice %199 {offsets = [0, 32], sizes = [8, 16], strides = [1, 1]} : vector<8x64xf32> to vector<8x16xf32>
    %203 = arith.truncf %200 : vector<8x16xf32> to vector<8x16xbf16>
    %204 = arith.truncf %201 : vector<8x16xf32> to vector<8x16xbf16>
    %cst_66 = arith.constant dense<0.000000e+00> : vector<8x8xf32>
    %205 = tpu.matmul %203, %204, %cst_66 {dimension_numbers = #tpu.dot_dimension_numbers<[1], [1], [0], [0], [0, 0, 1, 0], [], []>} : vector<8x16xbf16>, vector<8x16xbf16>, vector<8x8xf32> -> vector<8x8xf32>
    %206 = vector.broadcast %7 : vector<1x8xf32> to vector<8x8xf32>
    %207 = arith.addf %205, %206 : vector<8x8xf32>
    %cst_67 = arith.constant dense<0xFF800000> : vector<8xf32>
    %208 = vector.multi_reduction <maximumf>, %207, %cst_67 [1] : vector<8x8xf32> to vector<8xf32>
    %209 = vector.shape_cast %208 : vector<8xf32> to vector<8x1xf32>
    %210 = vector.broadcast %209 : vector<8x1xf32> to vector<8x8xf32>
    %211 = arith.subf %207, %210 : vector<8x8xf32>
    %212 = math.exp %211 : vector<8x8xf32>
    %cst_68 = arith.constant dense<0.000000e+00> : vector<8xf32>
    %213 = vector.multi_reduction <add>, %212, %cst_68 [1] : vector<8x8xf32> to vector<8xf32>
    %214 = vector.shape_cast %213 : vector<8xf32> to vector<8x1xf32>
    %215 = tpu.reciprocal %214 {approx = true} : vector<8x1xf32> -> vector<8x1xf32>
    %216 = vector.broadcast %215 : vector<8x1xf32> to vector<8x8xf32>
    %217 = arith.mulf %212, %216 : vector<8x8xf32>
    %218 = arith.truncf %217 : vector<8x8xf32> to vector<8x8xbf16>
    %219 = arith.truncf %202 : vector<8x16xf32> to vector<8x16xbf16>
    %cst_69 = arith.constant dense<0.000000e+00> : vector<8x16xf32>
    %220 = tpu.matmul %218, %219, %cst_69 {dimension_numbers = #tpu.dot_dimension_numbers<[1], [0], [0], [1], [0, 0, 1, 1], [], []>} : vector<8x8xbf16>, vector<8x16xbf16>, vector<8x16xf32> -> vector<8x16xf32>
    %221 = vector.extract_strided_slice %198 {offsets = [0, 16], sizes = [8, 16], strides = [1, 1]} : vector<8x32xf32> to vector<8x16xf32>
    %222 = vector.extract_strided_slice %199 {offsets = [0, 16], sizes = [8, 16], strides = [1, 1]} : vector<8x64xf32> to vector<8x16xf32>
    %223 = vector.extract_strided_slice %199 {offsets = [0, 48], sizes = [8, 16], strides = [1, 1]} : vector<8x64xf32> to vector<8x16xf32>
    %224 = arith.truncf %221 : vector<8x16xf32> to vector<8x16xbf16>
    %225 = arith.truncf %222 : vector<8x16xf32> to vector<8x16xbf16>
    %cst_70 = arith.constant dense<0.000000e+00> : vector<8x8xf32>
    %226 = tpu.matmul %224, %225, %cst_70 {dimension_numbers = #tpu.dot_dimension_numbers<[1], [1], [0], [0], [0, 0, 1, 0], [], []>} : vector<8x16xbf16>, vector<8x16xbf16>, vector<8x8xf32> -> vector<8x8xf32>
    %227 = vector.broadcast %7 : vector<1x8xf32> to vector<8x8xf32>
    %228 = arith.addf %226, %227 : vector<8x8xf32>
    %cst_71 = arith.constant dense<0xFF800000> : vector<8xf32>
    %229 = vector.multi_reduction <maximumf>, %228, %cst_71 [1] : vector<8x8xf32> to vector<8xf32>
    %230 = vector.shape_cast %229 : vector<8xf32> to vector<8x1xf32>
    %231 = vector.broadcast %230 : vector<8x1xf32> to vector<8x8xf32>
    %232 = arith.subf %228, %231 : vector<8x8xf32>
    %233 = math.exp %232 : vector<8x8xf32>
    %cst_72 = arith.constant dense<0.000000e+00> : vector<8xf32>
    %234 = vector.multi_reduction <add>, %233, %cst_72 [1] : vector<8x8xf32> to vector<8xf32>
    %235 = vector.shape_cast %234 : vector<8xf32> to vector<8x1xf32>
    %236 = tpu.reciprocal %235 {approx = true} : vector<8x1xf32> -> vector<8x1xf32>
    %237 = vector.broadcast %236 : vector<8x1xf32> to vector<8x8xf32>
    %238 = arith.mulf %233, %237 : vector<8x8xf32>
    %239 = arith.truncf %238 : vector<8x8xf32> to vector<8x8xbf16>
    %240 = arith.truncf %223 : vector<8x16xf32> to vector<8x16xbf16>
    %cst_73 = arith.constant dense<0.000000e+00> : vector<8x16xf32>
    %241 = tpu.matmul %239, %240, %cst_73 {dimension_numbers = #tpu.dot_dimension_numbers<[1], [0], [0], [1], [0, 0, 1, 1], [], []>} : vector<8x8xbf16>, vector<8x16xbf16>, vector<8x16xf32> -> vector<8x16xf32>
    %242 = tpu.concatenate %220, %241 in 1 : vector<8x16xf32>, vector<8x16xf32> -> vector<8x32xf32>
    %c336 = arith.constant 336 : index
    %c0_74 = arith.constant 0 : index
    %243 = vector.load %arg5[%c336, %c0_74] : memref<1008x128xbf16, #tpu.memory_space<vmem>>, vector<32x32xbf16>
    %244 = arith.truncf %242 : vector<8x32xf32> to vector<8x32xbf16>
    %cst_75 = arith.constant dense<0.000000e+00> : vector<8x32xf32>
    %245 = tpu.matmul %244, %243, %cst_75 {dimension_numbers = #tpu.dot_dimension_numbers<[1], [0], [0], [1], [0, 0, 1, 1], [], []>} : vector<8x32xbf16>, vector<32x32xbf16>, vector<8x32xf32> -> vector<8x32xf32>
    %c13 = arith.constant 13 : index
    %c0_76 = arith.constant 0 : index
    %246 = vector.load %arg6[%c13, %c0_76] : memref<48x128xf32, #tpu.memory_space<vmem>>, vector<1x32xf32>
    %247 = vector.broadcast %246 : vector<1x32xf32> to vector<8x32xf32>
    %248 = arith.addf %245, %247 : vector<8x32xf32>
    %249 = arith.addf %189, %248 : vector<8x32xf32>
    %cst_77 = arith.constant dense<0.000000e+00> : vector<8xf32>
    %250 = vector.multi_reduction <add>, %249, %cst_77 [1] : vector<8x32xf32> to vector<8xf32>
    %251 = vector.shape_cast %250 : vector<8xf32> to vector<8x1xf32>
    %252 = arith.mulf %249, %249 : vector<8x32xf32>
    %cst_78 = arith.constant dense<0.000000e+00> : vector<8xf32>
    %253 = vector.multi_reduction <add>, %252, %cst_78 [1] : vector<8x32xf32> to vector<8xf32>
    %254 = vector.shape_cast %253 : vector<8xf32> to vector<8x1xf32>
    %cst_79 = arith.constant 3.125000e-02 : f32
    %255 = vector.broadcast %cst_79 : f32 to vector<8x1xf32>
    %256 = arith.mulf %251, %255 : vector<8x1xf32>
    %cst_80 = arith.constant 3.125000e-02 : f32
    %257 = vector.broadcast %cst_80 : f32 to vector<8x1xf32>
    %258 = arith.mulf %254, %257 : vector<8x1xf32>
    %259 = arith.mulf %256, %256 : vector<8x1xf32>
    %260 = arith.subf %258, %259 : vector<8x1xf32>
    %261 = vector.broadcast %256 : vector<8x1xf32> to vector<8x32xf32>
    %262 = arith.subf %249, %261 : vector<8x32xf32>
    %cst_81 = arith.constant 9.99999996E-13 : f32
    %263 = vector.broadcast %cst_81 : f32 to vector<8x1xf32>
    %264 = arith.addf %260, %263 : vector<8x1xf32>
    %265 = math.rsqrt %264 : vector<8x1xf32>
    %266 = vector.broadcast %265 : vector<8x1xf32> to vector<8x32xf32>
    %267 = arith.mulf %262, %266 : vector<8x32xf32>
    %c16 = arith.constant 16 : index
    %c0_82 = arith.constant 0 : index
    %268 = vector.load %arg6[%c16, %c0_82] : memref<48x128xf32, #tpu.memory_space<vmem>>, vector<1x32xf32>
    %269 = vector.broadcast %268 : vector<1x32xf32> to vector<8x32xf32>
    %270 = arith.mulf %267, %269 : vector<8x32xf32>
    %c17 = arith.constant 17 : index
    %c0_83 = arith.constant 0 : index
    %271 = vector.load %arg6[%c17, %c0_83] : memref<48x128xf32, #tpu.memory_space<vmem>>, vector<1x32xf32>
    %272 = vector.broadcast %271 : vector<1x32xf32> to vector<8x32xf32>
    %273 = arith.addf %270, %272 : vector<8x32xf32>
    %c368 = arith.constant 368 : index
    %c0_84 = arith.constant 0 : index
    %274 = vector.load %arg5[%c368, %c0_84] : memref<1008x128xbf16, #tpu.memory_space<vmem>>, vector<32x64xbf16>
    %275 = arith.truncf %273 : vector<8x32xf32> to vector<8x32xbf16>
    %cst_85 = arith.constant dense<0.000000e+00> : vector<8x64xf32>
    %276 = tpu.matmul %275, %274, %cst_85 {dimension_numbers = #tpu.dot_dimension_numbers<[1], [0], [0], [1], [0, 0, 1, 1], [], []>} : vector<8x32xbf16>, vector<32x64xbf16>, vector<8x64xf32> -> vector<8x64xf32>
    %c14 = arith.constant 14 : index
    %c0_86 = arith.constant 0 : index
    %277 = vector.load %arg6[%c14, %c0_86] : memref<48x128xf32, #tpu.memory_space<vmem>>, vector<1x64xf32>
    %278 = vector.broadcast %277 : vector<1x64xf32> to vector<8x64xf32>
    %279 = arith.addf %276, %278 : vector<8x64xf32>
    %cst_87 = arith.constant 5.000000e-01 : f32
    %280 = vector.broadcast %cst_87 : f32 to vector<8x64xf32>
    %281 = arith.mulf %280, %279 : vector<8x64xf32>
    %cst_88 = arith.constant 4.471500e-02 : f32
    %282 = vector.broadcast %cst_88 : f32 to vector<8x64xf32>
    %283 = arith.mulf %282, %279 : vector<8x64xf32>
    %284 = arith.mulf %283, %279 : vector<8x64xf32>
    %285 = arith.mulf %284, %279 : vector<8x64xf32>
    %286 = arith.addf %279, %285 : vector<8x64xf32>
    %cst_89 = arith.constant 0.797884583 : f32
    %287 = vector.broadcast %cst_89 : f32 to vector<8x64xf32>
    %288 = arith.mulf %287, %286 : vector<8x64xf32>
    %289 = math.tanh %288 : vector<8x64xf32>
    %cst_90 = arith.constant 1.000000e+00 : f32
    %290 = vector.broadcast %cst_90 : f32 to vector<8x64xf32>
    %291 = arith.addf %290, %289 : vector<8x64xf32>
    %292 = arith.mulf %281, %291 : vector<8x64xf32>
    %c400 = arith.constant 400 : index
    %c0_91 = arith.constant 0 : index
    %293 = vector.load %arg5[%c400, %c0_91] : memref<1008x128xbf16, #tpu.memory_space<vmem>>, vector<64x32xbf16>
    %294 = arith.truncf %292 : vector<8x64xf32> to vector<8x64xbf16>
    %cst_92 = arith.constant dense<0.000000e+00> : vector<8x32xf32>
    %295 = tpu.matmul %294, %293, %cst_92 {dimension_numbers = #tpu.dot_dimension_numbers<[1], [0], [0], [1], [0, 0, 1, 1], [], []>} : vector<8x64xbf16>, vector<64x32xbf16>, vector<8x32xf32> -> vector<8x32xf32>
    %c15 = arith.constant 15 : index
    %c0_93 = arith.constant 0 : index
    %296 = vector.load %arg6[%c15, %c0_93] : memref<48x128xf32, #tpu.memory_space<vmem>>, vector<1x32xf32>
    %297 = vector.broadcast %296 : vector<1x32xf32> to vector<8x32xf32>
    %298 = arith.addf %295, %297 : vector<8x32xf32>
    %299 = arith.addf %273, %298 : vector<8x32xf32>
    %cst_94 = arith.constant dense<0.000000e+00> : vector<8xf32>
    %300 = vector.multi_reduction <add>, %299, %cst_94 [1] : vector<8x32xf32> to vector<8xf32>
    %301 = vector.shape_cast %300 : vector<8xf32> to vector<8x1xf32>
    %302 = arith.mulf %299, %299 : vector<8x32xf32>
    %cst_95 = arith.constant dense<0.000000e+00> : vector<8xf32>
    %303 = vector.multi_reduction <add>, %302, %cst_95 [1] : vector<8x32xf32> to vector<8xf32>
    %304 = vector.shape_cast %303 : vector<8xf32> to vector<8x1xf32>
    %cst_96 = arith.constant 3.125000e-02 : f32
    %305 = vector.broadcast %cst_96 : f32 to vector<8x1xf32>
    %306 = arith.mulf %301, %305 : vector<8x1xf32>
    %cst_97 = arith.constant 3.125000e-02 : f32
    %307 = vector.broadcast %cst_97 : f32 to vector<8x1xf32>
    %308 = arith.mulf %304, %307 : vector<8x1xf32>
    %309 = arith.mulf %306, %306 : vector<8x1xf32>
    %310 = arith.subf %308, %309 : vector<8x1xf32>
    %311 = vector.broadcast %306 : vector<8x1xf32> to vector<8x32xf32>
    %312 = arith.subf %299, %311 : vector<8x32xf32>
    %cst_98 = arith.constant 9.99999996E-13 : f32
    %313 = vector.broadcast %cst_98 : f32 to vector<8x1xf32>
    %314 = arith.addf %310, %313 : vector<8x1xf32>
    %315 = math.rsqrt %314 : vector<8x1xf32>
    %316 = vector.broadcast %315 : vector<8x1xf32> to vector<8x32xf32>
    %317 = arith.mulf %312, %316 : vector<8x32xf32>
    %c18 = arith.constant 18 : index
    %c0_99 = arith.constant 0 : index
    %318 = vector.load %arg6[%c18, %c0_99] : memref<48x128xf32, #tpu.memory_space<vmem>>, vector<1x32xf32>
    %319 = vector.broadcast %318 : vector<1x32xf32> to vector<8x32xf32>
    %320 = arith.mulf %317, %319 : vector<8x32xf32>
    %c19 = arith.constant 19 : index
    %c0_100 = arith.constant 0 : index
    %321 = vector.load %arg6[%c19, %c0_100] : memref<48x128xf32, #tpu.memory_space<vmem>>, vector<1x32xf32>
    %322 = vector.broadcast %321 : vector<1x32xf32> to vector<8x32xf32>
    %323 = arith.addf %320, %322 : vector<8x32xf32>
    %c0_101 = arith.constant 0 : index
    %c0_102 = arith.constant 0 : index
    %c0_103 = arith.constant 0 : index
    %324 = vector.load %arg3[%c0_101, %c0_102, %c0_103] : memref<1x8x1xi32, #tpu.memory_space<vmem>>, vector<1x8x1xi32>
    %325 = vector.shape_cast %324 : vector<1x8x1xi32> to vector<8x1xi32>
    %326 = tpu.iota {dimensions = array<i32: 1>} : vector<8x64xi32>
    %327 = vector.broadcast %325 : vector<8x1xi32> to vector<8x64xi32>
    %328 = arith.cmpi eq, %327, %326 : vector<8x64xi32>
    %329 = arith.extui %328 : vector<8x64xi1> to vector<8x64xi32>
    %330 = arith.sitofp %329 : vector<8x64xi32> to vector<8x64xf32>
    %c72 = arith.constant 72 : index
    %c0_104 = arith.constant 0 : index
    %331 = vector.load %arg5[%c72, %c0_104] : memref<1008x128xbf16, #tpu.memory_space<vmem>>, vector<64x32xbf16>
    %332 = arith.truncf %330 : vector<8x64xf32> to vector<8x64xbf16>
    %cst_105 = arith.constant dense<0.000000e+00> : vector<8x32xf32>
    %333 = tpu.matmul %332, %331, %cst_105 {dimension_numbers = #tpu.dot_dimension_numbers<[1], [0], [0], [1], [0, 0, 1, 1], [], []>} : vector<8x64xbf16>, vector<64x32xbf16>, vector<8x32xf32> -> vector<8x32xf32>
    %c136 = arith.constant 136 : index
    %c0_106 = arith.constant 0 : index
    %334 = vector.load %arg5[%c136, %c0_106] : memref<1008x128xbf16, #tpu.memory_space<vmem>>, vector<8x32xbf16>
    %335 = arith.extf %334 : vector<8x32xbf16> to vector<8x32xf32>
    %336 = arith.addf %333, %335 : vector<8x32xf32>
    %cst_107 = arith.constant dense<0.000000e+00> : vector<8xf32>
    %337 = vector.multi_reduction <add>, %336, %cst_107 [1] : vector<8x32xf32> to vector<8xf32>
    %338 = vector.shape_cast %337 : vector<8xf32> to vector<8x1xf32>
    %339 = arith.mulf %336, %336 : vector<8x32xf32>
    %cst_108 = arith.constant dense<0.000000e+00> : vector<8xf32>
    %340 = vector.multi_reduction <add>, %339, %cst_108 [1] : vector<8x32xf32> to vector<8xf32>
    %341 = vector.shape_cast %340 : vector<8xf32> to vector<8x1xf32>
    %cst_109 = arith.constant 3.125000e-02 : f32
    %342 = vector.broadcast %cst_109 : f32 to vector<8x1xf32>
    %343 = arith.mulf %338, %342 : vector<8x1xf32>
    %cst_110 = arith.constant 3.125000e-02 : f32
    %344 = vector.broadcast %cst_110 : f32 to vector<8x1xf32>
    %345 = arith.mulf %341, %344 : vector<8x1xf32>
    %346 = arith.mulf %343, %343 : vector<8x1xf32>
    %347 = arith.subf %345, %346 : vector<8x1xf32>
    %348 = vector.broadcast %343 : vector<8x1xf32> to vector<8x32xf32>
    %349 = arith.subf %336, %348 : vector<8x32xf32>
    %cst_111 = arith.constant 9.99999996E-13 : f32
    %350 = vector.broadcast %cst_111 : f32 to vector<8x1xf32>
    %351 = arith.addf %347, %350 : vector<8x1xf32>
    %352 = math.rsqrt %351 : vector<8x1xf32>
    %353 = vector.broadcast %352 : vector<8x1xf32> to vector<8x32xf32>
    %354 = arith.mulf %349, %353 : vector<8x32xf32>
    %c2 = arith.constant 2 : index
    %c0_112 = arith.constant 0 : index
    %355 = vector.load %arg6[%c2, %c0_112] : memref<48x128xf32, #tpu.memory_space<vmem>>, vector<1x32xf32>
    %356 = vector.broadcast %355 : vector<1x32xf32> to vector<8x32xf32>
    %357 = arith.mulf %354, %356 : vector<8x32xf32>
    %c3 = arith.constant 3 : index
    %c0_113 = arith.constant 0 : index
    %358 = vector.load %arg6[%c3, %c0_113] : memref<48x128xf32, #tpu.memory_space<vmem>>, vector<1x32xf32>
    %359 = vector.broadcast %358 : vector<1x32xf32> to vector<8x32xf32>
    %360 = arith.addf %357, %359 : vector<8x32xf32>
    %c464 = arith.constant 464 : index
    %c0_114 = arith.constant 0 : index
    %361 = vector.load %arg5[%c464, %c0_114] : memref<1008x128xbf16, #tpu.memory_space<vmem>>, vector<32x96xbf16>
    %362 = arith.truncf %360 : vector<8x32xf32> to vector<8x32xbf16>
    %cst_115 = arith.constant dense<0.000000e+00> : vector<8x96xf32>
    %363 = tpu.matmul %362, %361, %cst_115 {dimension_numbers = #tpu.dot_dimension_numbers<[1], [0], [0], [1], [0, 0, 1, 1], [], []>} : vector<8x32xbf16>, vector<32x96xbf16>, vector<8x96xf32> -> vector<8x96xf32>
    %c20 = arith.constant 20 : index
    %c0_116 = arith.constant 0 : index
    %364 = vector.load %arg6[%c20, %c0_116] : memref<48x128xf32, #tpu.memory_space<vmem>>, vector<1x96xf32>
    %365 = vector.broadcast %364 : vector<1x96xf32> to vector<8x96xf32>
    %366 = arith.addf %363, %365 : vector<8x96xf32>
    %367 = vector.extract_strided_slice %366 {offsets = [0, 0], sizes = [8, 32], strides = [1, 1]} : vector<8x96xf32> to vector<8x32xf32>
    %cst_117 = arith.constant 2.500000e-01 : f32
    %368 = vector.broadcast %cst_117 : f32 to vector<8x32xf32>
    %369 = arith.mulf %367, %368 : vector<8x32xf32>
    %370 = vector.extract_strided_slice %366 {offsets = [0, 32], sizes = [8, 64], strides = [1, 1]} : vector<8x96xf32> to vector<8x64xf32>
    %371 = vector.extract_strided_slice %369 {offsets = [0, 0], sizes = [8, 16], strides = [1, 1]} : vector<8x32xf32> to vector<8x16xf32>
    %372 = vector.extract_strided_slice %370 {offsets = [0, 0], sizes = [8, 16], strides = [1, 1]} : vector<8x64xf32> to vector<8x16xf32>
    %373 = vector.extract_strided_slice %370 {offsets = [0, 32], sizes = [8, 16], strides = [1, 1]} : vector<8x64xf32> to vector<8x16xf32>
    %374 = arith.truncf %371 : vector<8x16xf32> to vector<8x16xbf16>
    %375 = arith.truncf %372 : vector<8x16xf32> to vector<8x16xbf16>
    %cst_118 = arith.constant dense<0.000000e+00> : vector<8x8xf32>
    %376 = tpu.matmul %374, %375, %cst_118 {dimension_numbers = #tpu.dot_dimension_numbers<[1], [1], [0], [0], [0, 0, 1, 0], [], []>} : vector<8x16xbf16>, vector<8x16xbf16>, vector<8x8xf32> -> vector<8x8xf32>
    %377 = arith.addf %376, %18 : vector<8x8xf32>
    %cst_119 = arith.constant dense<0xFF800000> : vector<8xf32>
    %378 = vector.multi_reduction <maximumf>, %377, %cst_119 [1] : vector<8x8xf32> to vector<8xf32>
    %379 = vector.shape_cast %378 : vector<8xf32> to vector<8x1xf32>
    %380 = vector.broadcast %379 : vector<8x1xf32> to vector<8x8xf32>
    %381 = arith.subf %377, %380 : vector<8x8xf32>
    %382 = math.exp %381 : vector<8x8xf32>
    %cst_120 = arith.constant dense<0.000000e+00> : vector<8xf32>
    %383 = vector.multi_reduction <add>, %382, %cst_120 [1] : vector<8x8xf32> to vector<8xf32>
    %384 = vector.shape_cast %383 : vector<8xf32> to vector<8x1xf32>
    %385 = tpu.reciprocal %384 {approx = true} : vector<8x1xf32> -> vector<8x1xf32>
    %386 = vector.broadcast %385 : vector<8x1xf32> to vector<8x8xf32>
    %387 = arith.mulf %382, %386 : vector<8x8xf32>
    %388 = arith.truncf %387 : vector<8x8xf32> to vector<8x8xbf16>
    %389 = arith.truncf %373 : vector<8x16xf32> to vector<8x16xbf16>
    %cst_121 = arith.constant dense<0.000000e+00> : vector<8x16xf32>
    %390 = tpu.matmul %388, %389, %cst_121 {dimension_numbers = #tpu.dot_dimension_numbers<[1], [0], [0], [1], [0, 0, 1, 1], [], []>} : vector<8x8xbf16>, vector<8x16xbf16>, vector<8x16xf32> -> vector<8x16xf32>
    %391 = vector.extract_strided_slice %369 {offsets = [0, 16], sizes = [8, 16], strides = [1, 1]} : vector<8x32xf32> to vector<8x16xf32>
    %392 = vector.extract_strided_slice %370 {offsets = [0, 16], sizes = [8, 16], strides = [1, 1]} : vector<8x64xf32> to vector<8x16xf32>
    %393 = vector.extract_strided_slice %370 {offsets = [0, 48], sizes = [8, 16], strides = [1, 1]} : vector<8x64xf32> to vector<8x16xf32>
    %394 = arith.truncf %391 : vector<8x16xf32> to vector<8x16xbf16>
    %395 = arith.truncf %392 : vector<8x16xf32> to vector<8x16xbf16>
    %cst_122 = arith.constant dense<0.000000e+00> : vector<8x8xf32>
    %396 = tpu.matmul %394, %395, %cst_122 {dimension_numbers = #tpu.dot_dimension_numbers<[1], [1], [0], [0], [0, 0, 1, 0], [], []>} : vector<8x16xbf16>, vector<8x16xbf16>, vector<8x8xf32> -> vector<8x8xf32>
    %397 = arith.addf %396, %18 : vector<8x8xf32>
    %cst_123 = arith.constant dense<0xFF800000> : vector<8xf32>
    %398 = vector.multi_reduction <maximumf>, %397, %cst_123 [1] : vector<8x8xf32> to vector<8xf32>
    %399 = vector.shape_cast %398 : vector<8xf32> to vector<8x1xf32>
    %400 = vector.broadcast %399 : vector<8x1xf32> to vector<8x8xf32>
    %401 = arith.subf %397, %400 : vector<8x8xf32>
    %402 = math.exp %401 : vector<8x8xf32>
    %cst_124 = arith.constant dense<0.000000e+00> : vector<8xf32>
    %403 = vector.multi_reduction <add>, %402, %cst_124 [1] : vector<8x8xf32> to vector<8xf32>
    %404 = vector.shape_cast %403 : vector<8xf32> to vector<8x1xf32>
    %405 = tpu.reciprocal %404 {approx = true} : vector<8x1xf32> -> vector<8x1xf32>
    %406 = vector.broadcast %405 : vector<8x1xf32> to vector<8x8xf32>
    %407 = arith.mulf %402, %406 : vector<8x8xf32>
    %408 = arith.truncf %407 : vector<8x8xf32> to vector<8x8xbf16>
    %409 = arith.truncf %393 : vector<8x16xf32> to vector<8x16xbf16>
    %cst_125 = arith.constant dense<0.000000e+00> : vector<8x16xf32>
    %410 = tpu.matmul %408, %409, %cst_125 {dimension_numbers = #tpu.dot_dimension_numbers<[1], [0], [0], [1], [0, 0, 1, 1], [], []>} : vector<8x8xbf16>, vector<8x16xbf16>, vector<8x16xf32> -> vector<8x16xf32>
    %411 = tpu.concatenate %390, %410 in 1 : vector<8x16xf32>, vector<8x16xf32> -> vector<8x32xf32>
    %c496 = arith.constant 496 : index
    %c0_126 = arith.constant 0 : index
    %412 = vector.load %arg5[%c496, %c0_126] : memref<1008x128xbf16, #tpu.memory_space<vmem>>, vector<32x32xbf16>
    %413 = arith.truncf %411 : vector<8x32xf32> to vector<8x32xbf16>
    %cst_127 = arith.constant dense<0.000000e+00> : vector<8x32xf32>
    %414 = tpu.matmul %413, %412, %cst_127 {dimension_numbers = #tpu.dot_dimension_numbers<[1], [0], [0], [1], [0, 0, 1, 1], [], []>} : vector<8x32xbf16>, vector<32x32xbf16>, vector<8x32xf32> -> vector<8x32xf32>
    %c21 = arith.constant 21 : index
    %c0_128 = arith.constant 0 : index
    %415 = vector.load %arg6[%c21, %c0_128] : memref<48x128xf32, #tpu.memory_space<vmem>>, vector<1x32xf32>
    %416 = vector.broadcast %415 : vector<1x32xf32> to vector<8x32xf32>
    %417 = arith.addf %414, %416 : vector<8x32xf32>
    %418 = arith.addf %360, %417 : vector<8x32xf32>
    %cst_129 = arith.constant dense<0.000000e+00> : vector<8xf32>
    %419 = vector.multi_reduction <add>, %418, %cst_129 [1] : vector<8x32xf32> to vector<8xf32>
    %420 = vector.shape_cast %419 : vector<8xf32> to vector<8x1xf32>
    %421 = arith.mulf %418, %418 : vector<8x32xf32>
    %cst_130 = arith.constant dense<0.000000e+00> : vector<8xf32>
    %422 = vector.multi_reduction <add>, %421, %cst_130 [1] : vector<8x32xf32> to vector<8xf32>
    %423 = vector.shape_cast %422 : vector<8xf32> to vector<8x1xf32>
    %cst_131 = arith.constant 3.125000e-02 : f32
    %424 = vector.broadcast %cst_131 : f32 to vector<8x1xf32>
    %425 = arith.mulf %420, %424 : vector<8x1xf32>
    %cst_132 = arith.constant 3.125000e-02 : f32
    %426 = vector.broadcast %cst_132 : f32 to vector<8x1xf32>
    %427 = arith.mulf %423, %426 : vector<8x1xf32>
    %428 = arith.mulf %425, %425 : vector<8x1xf32>
    %429 = arith.subf %427, %428 : vector<8x1xf32>
    %430 = vector.broadcast %425 : vector<8x1xf32> to vector<8x32xf32>
    %431 = arith.subf %418, %430 : vector<8x32xf32>
    %cst_133 = arith.constant 9.99999996E-13 : f32
    %432 = vector.broadcast %cst_133 : f32 to vector<8x1xf32>
    %433 = arith.addf %429, %432 : vector<8x1xf32>
    %434 = math.rsqrt %433 : vector<8x1xf32>
    %435 = vector.broadcast %434 : vector<8x1xf32> to vector<8x32xf32>
    %436 = arith.mulf %431, %435 : vector<8x32xf32>
    %c27 = arith.constant 27 : index
    %c0_134 = arith.constant 0 : index
    %437 = vector.load %arg6[%c27, %c0_134] : memref<48x128xf32, #tpu.memory_space<vmem>>, vector<1x32xf32>
    %438 = vector.broadcast %437 : vector<1x32xf32> to vector<8x32xf32>
    %439 = arith.mulf %436, %438 : vector<8x32xf32>
    %c28 = arith.constant 28 : index
    %c0_135 = arith.constant 0 : index
    %440 = vector.load %arg6[%c28, %c0_135] : memref<48x128xf32, #tpu.memory_space<vmem>>, vector<1x32xf32>
    %441 = vector.broadcast %440 : vector<1x32xf32> to vector<8x32xf32>
    %442 = arith.addf %439, %441 : vector<8x32xf32>
    %c528 = arith.constant 528 : index
    %c0_136 = arith.constant 0 : index
    %443 = vector.load %arg5[%c528, %c0_136] : memref<1008x128xbf16, #tpu.memory_space<vmem>>, vector<32x32xbf16>
    %444 = arith.truncf %442 : vector<8x32xf32> to vector<8x32xbf16>
    %cst_137 = arith.constant dense<0.000000e+00> : vector<8x32xf32>
    %445 = tpu.matmul %444, %443, %cst_137 {dimension_numbers = #tpu.dot_dimension_numbers<[1], [0], [0], [1], [0, 0, 1, 1], [], []>} : vector<8x32xbf16>, vector<32x32xbf16>, vector<8x32xf32> -> vector<8x32xf32>
    %c22 = arith.constant 22 : index
    %c0_138 = arith.constant 0 : index
    %446 = vector.load %arg6[%c22, %c0_138] : memref<48x128xf32, #tpu.memory_space<vmem>>, vector<1x32xf32>
    %447 = vector.broadcast %446 : vector<1x32xf32> to vector<8x32xf32>
    %448 = arith.addf %445, %447 : vector<8x32xf32>
    %cst_139 = arith.constant 2.500000e-01 : f32
    %449 = vector.broadcast %cst_139 : f32 to vector<8x32xf32>
    %450 = arith.mulf %448, %449 : vector<8x32xf32>
    %c560 = arith.constant 560 : index
    %c0_140 = arith.constant 0 : index
    %451 = vector.load %arg5[%c560, %c0_140] : memref<1008x128xbf16, #tpu.memory_space<vmem>>, vector<32x64xbf16>
    %452 = arith.truncf %323 : vector<8x32xf32> to vector<8x32xbf16>
    %cst_141 = arith.constant dense<0.000000e+00> : vector<8x64xf32>
    %453 = tpu.matmul %452, %451, %cst_141 {dimension_numbers = #tpu.dot_dimension_numbers<[1], [0], [0], [1], [0, 0, 1, 1], [], []>} : vector<8x32xbf16>, vector<32x64xbf16>, vector<8x64xf32> -> vector<8x64xf32>
    %c23 = arith.constant 23 : index
    %c0_142 = arith.constant 0 : index
    %454 = vector.load %arg6[%c23, %c0_142] : memref<48x128xf32, #tpu.memory_space<vmem>>, vector<1x64xf32>
    %455 = vector.broadcast %454 : vector<1x64xf32> to vector<8x64xf32>
    %456 = arith.addf %453, %455 : vector<8x64xf32>
    %457 = vector.extract_strided_slice %450 {offsets = [0, 0], sizes = [8, 16], strides = [1, 1]} : vector<8x32xf32> to vector<8x16xf32>
    %458 = vector.extract_strided_slice %456 {offsets = [0, 0], sizes = [8, 16], strides = [1, 1]} : vector<8x64xf32> to vector<8x16xf32>
    %459 = vector.extract_strided_slice %456 {offsets = [0, 32], sizes = [8, 16], strides = [1, 1]} : vector<8x64xf32> to vector<8x16xf32>
    %460 = arith.truncf %457 : vector<8x16xf32> to vector<8x16xbf16>
    %461 = arith.truncf %458 : vector<8x16xf32> to vector<8x16xbf16>
    %cst_143 = arith.constant dense<0.000000e+00> : vector<8x8xf32>
    %462 = tpu.matmul %460, %461, %cst_143 {dimension_numbers = #tpu.dot_dimension_numbers<[1], [1], [0], [0], [0, 0, 1, 0], [], []>} : vector<8x16xbf16>, vector<8x16xbf16>, vector<8x8xf32> -> vector<8x8xf32>
    %463 = vector.broadcast %7 : vector<1x8xf32> to vector<8x8xf32>
    %464 = arith.addf %462, %463 : vector<8x8xf32>
    %cst_144 = arith.constant dense<0xFF800000> : vector<8xf32>
    %465 = vector.multi_reduction <maximumf>, %464, %cst_144 [1] : vector<8x8xf32> to vector<8xf32>
    %466 = vector.shape_cast %465 : vector<8xf32> to vector<8x1xf32>
    %467 = vector.broadcast %466 : vector<8x1xf32> to vector<8x8xf32>
    %468 = arith.subf %464, %467 : vector<8x8xf32>
    %469 = math.exp %468 : vector<8x8xf32>
    %cst_145 = arith.constant dense<0.000000e+00> : vector<8xf32>
    %470 = vector.multi_reduction <add>, %469, %cst_145 [1] : vector<8x8xf32> to vector<8xf32>
    %471 = vector.shape_cast %470 : vector<8xf32> to vector<8x1xf32>
    %472 = tpu.reciprocal %471 {approx = true} : vector<8x1xf32> -> vector<8x1xf32>
    %473 = vector.broadcast %472 : vector<8x1xf32> to vector<8x8xf32>
    %474 = arith.mulf %469, %473 : vector<8x8xf32>
    %475 = arith.truncf %474 : vector<8x8xf32> to vector<8x8xbf16>
    %476 = arith.truncf %459 : vector<8x16xf32> to vector<8x16xbf16>
    %cst_146 = arith.constant dense<0.000000e+00> : vector<8x16xf32>
    %477 = tpu.matmul %475, %476, %cst_146 {dimension_numbers = #tpu.dot_dimension_numbers<[1], [0], [0], [1], [0, 0, 1, 1], [], []>} : vector<8x8xbf16>, vector<8x16xbf16>, vector<8x16xf32> -> vector<8x16xf32>
    %478 = vector.extract_strided_slice %450 {offsets = [0, 16], sizes = [8, 16], strides = [1, 1]} : vector<8x32xf32> to vector<8x16xf32>
    %479 = vector.extract_strided_slice %456 {offsets = [0, 16], sizes = [8, 16], strides = [1, 1]} : vector<8x64xf32> to vector<8x16xf32>
    %480 = vector.extract_strided_slice %456 {offsets = [0, 48], sizes = [8, 16], strides = [1, 1]} : vector<8x64xf32> to vector<8x16xf32>
    %481 = arith.truncf %478 : vector<8x16xf32> to vector<8x16xbf16>
    %482 = arith.truncf %479 : vector<8x16xf32> to vector<8x16xbf16>
    %cst_147 = arith.constant dense<0.000000e+00> : vector<8x8xf32>
    %483 = tpu.matmul %481, %482, %cst_147 {dimension_numbers = #tpu.dot_dimension_numbers<[1], [1], [0], [0], [0, 0, 1, 0], [], []>} : vector<8x16xbf16>, vector<8x16xbf16>, vector<8x8xf32> -> vector<8x8xf32>
    %484 = vector.broadcast %7 : vector<1x8xf32> to vector<8x8xf32>
    %485 = arith.addf %483, %484 : vector<8x8xf32>
    %cst_148 = arith.constant dense<0xFF800000> : vector<8xf32>
    %486 = vector.multi_reduction <maximumf>, %485, %cst_148 [1] : vector<8x8xf32> to vector<8xf32>
    %487 = vector.shape_cast %486 : vector<8xf32> to vector<8x1xf32>
    %488 = vector.broadcast %487 : vector<8x1xf32> to vector<8x8xf32>
    %489 = arith.subf %485, %488 : vector<8x8xf32>
    %490 = math.exp %489 : vector<8x8xf32>
    %cst_149 = arith.constant dense<0.000000e+00> : vector<8xf32>
    %491 = vector.multi_reduction <add>, %490, %cst_149 [1] : vector<8x8xf32> to vector<8xf32>
    %492 = vector.shape_cast %491 : vector<8xf32> to vector<8x1xf32>
    %493 = tpu.reciprocal %492 {approx = true} : vector<8x1xf32> -> vector<8x1xf32>
    %494 = vector.broadcast %493 : vector<8x1xf32> to vector<8x8xf32>
    %495 = arith.mulf %490, %494 : vector<8x8xf32>
    %496 = arith.truncf %495 : vector<8x8xf32> to vector<8x8xbf16>
    %497 = arith.truncf %480 : vector<8x16xf32> to vector<8x16xbf16>
    %cst_150 = arith.constant dense<0.000000e+00> : vector<8x16xf32>
    %498 = tpu.matmul %496, %497, %cst_150 {dimension_numbers = #tpu.dot_dimension_numbers<[1], [0], [0], [1], [0, 0, 1, 1], [], []>} : vector<8x8xbf16>, vector<8x16xbf16>, vector<8x16xf32> -> vector<8x16xf32>
    %499 = tpu.concatenate %477, %498 in 1 : vector<8x16xf32>, vector<8x16xf32> -> vector<8x32xf32>
    %c592 = arith.constant 592 : index
    %c0_151 = arith.constant 0 : index
    %500 = vector.load %arg5[%c592, %c0_151] : memref<1008x128xbf16, #tpu.memory_space<vmem>>, vector<32x32xbf16>
    %501 = arith.truncf %499 : vector<8x32xf32> to vector<8x32xbf16>
    %cst_152 = arith.constant dense<0.000000e+00> : vector<8x32xf32>
    %502 = tpu.matmul %501, %500, %cst_152 {dimension_numbers = #tpu.dot_dimension_numbers<[1], [0], [0], [1], [0, 0, 1, 1], [], []>} : vector<8x32xbf16>, vector<32x32xbf16>, vector<8x32xf32> -> vector<8x32xf32>
    %c24 = arith.constant 24 : index
    %c0_153 = arith.constant 0 : index
    %503 = vector.load %arg6[%c24, %c0_153] : memref<48x128xf32, #tpu.memory_space<vmem>>, vector<1x32xf32>
    %504 = vector.broadcast %503 : vector<1x32xf32> to vector<8x32xf32>
    %505 = arith.addf %502, %504 : vector<8x32xf32>
    %506 = arith.addf %442, %505 : vector<8x32xf32>
    %cst_154 = arith.constant dense<0.000000e+00> : vector<8xf32>
    %507 = vector.multi_reduction <add>, %506, %cst_154 [1] : vector<8x32xf32> to vector<8xf32>
    %508 = vector.shape_cast %507 : vector<8xf32> to vector<8x1xf32>
    %509 = arith.mulf %506, %506 : vector<8x32xf32>
    %cst_155 = arith.constant dense<0.000000e+00> : vector<8xf32>
    %510 = vector.multi_reduction <add>, %509, %cst_155 [1] : vector<8x32xf32> to vector<8xf32>
    %511 = vector.shape_cast %510 : vector<8xf32> to vector<8x1xf32>
    %cst_156 = arith.constant 3.125000e-02 : f32
    %512 = vector.broadcast %cst_156 : f32 to vector<8x1xf32>
    %513 = arith.mulf %508, %512 : vector<8x1xf32>
    %cst_157 = arith.constant 3.125000e-02 : f32
    %514 = vector.broadcast %cst_157 : f32 to vector<8x1xf32>
    %515 = arith.mulf %511, %514 : vector<8x1xf32>
    %516 = arith.mulf %513, %513 : vector<8x1xf32>
    %517 = arith.subf %515, %516 : vector<8x1xf32>
    %518 = vector.broadcast %513 : vector<8x1xf32> to vector<8x32xf32>
    %519 = arith.subf %506, %518 : vector<8x32xf32>
    %cst_158 = arith.constant 9.99999996E-13 : f32
    %520 = vector.broadcast %cst_158 : f32 to vector<8x1xf32>
    %521 = arith.addf %517, %520 : vector<8x1xf32>
    %522 = math.rsqrt %521 : vector<8x1xf32>
    %523 = vector.broadcast %522 : vector<8x1xf32> to vector<8x32xf32>
    %524 = arith.mulf %519, %523 : vector<8x32xf32>
    %c29 = arith.constant 29 : index
    %c0_159 = arith.constant 0 : index
    %525 = vector.load %arg6[%c29, %c0_159] : memref<48x128xf32, #tpu.memory_space<vmem>>, vector<1x32xf32>
    %526 = vector.broadcast %525 : vector<1x32xf32> to vector<8x32xf32>
    %527 = arith.mulf %524, %526 : vector<8x32xf32>
    %c30 = arith.constant 30 : index
    %c0_160 = arith.constant 0 : index
    %528 = vector.load %arg6[%c30, %c0_160] : memref<48x128xf32, #tpu.memory_space<vmem>>, vector<1x32xf32>
    %529 = vector.broadcast %528 : vector<1x32xf32> to vector<8x32xf32>
    %530 = arith.addf %527, %529 : vector<8x32xf32>
    %c624 = arith.constant 624 : index
    %c0_161 = arith.constant 0 : index
    %531 = vector.load %arg5[%c624, %c0_161] : memref<1008x128xbf16, #tpu.memory_space<vmem>>, vector<32x64xbf16>
    %532 = arith.truncf %530 : vector<8x32xf32> to vector<8x32xbf16>
    %cst_162 = arith.constant dense<0.000000e+00> : vector<8x64xf32>
    %533 = tpu.matmul %532, %531, %cst_162 {dimension_numbers = #tpu.dot_dimension_numbers<[1], [0], [0], [1], [0, 0, 1, 1], [], []>} : vector<8x32xbf16>, vector<32x64xbf16>, vector<8x64xf32> -> vector<8x64xf32>
    %c25 = arith.constant 25 : index
    %c0_163 = arith.constant 0 : index
    %534 = vector.load %arg6[%c25, %c0_163] : memref<48x128xf32, #tpu.memory_space<vmem>>, vector<1x64xf32>
    %535 = vector.broadcast %534 : vector<1x64xf32> to vector<8x64xf32>
    %536 = arith.addf %533, %535 : vector<8x64xf32>
    %cst_164 = arith.constant 5.000000e-01 : f32
    %537 = vector.broadcast %cst_164 : f32 to vector<8x64xf32>
    %538 = arith.mulf %537, %536 : vector<8x64xf32>
    %cst_165 = arith.constant 4.471500e-02 : f32
    %539 = vector.broadcast %cst_165 : f32 to vector<8x64xf32>
    %540 = arith.mulf %539, %536 : vector<8x64xf32>
    %541 = arith.mulf %540, %536 : vector<8x64xf32>
    %542 = arith.mulf %541, %536 : vector<8x64xf32>
    %543 = arith.addf %536, %542 : vector<8x64xf32>
    %cst_166 = arith.constant 0.797884583 : f32
    %544 = vector.broadcast %cst_166 : f32 to vector<8x64xf32>
    %545 = arith.mulf %544, %543 : vector<8x64xf32>
    %546 = math.tanh %545 : vector<8x64xf32>
    %cst_167 = arith.constant 1.000000e+00 : f32
    %547 = vector.broadcast %cst_167 : f32 to vector<8x64xf32>
    %548 = arith.addf %547, %546 : vector<8x64xf32>
    %549 = arith.mulf %538, %548 : vector<8x64xf32>
    %c656 = arith.constant 656 : index
    %c0_168 = arith.constant 0 : index
    %550 = vector.load %arg5[%c656, %c0_168] : memref<1008x128xbf16, #tpu.memory_space<vmem>>, vector<64x32xbf16>
    %551 = arith.truncf %549 : vector<8x64xf32> to vector<8x64xbf16>
    %cst_169 = arith.constant dense<0.000000e+00> : vector<8x32xf32>
    %552 = tpu.matmul %551, %550, %cst_169 {dimension_numbers = #tpu.dot_dimension_numbers<[1], [0], [0], [1], [0, 0, 1, 1], [], []>} : vector<8x64xbf16>, vector<64x32xbf16>, vector<8x32xf32> -> vector<8x32xf32>
    %c26 = arith.constant 26 : index
    %c0_170 = arith.constant 0 : index
    %553 = vector.load %arg6[%c26, %c0_170] : memref<48x128xf32, #tpu.memory_space<vmem>>, vector<1x32xf32>
    %554 = vector.broadcast %553 : vector<1x32xf32> to vector<8x32xf32>
    %555 = arith.addf %552, %554 : vector<8x32xf32>
    %556 = arith.addf %530, %555 : vector<8x32xf32>
    %cst_171 = arith.constant dense<0.000000e+00> : vector<8xf32>
    %557 = vector.multi_reduction <add>, %556, %cst_171 [1] : vector<8x32xf32> to vector<8xf32>
    %558 = vector.shape_cast %557 : vector<8xf32> to vector<8x1xf32>
    %559 = arith.mulf %556, %556 : vector<8x32xf32>
    %cst_172 = arith.constant dense<0.000000e+00> : vector<8xf32>
    %560 = vector.multi_reduction <add>, %559, %cst_172 [1] : vector<8x32xf32> to vector<8xf32>
    %561 = vector.shape_cast %560 : vector<8xf32> to vector<8x1xf32>
    %cst_173 = arith.constant 3.125000e-02 : f32
    %562 = vector.broadcast %cst_173 : f32 to vector<8x1xf32>
    %563 = arith.mulf %558, %562 : vector<8x1xf32>
    %cst_174 = arith.constant 3.125000e-02 : f32
    %564 = vector.broadcast %cst_174 : f32 to vector<8x1xf32>
    %565 = arith.mulf %561, %564 : vector<8x1xf32>
    %566 = arith.mulf %563, %563 : vector<8x1xf32>
    %567 = arith.subf %565, %566 : vector<8x1xf32>
    %568 = vector.broadcast %563 : vector<8x1xf32> to vector<8x32xf32>
    %569 = arith.subf %556, %568 : vector<8x32xf32>
    %cst_175 = arith.constant 9.99999996E-13 : f32
    %570 = vector.broadcast %cst_175 : f32 to vector<8x1xf32>
    %571 = arith.addf %567, %570 : vector<8x1xf32>
    %572 = math.rsqrt %571 : vector<8x1xf32>
    %573 = vector.broadcast %572 : vector<8x1xf32> to vector<8x32xf32>
    %574 = arith.mulf %569, %573 : vector<8x32xf32>
    %c31 = arith.constant 31 : index
    %c0_176 = arith.constant 0 : index
    %575 = vector.load %arg6[%c31, %c0_176] : memref<48x128xf32, #tpu.memory_space<vmem>>, vector<1x32xf32>
    %576 = vector.broadcast %575 : vector<1x32xf32> to vector<8x32xf32>
    %577 = arith.mulf %574, %576 : vector<8x32xf32>
    %c32 = arith.constant 32 : index
    %c0_177 = arith.constant 0 : index
    %578 = vector.load %arg6[%c32, %c0_177] : memref<48x128xf32, #tpu.memory_space<vmem>>, vector<1x32xf32>
    %579 = vector.broadcast %578 : vector<1x32xf32> to vector<8x32xf32>
    %580 = arith.addf %577, %579 : vector<8x32xf32>
    %c720 = arith.constant 720 : index
    %c0_178 = arith.constant 0 : index
    %581 = vector.load %arg5[%c720, %c0_178] : memref<1008x128xbf16, #tpu.memory_space<vmem>>, vector<32x96xbf16>
    %582 = arith.truncf %580 : vector<8x32xf32> to vector<8x32xbf16>
    %cst_179 = arith.constant dense<0.000000e+00> : vector<8x96xf32>
    %583 = tpu.matmul %582, %581, %cst_179 {dimension_numbers = #tpu.dot_dimension_numbers<[1], [0], [0], [1], [0, 0, 1, 1], [], []>} : vector<8x32xbf16>, vector<32x96xbf16>, vector<8x96xf32> -> vector<8x96xf32>
    %c33 = arith.constant 33 : index
    %c0_180 = arith.constant 0 : index
    %584 = vector.load %arg6[%c33, %c0_180] : memref<48x128xf32, #tpu.memory_space<vmem>>, vector<1x96xf32>
    %585 = vector.broadcast %584 : vector<1x96xf32> to vector<8x96xf32>
    %586 = arith.addf %583, %585 : vector<8x96xf32>
    %587 = vector.extract_strided_slice %586 {offsets = [0, 0], sizes = [8, 32], strides = [1, 1]} : vector<8x96xf32> to vector<8x32xf32>
    %cst_181 = arith.constant 2.500000e-01 : f32
    %588 = vector.broadcast %cst_181 : f32 to vector<8x32xf32>
    %589 = arith.mulf %587, %588 : vector<8x32xf32>
    %590 = vector.extract_strided_slice %586 {offsets = [0, 32], sizes = [8, 64], strides = [1, 1]} : vector<8x96xf32> to vector<8x64xf32>
    %591 = vector.extract_strided_slice %589 {offsets = [0, 0], sizes = [8, 16], strides = [1, 1]} : vector<8x32xf32> to vector<8x16xf32>
    %592 = vector.extract_strided_slice %590 {offsets = [0, 0], sizes = [8, 16], strides = [1, 1]} : vector<8x64xf32> to vector<8x16xf32>
    %593 = vector.extract_strided_slice %590 {offsets = [0, 32], sizes = [8, 16], strides = [1, 1]} : vector<8x64xf32> to vector<8x16xf32>
    %594 = arith.truncf %591 : vector<8x16xf32> to vector<8x16xbf16>
    %595 = arith.truncf %592 : vector<8x16xf32> to vector<8x16xbf16>
    %cst_182 = arith.constant dense<0.000000e+00> : vector<8x8xf32>
    %596 = tpu.matmul %594, %595, %cst_182 {dimension_numbers = #tpu.dot_dimension_numbers<[1], [1], [0], [0], [0, 0, 1, 0], [], []>} : vector<8x16xbf16>, vector<8x16xbf16>, vector<8x8xf32> -> vector<8x8xf32>
    %597 = arith.addf %596, %18 : vector<8x8xf32>
    %cst_183 = arith.constant dense<0xFF800000> : vector<8xf32>
    %598 = vector.multi_reduction <maximumf>, %597, %cst_183 [1] : vector<8x8xf32> to vector<8xf32>
    %599 = vector.shape_cast %598 : vector<8xf32> to vector<8x1xf32>
    %600 = vector.broadcast %599 : vector<8x1xf32> to vector<8x8xf32>
    %601 = arith.subf %597, %600 : vector<8x8xf32>
    %602 = math.exp %601 : vector<8x8xf32>
    %cst_184 = arith.constant dense<0.000000e+00> : vector<8xf32>
    %603 = vector.multi_reduction <add>, %602, %cst_184 [1] : vector<8x8xf32> to vector<8xf32>
    %604 = vector.shape_cast %603 : vector<8xf32> to vector<8x1xf32>
    %605 = tpu.reciprocal %604 {approx = true} : vector<8x1xf32> -> vector<8x1xf32>
    %606 = vector.broadcast %605 : vector<8x1xf32> to vector<8x8xf32>
    %607 = arith.mulf %602, %606 : vector<8x8xf32>
    %608 = arith.truncf %607 : vector<8x8xf32> to vector<8x8xbf16>
    %609 = arith.truncf %593 : vector<8x16xf32> to vector<8x16xbf16>
    %cst_185 = arith.constant dense<0.000000e+00> : vector<8x16xf32>
    %610 = tpu.matmul %608, %609, %cst_185 {dimension_numbers = #tpu.dot_dimension_numbers<[1], [0], [0], [1], [0, 0, 1, 1], [], []>} : vector<8x8xbf16>, vector<8x16xbf16>, vector<8x16xf32> -> vector<8x16xf32>
    %611 = vector.extract_strided_slice %589 {offsets = [0, 16], sizes = [8, 16], strides = [1, 1]} : vector<8x32xf32> to vector<8x16xf32>
    %612 = vector.extract_strided_slice %590 {offsets = [0, 16], sizes = [8, 16], strides = [1, 1]} : vector<8x64xf32> to vector<8x16xf32>
    %613 = vector.extract_strided_slice %590 {offsets = [0, 48], sizes = [8, 16], strides = [1, 1]} : vector<8x64xf32> to vector<8x16xf32>
    %614 = arith.truncf %611 : vector<8x16xf32> to vector<8x16xbf16>
    %615 = arith.truncf %612 : vector<8x16xf32> to vector<8x16xbf16>
    %cst_186 = arith.constant dense<0.000000e+00> : vector<8x8xf32>
    %616 = tpu.matmul %614, %615, %cst_186 {dimension_numbers = #tpu.dot_dimension_numbers<[1], [1], [0], [0], [0, 0, 1, 0], [], []>} : vector<8x16xbf16>, vector<8x16xbf16>, vector<8x8xf32> -> vector<8x8xf32>
    %617 = arith.addf %616, %18 : vector<8x8xf32>
    %cst_187 = arith.constant dense<0xFF800000> : vector<8xf32>
    %618 = vector.multi_reduction <maximumf>, %617, %cst_187 [1] : vector<8x8xf32> to vector<8xf32>
    %619 = vector.shape_cast %618 : vector<8xf32> to vector<8x1xf32>
    %620 = vector.broadcast %619 : vector<8x1xf32> to vector<8x8xf32>
    %621 = arith.subf %617, %620 : vector<8x8xf32>
    %622 = math.exp %621 : vector<8x8xf32>
    %cst_188 = arith.constant dense<0.000000e+00> : vector<8xf32>
    %623 = vector.multi_reduction <add>, %622, %cst_188 [1] : vector<8x8xf32> to vector<8xf32>
    %624 = vector.shape_cast %623 : vector<8xf32> to vector<8x1xf32>
    %625 = tpu.reciprocal %624 {approx = true} : vector<8x1xf32> -> vector<8x1xf32>
    %626 = vector.broadcast %625 : vector<8x1xf32> to vector<8x8xf32>
    %627 = arith.mulf %622, %626 : vector<8x8xf32>
    %628 = arith.truncf %627 : vector<8x8xf32> to vector<8x8xbf16>
    %629 = arith.truncf %613 : vector<8x16xf32> to vector<8x16xbf16>
    %cst_189 = arith.constant dense<0.000000e+00> : vector<8x16xf32>
    %630 = tpu.matmul %628, %629, %cst_189 {dimension_numbers = #tpu.dot_dimension_numbers<[1], [0], [0], [1], [0, 0, 1, 1], [], []>} : vector<8x8xbf16>, vector<8x16xbf16>, vector<8x16xf32> -> vector<8x16xf32>
    %631 = tpu.concatenate %610, %630 in 1 : vector<8x16xf32>, vector<8x16xf32> -> vector<8x32xf32>
    %c752 = arith.constant 752 : index
    %c0_190 = arith.constant 0 : index
    %632 = vector.load %arg5[%c752, %c0_190] : memref<1008x128xbf16, #tpu.memory_space<vmem>>, vector<32x32xbf16>
    %633 = arith.truncf %631 : vector<8x32xf32> to vector<8x32xbf16>
    %cst_191 = arith.constant dense<0.000000e+00> : vector<8x32xf32>
    %634 = tpu.matmul %633, %632, %cst_191 {dimension_numbers = #tpu.dot_dimension_numbers<[1], [0], [0], [1], [0, 0, 1, 1], [], []>} : vector<8x32xbf16>, vector<32x32xbf16>, vector<8x32xf32> -> vector<8x32xf32>
    %c34 = arith.constant 34 : index
    %c0_192 = arith.constant 0 : index
    %635 = vector.load %arg6[%c34, %c0_192] : memref<48x128xf32, #tpu.memory_space<vmem>>, vector<1x32xf32>
    %636 = vector.broadcast %635 : vector<1x32xf32> to vector<8x32xf32>
    %637 = arith.addf %634, %636 : vector<8x32xf32>
    %638 = arith.addf %580, %637 : vector<8x32xf32>
    %cst_193 = arith.constant dense<0.000000e+00> : vector<8xf32>
    %639 = vector.multi_reduction <add>, %638, %cst_193 [1] : vector<8x32xf32> to vector<8xf32>
    %640 = vector.shape_cast %639 : vector<8xf32> to vector<8x1xf32>
    %641 = arith.mulf %638, %638 : vector<8x32xf32>
    %cst_194 = arith.constant dense<0.000000e+00> : vector<8xf32>
    %642 = vector.multi_reduction <add>, %641, %cst_194 [1] : vector<8x32xf32> to vector<8xf32>
    %643 = vector.shape_cast %642 : vector<8xf32> to vector<8x1xf32>
    %cst_195 = arith.constant 3.125000e-02 : f32
    %644 = vector.broadcast %cst_195 : f32 to vector<8x1xf32>
    %645 = arith.mulf %640, %644 : vector<8x1xf32>
    %cst_196 = arith.constant 3.125000e-02 : f32
    %646 = vector.broadcast %cst_196 : f32 to vector<8x1xf32>
    %647 = arith.mulf %643, %646 : vector<8x1xf32>
    %648 = arith.mulf %645, %645 : vector<8x1xf32>
    %649 = arith.subf %647, %648 : vector<8x1xf32>
    %650 = vector.broadcast %645 : vector<8x1xf32> to vector<8x32xf32>
    %651 = arith.subf %638, %650 : vector<8x32xf32>
    %cst_197 = arith.constant 9.99999996E-13 : f32
    %652 = vector.broadcast %cst_197 : f32 to vector<8x1xf32>
    %653 = arith.addf %649, %652 : vector<8x1xf32>
    %654 = math.rsqrt %653 : vector<8x1xf32>
    %655 = vector.broadcast %654 : vector<8x1xf32> to vector<8x32xf32>
    %656 = arith.mulf %651, %655 : vector<8x32xf32>
    %c40 = arith.constant 40 : index
    %c0_198 = arith.constant 0 : index
    %657 = vector.load %arg6[%c40, %c0_198] : memref<48x128xf32, #tpu.memory_space<vmem>>, vector<1x32xf32>
    %658 = vector.broadcast %657 : vector<1x32xf32> to vector<8x32xf32>
    %659 = arith.mulf %656, %658 : vector<8x32xf32>
    %c41 = arith.constant 41 : index
    %c0_199 = arith.constant 0 : index
    %660 = vector.load %arg6[%c41, %c0_199] : memref<48x128xf32, #tpu.memory_space<vmem>>, vector<1x32xf32>
    %661 = vector.broadcast %660 : vector<1x32xf32> to vector<8x32xf32>
    %662 = arith.addf %659, %661 : vector<8x32xf32>
    %c784 = arith.constant 784 : index
    %c0_200 = arith.constant 0 : index
    %663 = vector.load %arg5[%c784, %c0_200] : memref<1008x128xbf16, #tpu.memory_space<vmem>>, vector<32x32xbf16>
    %664 = arith.truncf %662 : vector<8x32xf32> to vector<8x32xbf16>
    %cst_201 = arith.constant dense<0.000000e+00> : vector<8x32xf32>
    %665 = tpu.matmul %664, %663, %cst_201 {dimension_numbers = #tpu.dot_dimension_numbers<[1], [0], [0], [1], [0, 0, 1, 1], [], []>} : vector<8x32xbf16>, vector<32x32xbf16>, vector<8x32xf32> -> vector<8x32xf32>
    %c35 = arith.constant 35 : index
    %c0_202 = arith.constant 0 : index
    %666 = vector.load %arg6[%c35, %c0_202] : memref<48x128xf32, #tpu.memory_space<vmem>>, vector<1x32xf32>
    %667 = vector.broadcast %666 : vector<1x32xf32> to vector<8x32xf32>
    %668 = arith.addf %665, %667 : vector<8x32xf32>
    %cst_203 = arith.constant 2.500000e-01 : f32
    %669 = vector.broadcast %cst_203 : f32 to vector<8x32xf32>
    %670 = arith.mulf %668, %669 : vector<8x32xf32>
    %c816 = arith.constant 816 : index
    %c0_204 = arith.constant 0 : index
    %671 = vector.load %arg5[%c816, %c0_204] : memref<1008x128xbf16, #tpu.memory_space<vmem>>, vector<32x64xbf16>
    %672 = arith.truncf %323 : vector<8x32xf32> to vector<8x32xbf16>
    %cst_205 = arith.constant dense<0.000000e+00> : vector<8x64xf32>
    %673 = tpu.matmul %672, %671, %cst_205 {dimension_numbers = #tpu.dot_dimension_numbers<[1], [0], [0], [1], [0, 0, 1, 1], [], []>} : vector<8x32xbf16>, vector<32x64xbf16>, vector<8x64xf32> -> vector<8x64xf32>
    %c36 = arith.constant 36 : index
    %c0_206 = arith.constant 0 : index
    %674 = vector.load %arg6[%c36, %c0_206] : memref<48x128xf32, #tpu.memory_space<vmem>>, vector<1x64xf32>
    %675 = vector.broadcast %674 : vector<1x64xf32> to vector<8x64xf32>
    %676 = arith.addf %673, %675 : vector<8x64xf32>
    %677 = vector.extract_strided_slice %670 {offsets = [0, 0], sizes = [8, 16], strides = [1, 1]} : vector<8x32xf32> to vector<8x16xf32>
    %678 = vector.extract_strided_slice %676 {offsets = [0, 0], sizes = [8, 16], strides = [1, 1]} : vector<8x64xf32> to vector<8x16xf32>
    %679 = vector.extract_strided_slice %676 {offsets = [0, 32], sizes = [8, 16], strides = [1, 1]} : vector<8x64xf32> to vector<8x16xf32>
    %680 = arith.truncf %677 : vector<8x16xf32> to vector<8x16xbf16>
    %681 = arith.truncf %678 : vector<8x16xf32> to vector<8x16xbf16>
    %cst_207 = arith.constant dense<0.000000e+00> : vector<8x8xf32>
    %682 = tpu.matmul %680, %681, %cst_207 {dimension_numbers = #tpu.dot_dimension_numbers<[1], [1], [0], [0], [0, 0, 1, 0], [], []>} : vector<8x16xbf16>, vector<8x16xbf16>, vector<8x8xf32> -> vector<8x8xf32>
    %683 = vector.broadcast %7 : vector<1x8xf32> to vector<8x8xf32>
    %684 = arith.addf %682, %683 : vector<8x8xf32>
    %cst_208 = arith.constant dense<0xFF800000> : vector<8xf32>
    %685 = vector.multi_reduction <maximumf>, %684, %cst_208 [1] : vector<8x8xf32> to vector<8xf32>
    %686 = vector.shape_cast %685 : vector<8xf32> to vector<8x1xf32>
    %687 = vector.broadcast %686 : vector<8x1xf32> to vector<8x8xf32>
    %688 = arith.subf %684, %687 : vector<8x8xf32>
    %689 = math.exp %688 : vector<8x8xf32>
    %cst_209 = arith.constant dense<0.000000e+00> : vector<8xf32>
    %690 = vector.multi_reduction <add>, %689, %cst_209 [1] : vector<8x8xf32> to vector<8xf32>
    %691 = vector.shape_cast %690 : vector<8xf32> to vector<8x1xf32>
    %692 = tpu.reciprocal %691 {approx = true} : vector<8x1xf32> -> vector<8x1xf32>
    %693 = vector.broadcast %692 : vector<8x1xf32> to vector<8x8xf32>
    %694 = arith.mulf %689, %693 : vector<8x8xf32>
    %695 = arith.truncf %694 : vector<8x8xf32> to vector<8x8xbf16>
    %696 = arith.truncf %679 : vector<8x16xf32> to vector<8x16xbf16>
    %cst_210 = arith.constant dense<0.000000e+00> : vector<8x16xf32>
    %697 = tpu.matmul %695, %696, %cst_210 {dimension_numbers = #tpu.dot_dimension_numbers<[1], [0], [0], [1], [0, 0, 1, 1], [], []>} : vector<8x8xbf16>, vector<8x16xbf16>, vector<8x16xf32> -> vector<8x16xf32>
    %698 = vector.extract_strided_slice %670 {offsets = [0, 16], sizes = [8, 16], strides = [1, 1]} : vector<8x32xf32> to vector<8x16xf32>
    %699 = vector.extract_strided_slice %676 {offsets = [0, 16], sizes = [8, 16], strides = [1, 1]} : vector<8x64xf32> to vector<8x16xf32>
    %700 = vector.extract_strided_slice %676 {offsets = [0, 48], sizes = [8, 16], strides = [1, 1]} : vector<8x64xf32> to vector<8x16xf32>
    %701 = arith.truncf %698 : vector<8x16xf32> to vector<8x16xbf16>
    %702 = arith.truncf %699 : vector<8x16xf32> to vector<8x16xbf16>
    %cst_211 = arith.constant dense<0.000000e+00> : vector<8x8xf32>
    %703 = tpu.matmul %701, %702, %cst_211 {dimension_numbers = #tpu.dot_dimension_numbers<[1], [1], [0], [0], [0, 0, 1, 0], [], []>} : vector<8x16xbf16>, vector<8x16xbf16>, vector<8x8xf32> -> vector<8x8xf32>
    %704 = vector.broadcast %7 : vector<1x8xf32> to vector<8x8xf32>
    %705 = arith.addf %703, %704 : vector<8x8xf32>
    %cst_212 = arith.constant dense<0xFF800000> : vector<8xf32>
    %706 = vector.multi_reduction <maximumf>, %705, %cst_212 [1] : vector<8x8xf32> to vector<8xf32>
    %707 = vector.shape_cast %706 : vector<8xf32> to vector<8x1xf32>
    %708 = vector.broadcast %707 : vector<8x1xf32> to vector<8x8xf32>
    %709 = arith.subf %705, %708 : vector<8x8xf32>
    %710 = math.exp %709 : vector<8x8xf32>
    %cst_213 = arith.constant dense<0.000000e+00> : vector<8xf32>
    %711 = vector.multi_reduction <add>, %710, %cst_213 [1] : vector<8x8xf32> to vector<8xf32>
    %712 = vector.shape_cast %711 : vector<8xf32> to vector<8x1xf32>
    %713 = tpu.reciprocal %712 {approx = true} : vector<8x1xf32> -> vector<8x1xf32>
    %714 = vector.broadcast %713 : vector<8x1xf32> to vector<8x8xf32>
    %715 = arith.mulf %710, %714 : vector<8x8xf32>
    %716 = arith.truncf %715 : vector<8x8xf32> to vector<8x8xbf16>
    %717 = arith.truncf %700 : vector<8x16xf32> to vector<8x16xbf16>
    %cst_214 = arith.constant dense<0.000000e+00> : vector<8x16xf32>
    %718 = tpu.matmul %716, %717, %cst_214 {dimension_numbers = #tpu.dot_dimension_numbers<[1], [0], [0], [1], [0, 0, 1, 1], [], []>} : vector<8x8xbf16>, vector<8x16xbf16>, vector<8x16xf32> -> vector<8x16xf32>
    %719 = tpu.concatenate %697, %718 in 1 : vector<8x16xf32>, vector<8x16xf32> -> vector<8x32xf32>
    %c848 = arith.constant 848 : index
    %c0_215 = arith.constant 0 : index
    %720 = vector.load %arg5[%c848, %c0_215] : memref<1008x128xbf16, #tpu.memory_space<vmem>>, vector<32x32xbf16>
    %721 = arith.truncf %719 : vector<8x32xf32> to vector<8x32xbf16>
    %cst_216 = arith.constant dense<0.000000e+00> : vector<8x32xf32>
    %722 = tpu.matmul %721, %720, %cst_216 {dimension_numbers = #tpu.dot_dimension_numbers<[1], [0], [0], [1], [0, 0, 1, 1], [], []>} : vector<8x32xbf16>, vector<32x32xbf16>, vector<8x32xf32> -> vector<8x32xf32>
    %c37 = arith.constant 37 : index
    %c0_217 = arith.constant 0 : index
    %723 = vector.load %arg6[%c37, %c0_217] : memref<48x128xf32, #tpu.memory_space<vmem>>, vector<1x32xf32>
    %724 = vector.broadcast %723 : vector<1x32xf32> to vector<8x32xf32>
    %725 = arith.addf %722, %724 : vector<8x32xf32>
    %726 = arith.addf %662, %725 : vector<8x32xf32>
    %cst_218 = arith.constant dense<0.000000e+00> : vector<8xf32>
    %727 = vector.multi_reduction <add>, %726, %cst_218 [1] : vector<8x32xf32> to vector<8xf32>
    %728 = vector.shape_cast %727 : vector<8xf32> to vector<8x1xf32>
    %729 = arith.mulf %726, %726 : vector<8x32xf32>
    %cst_219 = arith.constant dense<0.000000e+00> : vector<8xf32>
    %730 = vector.multi_reduction <add>, %729, %cst_219 [1] : vector<8x32xf32> to vector<8xf32>
    %731 = vector.shape_cast %730 : vector<8xf32> to vector<8x1xf32>
    %cst_220 = arith.constant 3.125000e-02 : f32
    %732 = vector.broadcast %cst_220 : f32 to vector<8x1xf32>
    %733 = arith.mulf %728, %732 : vector<8x1xf32>
    %cst_221 = arith.constant 3.125000e-02 : f32
    %734 = vector.broadcast %cst_221 : f32 to vector<8x1xf32>
    %735 = arith.mulf %731, %734 : vector<8x1xf32>
    %736 = arith.mulf %733, %733 : vector<8x1xf32>
    %737 = arith.subf %735, %736 : vector<8x1xf32>
    %738 = vector.broadcast %733 : vector<8x1xf32> to vector<8x32xf32>
    %739 = arith.subf %726, %738 : vector<8x32xf32>
    %cst_222 = arith.constant 9.99999996E-13 : f32
    %740 = vector.broadcast %cst_222 : f32 to vector<8x1xf32>
    %741 = arith.addf %737, %740 : vector<8x1xf32>
    %742 = math.rsqrt %741 : vector<8x1xf32>
    %743 = vector.broadcast %742 : vector<8x1xf32> to vector<8x32xf32>
    %744 = arith.mulf %739, %743 : vector<8x32xf32>
    %c42 = arith.constant 42 : index
    %c0_223 = arith.constant 0 : index
    %745 = vector.load %arg6[%c42, %c0_223] : memref<48x128xf32, #tpu.memory_space<vmem>>, vector<1x32xf32>
    %746 = vector.broadcast %745 : vector<1x32xf32> to vector<8x32xf32>
    %747 = arith.mulf %744, %746 : vector<8x32xf32>
    %c43 = arith.constant 43 : index
    %c0_224 = arith.constant 0 : index
    %748 = vector.load %arg6[%c43, %c0_224] : memref<48x128xf32, #tpu.memory_space<vmem>>, vector<1x32xf32>
    %749 = vector.broadcast %748 : vector<1x32xf32> to vector<8x32xf32>
    %750 = arith.addf %747, %749 : vector<8x32xf32>
    %c880 = arith.constant 880 : index
    %c0_225 = arith.constant 0 : index
    %751 = vector.load %arg5[%c880, %c0_225] : memref<1008x128xbf16, #tpu.memory_space<vmem>>, vector<32x64xbf16>
    %752 = arith.truncf %750 : vector<8x32xf32> to vector<8x32xbf16>
    %cst_226 = arith.constant dense<0.000000e+00> : vector<8x64xf32>
    %753 = tpu.matmul %752, %751, %cst_226 {dimension_numbers = #tpu.dot_dimension_numbers<[1], [0], [0], [1], [0, 0, 1, 1], [], []>} : vector<8x32xbf16>, vector<32x64xbf16>, vector<8x64xf32> -> vector<8x64xf32>
    %c38 = arith.constant 38 : index
    %c0_227 = arith.constant 0 : index
    %754 = vector.load %arg6[%c38, %c0_227] : memref<48x128xf32, #tpu.memory_space<vmem>>, vector<1x64xf32>
    %755 = vector.broadcast %754 : vector<1x64xf32> to vector<8x64xf32>
    %756 = arith.addf %753, %755 : vector<8x64xf32>
    %cst_228 = arith.constant 5.000000e-01 : f32
    %757 = vector.broadcast %cst_228 : f32 to vector<8x64xf32>
    %758 = arith.mulf %757, %756 : vector<8x64xf32>
    %cst_229 = arith.constant 4.471500e-02 : f32
    %759 = vector.broadcast %cst_229 : f32 to vector<8x64xf32>
    %760 = arith.mulf %759, %756 : vector<8x64xf32>
    %761 = arith.mulf %760, %756 : vector<8x64xf32>
    %762 = arith.mulf %761, %756 : vector<8x64xf32>
    %763 = arith.addf %756, %762 : vector<8x64xf32>
    %cst_230 = arith.constant 0.797884583 : f32
    %764 = vector.broadcast %cst_230 : f32 to vector<8x64xf32>
    %765 = arith.mulf %764, %763 : vector<8x64xf32>
    %766 = math.tanh %765 : vector<8x64xf32>
    %cst_231 = arith.constant 1.000000e+00 : f32
    %767 = vector.broadcast %cst_231 : f32 to vector<8x64xf32>
    %768 = arith.addf %767, %766 : vector<8x64xf32>
    %769 = arith.mulf %758, %768 : vector<8x64xf32>
    %c912 = arith.constant 912 : index
    %c0_232 = arith.constant 0 : index
    %770 = vector.load %arg5[%c912, %c0_232] : memref<1008x128xbf16, #tpu.memory_space<vmem>>, vector<64x32xbf16>
    %771 = arith.truncf %769 : vector<8x64xf32> to vector<8x64xbf16>
    %cst_233 = arith.constant dense<0.000000e+00> : vector<8x32xf32>
    %772 = tpu.matmul %771, %770, %cst_233 {dimension_numbers = #tpu.dot_dimension_numbers<[1], [0], [0], [1], [0, 0, 1, 1], [], []>} : vector<8x64xbf16>, vector<64x32xbf16>, vector<8x32xf32> -> vector<8x32xf32>
    %c39 = arith.constant 39 : index
    %c0_234 = arith.constant 0 : index
    %773 = vector.load %arg6[%c39, %c0_234] : memref<48x128xf32, #tpu.memory_space<vmem>>, vector<1x32xf32>
    %774 = vector.broadcast %773 : vector<1x32xf32> to vector<8x32xf32>
    %775 = arith.addf %772, %774 : vector<8x32xf32>
    %776 = arith.addf %750, %775 : vector<8x32xf32>
    %cst_235 = arith.constant dense<0.000000e+00> : vector<8xf32>
    %777 = vector.multi_reduction <add>, %776, %cst_235 [1] : vector<8x32xf32> to vector<8xf32>
    %778 = vector.shape_cast %777 : vector<8xf32> to vector<8x1xf32>
    %779 = arith.mulf %776, %776 : vector<8x32xf32>
    %cst_236 = arith.constant dense<0.000000e+00> : vector<8xf32>
    %780 = vector.multi_reduction <add>, %779, %cst_236 [1] : vector<8x32xf32> to vector<8xf32>
    %781 = vector.shape_cast %780 : vector<8xf32> to vector<8x1xf32>
    %cst_237 = arith.constant 3.125000e-02 : f32
    %782 = vector.broadcast %cst_237 : f32 to vector<8x1xf32>
    %783 = arith.mulf %778, %782 : vector<8x1xf32>
    %cst_238 = arith.constant 3.125000e-02 : f32
    %784 = vector.broadcast %cst_238 : f32 to vector<8x1xf32>
    %785 = arith.mulf %781, %784 : vector<8x1xf32>
    %786 = arith.mulf %783, %783 : vector<8x1xf32>
    %787 = arith.subf %785, %786 : vector<8x1xf32>
    %788 = vector.broadcast %783 : vector<8x1xf32> to vector<8x32xf32>
    %789 = arith.subf %776, %788 : vector<8x32xf32>
    %cst_239 = arith.constant 9.99999996E-13 : f32
    %790 = vector.broadcast %cst_239 : f32 to vector<8x1xf32>
    %791 = arith.addf %787, %790 : vector<8x1xf32>
    %792 = math.rsqrt %791 : vector<8x1xf32>
    %793 = vector.broadcast %792 : vector<8x1xf32> to vector<8x32xf32>
    %794 = arith.mulf %789, %793 : vector<8x32xf32>
    %c44 = arith.constant 44 : index
    %c0_240 = arith.constant 0 : index
    %795 = vector.load %arg6[%c44, %c0_240] : memref<48x128xf32, #tpu.memory_space<vmem>>, vector<1x32xf32>
    %796 = vector.broadcast %795 : vector<1x32xf32> to vector<8x32xf32>
    %797 = arith.mulf %794, %796 : vector<8x32xf32>
    %c45 = arith.constant 45 : index
    %c0_241 = arith.constant 0 : index
    %798 = vector.load %arg6[%c45, %c0_241] : memref<48x128xf32, #tpu.memory_space<vmem>>, vector<1x32xf32>
    %799 = vector.broadcast %798 : vector<1x32xf32> to vector<8x32xf32>
    %800 = arith.addf %797, %799 : vector<8x32xf32>
    %c976 = arith.constant 976 : index
    %c0_242 = arith.constant 0 : index
    %801 = vector.load %arg5[%c976, %c0_242] : memref<1008x128xbf16, #tpu.memory_space<vmem>>, vector<32x128xbf16>
    %802 = arith.truncf %800 : vector<8x32xf32> to vector<8x32xbf16>
    %cst_243 = arith.constant dense<0.000000e+00> : vector<8x128xf32>
    %803 = tpu.matmul %802, %801, %cst_243 {dimension_numbers = #tpu.dot_dimension_numbers<[1], [0], [0], [1], [0, 0, 1, 1], [], []>} : vector<8x32xbf16>, vector<32x128xbf16>, vector<8x128xf32> -> vector<8x128xf32>
    %c46 = arith.constant 46 : index
    %c0_244 = arith.constant 0 : index
    %804 = vector.load %arg6[%c46, %c0_244] : memref<48x128xf32, #tpu.memory_space<vmem>>, vector<1x128xf32>
    %805 = vector.broadcast %804 : vector<1x128xf32> to vector<8x128xf32>
    %806 = arith.addf %803, %805 : vector<8x128xf32>
    %c0_245 = arith.constant 0 : index
    %c0_246 = arith.constant 0 : index
    %807 = vector.load %arg7[%c0_245, %c0_246] : memref<8x128xf32, #tpu.memory_space<vmem>>, vector<8x128xf32>
    tpu.vector_store %arg7[%c0_245, %c0_246], %806 {strides = array<i32>} : memref<8x128xf32, #tpu.memory_space<vmem>>, vector<8x128xf32>,
    return
  }
  func.func @transform_0(%arg0: i32) -> (i32, i32, i32) {
    %c0_i32 = arith.constant 0 : i32
    %c0_i32_0 = arith.constant 0 : i32
    %c0_i32_1 = arith.constant 0 : i32
    return %arg0, %c0_i32, %c0_i32_0 : i32, i32, i32
  }
  func.func @transform_1(%arg0: i32) -> (i32, i32, i32) {
    %c0_i32 = arith.constant 0 : i32
    %c0_i32_0 = arith.constant 0 : i32
    %c0_i32_1 = arith.constant 0 : i32
    return %arg0, %c0_i32, %c0_i32_0 : i32, i32, i32
  }
  func.func @transform_2(%arg0: i32) -> (i32, i32, i32) {
    %c0_i32 = arith.constant 0 : i32
    %c0_i32_0 = arith.constant 0 : i32
    %c0_i32_1 = arith.constant 0 : i32
    return %arg0, %c0_i32, %c0_i32_0 : i32, i32, i32
  }
  func.func @transform_3(%arg0: i32) -> (i32, i32, i32) {
    %c0_i32 = arith.constant 0 : i32
    %c0_i32_0 = arith.constant 0 : i32
    %c0_i32_1 = arith.constant 0 : i32
    return %arg0, %c0_i32, %c0_i32_0 : i32, i32, i32
  }
  func.func @transform_4(%arg0: i32) -> (i32, i32) {
    %c0_i32 = arith.constant 0 : i32
    %c0_i32_0 = arith.constant 0 : i32
    %c0_i32_1 = arith.constant 0 : i32
    return %c0_i32, %c0_i32_0 : i32, i32
  }
  func.func @transform_5(%arg0: i32) -> (i32, i32) {
    %c0_i32 = arith.constant 0 : i32
    %c0_i32_0 = arith.constant 0 : i32
    %c0_i32_1 = arith.constant 0 : i32
    return %c0_i32, %c0_i32_0 : i32, i32
  }
  func.func @transform_6(%arg0: i32) -> (i32, i32) {
    %c0_i32 = arith.constant 0 : i32
    %c0_i32_0 = arith.constant 0 : i32
    return %arg0, %c0_i32 : i32, i32
  }
}

</mosaic_0001>

<llo_original>
// kernel: rrs_forward.1
$region0: #{rrs_forward.1}
  #allocation0 [shape = 'u32[]', space=smem, size = 0x4, offset = 0x4, fixed_abs, tag = 'smem constant byte address 0x4 - core index']
  #allocation1 [shape = 'u32[144,128]{1,0:T(1,128)}', space=vmem, size = 0x12000, scoped, tag = 'internal scratch']
  %s0 = inlined_call_operand.vmem [shape: s32[2,8,1], index: 0, kind: input, shape index: {}]
  %s1 = inlined_call_operand.vmem [shape: f32[2,1,8], index: 1, kind: input, shape index: {}]
  %s2 = inlined_call_operand.vmem [shape: s32[2,8,1], index: 2, kind: input, shape index: {}]
  %s3 = inlined_call_operand.vmem [shape: f32[2,1,8], index: 3, kind: input, shape index: {}]
  %s4 = inlined_call_operand.hbm [shape: bf16[1008,128], index: 4, kind: input, shape index: {}]
  %s5 = inlined_call_operand.vmem [shape: f32[48,128], index: 5, kind: input, shape index: {}]
  %s6 = inlined_call_operand.vmem [shape: f32[16,128], index: 6, kind: output, shape index: {}]
  %s7 = sld [smem:[#allocation0]]
  $region61: #{rrs_forward.1} parent=0
    _
  %s9 = ssub.s32 1, %s7
  %s10 = scalar_select 0, %s9, %s7
  $region1: #{rrs_forward.1} parent=0
    #allocation2 [shape = 'u8[258048]{0}', space=vmem, size = 0x3f000, scoped, tag = 'input window, operand 4, single buffered']
    #allocation3 [shape = 's32[2]{0}', space=sflag, size = 0x8, scoped, tag = 'scoped memory for rrs_forward.1']
    %11 = vsyncpa [#allocation3], 0
    loop: start=0, step=1, limit=4
    $region2: #{rrs_forward.1} parent=1 // loop_pre_header
      _
    $region3: #{rrs_forward.1} parent=1 // loop_header
      %s13 = sphi 0, %s17
      %p14 = scmp.ge.s32.totalorder %s13, 4
      %s23 = sphi 0, %s25
      %s26 = sphi 0, %s23
      %s27 = sphi 0, %s26
      %s43 = sphi 0, %s27
      %s49 = sphi 0, %s51
      %s52 = sphi 0, %s49
      %s53 = sphi 0, %s52
      %s69 = sphi 0, %s53
      %s75 = sphi 0, %s77
      %s78 = sphi 0, %s75
      %s79 = sphi 0, %s78
      %s95 = sphi 0, %s79
      %s101 = sphi 0, %s103
      %s104 = sphi 0, %s101
      %s105 = sphi 0, %s104
      %s121 = sphi 0, %s105
      %s125 = sphi 0, %s125
      %s127 = sphi 0, %s125
      %s128 = sphi 0, %s127
      %s142 = sphi 0, %s128
      %s146 = sphi 0, %s146
      %s148 = sphi 0, %s146
      %s149 = sphi 0, %s148
      %s163 = sphi 0, %s149
      %s169 = sphi 0, %s171
      %s172 = sphi 0, %s169
      %s173 = sphi 0, %s172
      %s189 = sphi 0, %s173
    $region4: #{rrs_forward.1} parent=1 // loop_header_branch
      %16 = sbr.rel (%p14) target = $region8
    $region5: #{rrs_forward.1} parent=1 // loop_body
      %s18 = ssub.s32 %s13, 1
      %s19 = ssub.s32 %s13, 2
      %s20 = sadd.s32 %s13, 1
      %s21 = ssub.s32 %s13, %s20
      %p22 = scmp.eq.s32.totalorder %s21, 0
      %s24 = sadd.s32 %s23, 1
      %s25 = scalar_select %p22, %s23, %s24
      %p28 = pneg %p22
      %p29 = scmp.eq.s32.totalorder %s13, 1
      %p30 = por %p28, %p29
      %p31 = scmp.ne.s32.totalorder %s23, %s26
      %p32 = scmp.eq.s32.totalorder %s13, 0
      %p33 = por %p31, %p32
      %p34 = scmp.ne.s32.totalorder %s23, %s26
      %p35 = scmp.eq.s32.totalorder %s18, 1
      %p36 = por %p34, %p35
      %p37 = scmp.ne.s32.totalorder %s26, %s27
      %p38 = scmp.eq.s32.totalorder %s18, 0
      %p39 = por %p37, %p38
      %p40 = scmp.ne.s32.totalorder %s26, %s27
      %p41 = scmp.eq.s32.totalorder %s19, 1
      %p42 = por %p40, %p41
      %p44 = scmp.ne.s32.totalorder %s27, %s43
      %p45 = scmp.eq.s32.totalorder %s19, 0
      %p46 = por %p44, %p45
      %s47 = ssub.s32 %s13, %s20
      %p48 = scmp.eq.s32.totalorder %s47, 0
      %s50 = sadd.s32 %s49, 1
      %s51 = scalar_select %p48, %s49, %s50
      %p54 = pneg %p48
      %p55 = scmp.eq.s32.totalorder %s13, 1
      %p56 = por %p54, %p55
      %p57 = scmp.ne.s32.totalorder %s49, %s52
      %p58 = scmp.eq.s32.totalorder %s13, 0
      %p59 = por %p57, %p58
      %p60 = scmp.ne.s32.totalorder %s49, %s52
      %p61 = scmp.eq.s32.totalorder %s18, 1
      %p62 = por %p60, %p61
      %p63 = scmp.ne.s32.totalorder %s52, %s53
      %p64 = scmp.eq.s32.totalorder %s18, 0
      %p65 = por %p63, %p64
      %p66 = scmp.ne.s32.totalorder %s52, %s53
      %p67 = scmp.eq.s32.totalorder %s19, 1
      %p68 = por %p66, %p67
      %p70 = scmp.ne.s32.totalorder %s53, %s69
      %p71 = scmp.eq.s32.totalorder %s19, 0
      %p72 = por %p70, %p71
      %s73 = ssub.s32 %s13, %s20
      %p74 = scmp.eq.s32.totalorder %s73, 0
      %s76 = sadd.s32 %s75, 1
      %s77 = scalar_select %p74, %s75, %s76
      %p80 = pneg %p74
      %p81 = scmp.eq.s32.totalorder %s13, 1
      %p82 = por %p80, %p81
      %p83 = scmp.ne.s32.totalorder %s75, %s78
      %p84 = scmp.eq.s32.totalorder %s13, 0
      %p85 = por %p83, %p84
      %p86 = scmp.ne.s32.totalorder %s75, %s78
      %p87 = scmp.eq.s32.totalorder %s18, 1
      %p88 = por %p86, %p87
      %p89 = scmp.ne.s32.totalorder %s78, %s79
      %p90 = scmp.eq.s32.totalorder %s18, 0
      %p91 = por %p89, %p90
      %p92 = scmp.ne.s32.totalorder %s78, %s79
      %p93 = scmp.eq.s32.totalorder %s19, 1
      %p94 = por %p92, %p93
      %p96 = scmp.ne.s32.totalorder %s79, %s95
      %p97 = scmp.eq.s32.totalorder %s19, 0
      %p98 = por %p96, %p97
      %s99 = ssub.s32 %s13, %s20
      %p100 = scmp.eq.s32.totalorder %s99, 0
      %s102 = sadd.s32 %s101, 1
      %s103 = scalar_select %p100, %s101, %s102
      %p106 = pneg %p100
      %p107 = scmp.eq.s32.totalorder %s13, 1
      %p108 = por %p106, %p107
      %p109 = scmp.ne.s32.totalorder %s101, %s104
      %p110 = scmp.eq.s32.totalorder %s13, 0
      %p111 = por %p109, %p110
      %p112 = scmp.ne.s32.totalorder %s101, %s104
      %p113 = scmp.eq.s32.totalorder %s18, 1
      %p114 = por %p112, %p113
      %p115 = scmp.ne.s32.totalorder %s104, %s105
      %p116 = scmp.eq.s32.totalorder %s18, 0
      %p117 = por %p115, %p116
      %p118 = scmp.ne.s32.totalorder %s104, %s105
      %p119 = scmp.eq.s32.totalorder %s19, 1
      %p120 = por %p118, %p119
      %p122 = scmp.ne.s32.totalorder %s105, %s121
      %p123 = scmp.eq.s32.totalorder %s19, 0
      %p124 = por %p122, %p123
      %s126 = sadd.s32 %s125, 1
      %p129 = scmp.eq.s32.totalorder %s13, 1
      %p130 = scmp.ne.s32.totalorder %s125, %s127
      %p131 = scmp.eq.s32.totalorder %s13, 0
      %p132 = por %p130, %p131
      %p133 = scmp.ne.s32.totalorder %s125, %s127
      %p134 = scmp.eq.s32.totalorder %s18, 1
      %p135 = por %p133, %p134
      %p136 = scmp.ne.s32.totalorder %s127, %s128
      %p137 = scmp.eq.s32.totalorder %s18, 0
      %p138 = por %p136, %p137
      %p139 = scmp.ne.s32.totalorder %s127, %s128
      %p140 = scmp.eq.s32.totalorder %s19, 1
      %p141 = por %p139, %p140
      %p143 = scmp.ne.s32.totalorder %s128, %s142
      %p144 = scmp.eq.s32.totalorder %s19, 0
      %p145 = por %p143, %p144
      %s147 = sadd.s32 %s146, 1
      %p150 = scmp.eq.s32.totalorder %s13, 1
      %p151 = scmp.ne.s32.totalorder %s146, %s148
      %p152 = scmp.eq.s32.totalorder %s13, 0
      %p153 = por %p151, %p152
      %p154 = scmp.ne.s32.totalorder %s146, %s148
      %p155 = scmp.eq.s32.totalorder %s18, 1
      %p156 = por %p154, %p155
      %p157 = scmp.ne.s32.totalorder %s148, %s149
      %p158 = scmp.eq.s32.totalorder %s18, 0
      %p159 = por %p157, %p158
      %p160 = scmp.ne.s32.totalorder %s148, %s149
      %p161 = scmp.eq.s32.totalorder %s19, 1
      %p162 = por %p160, %p161
      %p164 = scmp.ne.s32.totalorder %s149, %s163
      %p165 = scmp.eq.s32.totalorder %s19, 0
      %p166 = por %p164, %p165
      %s167 = ssub.s32 %s13, %s20
      %p168 = scmp.eq.s32.totalorder %s167, 0
      %s170 = sadd.s32 %s169, 1
      %s171 = scalar_select %p168, %s169, %s170
      %p174 = pneg %p168
      %p175 = scmp.eq.s32.totalorder %s13, 1
      %p176 = por %p174, %p175
      %p177 = scmp.ne.s32.totalorder %s169, %s172
      %p178 = scmp.eq.s32.totalorder %s13, 0
      %p179 = por %p177, %p178
      %p180 = scmp.ne.s32.totalorder %s169, %s172
      %p181 = scmp.eq.s32.totalorder %s18, 1
      %p182 = por %p180, %p181
      %p183 = scmp.ne.s32.totalorder %s172, %s173
      %p184 = scmp.eq.s32.totalorder %s18, 0
      %p185 = por %p183, %p184
      %p186 = scmp.ne.s32.totalorder %s172, %s173
      %p187 = scmp.eq.s32.totalorder %s19, 1
      %p188 = por %p186, %p187
      %p190 = scmp.ne.s32.totalorder %s173, %s189
      %p191 = scmp.eq.s32.totalorder %s19, 0
      %p192 = por %p190, %p191
      %p193 = scmp.le.s32.totalorder 1, %s13
      %p194 = scmp.lt.s32.totalorder %s13, 3
      %p195 = pnand %p193, %p194
      %p196 = pneg %p195
      // Predicated region
      $region9: #{rrs_forward.1} parent=5 // pred_check
        _
      $region10: #{rrs_forward.1} parent=5 // pred_check_branch
        %198 = sbr.rel (%p195) target = $region12
      $region11: #{rrs_forward.1} parent=5 // pred_region
        %s199 = ssub.s32 %s13, 1
        // Predicated region
        $region13: #{rrs_forward.1} parent=11 // pred_check
          %p200 = pneg %p138
        $region14: #{rrs_forward.1} parent=11 // pred_check_branch
          %202 = sbr.rel (%p200) target = $region16
        $region15: #{rrs_forward.1} parent=11 // pred_region
          %s204 = ssub.s32 8064, 8064
          %205 = vsyncadd [#allocation3], %s204
          %s206 = sshll.u32 [#allocation2], 4
          %s207 = int_to_ptr.vmem [resolvable:$true] %s206
          %212 = dma.hbm_to_vmem [thread:$0]  %s4, 8064, %s207, [#allocation3], 64, 64, 4
        $region16: #{rrs_forward.1} parent=11 // pred_fallthru
          _
        // Predicated region
        $region17: #{rrs_forward.1} parent=11 // pred_check
          %p213 = pneg %p159
        $region18: #{rrs_forward.1} parent=11 // pred_check_branch
          %215 = sbr.rel (%p213) target = $region20
        $region19: #{rrs_forward.1} parent=11 // pred_region
          _
        $region20: #{rrs_forward.1} parent=11 // pred_fallthru
          _
      $region12: #{rrs_forward.1} parent=5 // pred_fallthru
        _
      %p216 = scmp.lt.s32.totalorder %s13, 2
      // Predicated region
      $region21: #{rrs_forward.1} parent=5 // pred_check
        %p217 = pneg %p216
      $region22: #{rrs_forward.1} parent=5 // pred_check_branch
        %219 = sbr.rel (%p217) target = $region24
      $region23: #{rrs_forward.1} parent=5 // pred_region
        // Predicated region
        $region25: #{rrs_forward.1} parent=23 // pred_check
          %p220 = pneg %p33
        $region26: #{rrs_forward.1} parent=23 // pred_check_branch
          %222 = sbr.rel (%p220) target = $region28
        $region27: #{rrs_forward.1} parent=23 // pred_region
          %p223 = scmp.lt.s32.totalorder %s13, 1
          %s224 = scalar_select %p223, %s13, 1
          %s225 = smul.addr %s224, 8
          %s226 = scalar_lea.vmem %s0, %s225
        $region28: #{rrs_forward.1} parent=23 // pred_fallthru
          _
        // Predicated region
        $region29: #{rrs_forward.1} parent=23 // pred_check
          %p227 = pneg %p59
        $region30: #{rrs_forward.1} parent=23 // pred_check_branch
          %229 = sbr.rel (%p227) target = $region32
        $region31: #{rrs_forward.1} parent=23 // pred_region
          %p230 = scmp.lt.s32.totalorder %s13, 1
          %s231 = scalar_select %p230, %s13, 1
          %s232 = scalar_lea.vmem %s1, %s231
        $region32: #{rrs_forward.1} parent=23 // pred_fallthru
          _
        // Predicated region
        $region33: #{rrs_forward.1} parent=23 // pred_check
          %p233 = pneg %p85
        $region34: #{rrs_forward.1} parent=23 // pred_check_branch
          %235 = sbr.rel (%p233) target = $region36
        $region35: #{rrs_forward.1} parent=23 // pred_region
          %p236 = scmp.lt.s32.totalorder %s13, 1
          %s237 = scalar_select %p236, %s13, 1
          %s238 = smul.addr %s237, 8
          %s239 = scalar_lea.vmem %s2, %s238
        $region36: #{rrs_forward.1} parent=23 // pred_fallthru
          _
        // Predicated region
        $region37: #{rrs_forward.1} parent=23 // pred_check
          %p240 = pneg %p111
        $region38: #{rrs_forward.1} parent=23 // pred_check_branch
          %242 = sbr.rel (%p240) target = $region40
        $region39: #{rrs_forward.1} parent=23 // pred_region
          %p243 = scmp.lt.s32.totalorder %s13, 1
          %s244 = scalar_select %p243, %s13, 1
          %s245 = scalar_lea.vmem %s3, %s244
        $region40: #{rrs_forward.1} parent=23 // pred_fallthru
          _
      $region24: #{rrs_forward.1} parent=5 // pred_fallthru
        _
      %p246 = scmp.le.s32.totalorder 1, %s13
      %p247 = scmp.lt.s32.totalorder %s13, 3
      %p248 = pnand %p246, %p247
      %p249 = pneg %p248
      // Predicated region
      $region41: #{rrs_forward.1} parent=5 // pred_check
        _
      $region42: #{rrs_forward.1} parent=5 // pred_check_branch
        %251 = sbr.rel (%p248) target = $region44
      $region43: #{rrs_forward.1} parent=5 // pred_region
        %s252 = ssub.s32 %s13, 1
        // Predicated region
        $region45: #{rrs_forward.1} parent=43 // pred_check
          %p253 = pneg %p138
        $region46: #{rrs_forward.1} parent=43 // pred_check_branch
          %255 = sbr.rel (%p253) target = $region48
        $region47: #{rrs_forward.1} parent=43 // pred_region
          %256 = dma.done [#allocation3], 8064
        $region48: #{rrs_forward.1} parent=43 // pred_fallthru
          _
        %p257 = scmp.lt.s32.totalorder %s18, 1
        %s258 = scalar_select %p257, %s18, 1
        %s259 = smul.addr %s258, 8
        %s260 = scalar_lea.vmem %s0, %s259
        %p261 = pneg %p39
        %p262 = pneg %p36
        %p263 = scmp.lt.s32.totalorder %s18, 1
        %s264 = scalar_select %p263, %s18, 1
        %s265 = scalar_lea.vmem %s1, %s264
        %p266 = pneg %p65
        %p267 = pneg %p62
        %p268 = scmp.lt.s32.totalorder %s18, 1
        %s269 = scalar_select %p268, %s18, 1
        %s270 = smul.addr %s269, 8
        %s271 = scalar_lea.vmem %s2, %s270
        %p272 = pneg %p91
        %p273 = pneg %p88
        %p274 = scmp.lt.s32.totalorder %s18, 1
        %s275 = scalar_select %p274, %s18, 1
        %s276 = scalar_lea.vmem %s3, %s275
        %p277 = pneg %p117
        %p278 = pneg %p114
        %p279 = pneg %p138
        %p280 = pneg %p135
        %p281 = pneg %p159
        %p282 = pneg %p156
        %p283 = pneg %p185
        %p284 = pneg %p182
        %p285 = scmp.lt.s32.totalorder %s18, 1
        %s286 = scalar_select %p285, %s18, 1
        %s287 = smul.addr %s286, 8
        %s288 = scalar_lea.vmem %s6, %s287
        %p289 = scmp.lt.s32.totalorder %s18, 1
        %s290 = scalar_select %p289, %s18, 1
        %s291 = smul.addr %s290, 8
        %s292 = scalar_lea.vmem %s0, %s291
        %p293 = scmp.lt.s32.totalorder %s18, 1
        %s294 = scalar_select %p293, %s18, 1
        %s295 = scalar_lea.vmem %s1, %s294
        %p296 = scmp.lt.s32.totalorder %s18, 1
        %s297 = scalar_select %p296, %s18, 1
        %s298 = smul.addr %s297, 8
        %s299 = scalar_lea.vmem %s2, %s298
        %p300 = scmp.lt.s32.totalorder %s18, 1
        %s301 = scalar_select %p300, %s18, 1
        %s302 = scalar_lea.vmem %s3, %s301
        %p303 = scmp.lt.s32.totalorder %s18, 1
        %s304 = scalar_select %p303, %s18, 1
        %s305 = smul.addr %s304, 8
        %s306 = scalar_lea.vmem %s6, %s305
        %v308 = vld [vmem:[%s295] sm:$0x1]
        %v309 = vld [vmem:[%s302] sm:$0x1]
        %v310 = vsub.f32 1.0, %v308
        %v311 = vmul.f32 %v310, -1e+09
        %v312 = vlaneseq
        %v313 = vshrl.u32 %v312, 7
        %v314 = vlaneseq
        %v315 = vand.u32 %v314, 127
        %vm316 = vcmp.le.s32.totalorder %v315, %v313
        %v317 = vsel %vm316, 1, 0
        %v318 = vcvt.s32.f32 %v317
        %v320 = vlaneseq
        %v321 = vshrl.u32 %v320, 7
        %v322 = vsub.s32 0, %v321
        %v323 = vrot.slane %v309, %v322
        %v325 = vmul.f32 %v318, %v323
        %v326 = vsub.f32 1.0, %v325
        %v327 = vmul.f32 %v326, -1e+09
        %v328 = vld [vmem:[%s292] sm:$0xff]
        %329 = vset.pattern.permute.xlu0 0
        %330 = vperm.xlu0 %329, %v328
        %v331 = vpop.permute.xlu0 %330
        %vm332 = vcmp.eq.s32.totalorder %v331, %v315
        %v333 = vld [vmem:[#allocation2] sm:$0xf]
        %v334 = vld [vmem:[#allocation2 + $0x4] sm:$0xf]
        %v335 = vld [vmem:[#allocation2 + $0x8] sm:$0xf]
        %v336 = vld [vmem:[#allocation2 + $0xc] sm:$0xf]
        %v337 = vld [vmem:[#allocation2 + $0x10] sm:$0xf]
        %v338 = vld [vmem:[#allocation2 + $0x14] sm:$0xf]
        %v339 = vld [vmem:[#allocation2 + $0x18] sm:$0xf]
        %v340 = vld [vmem:[#allocation2 + $0x1c] sm:$0xf]
        %v341 = vsel %vm332, 1, 0
        %v342 = vcvt.s32.f32 %v341
        %v343 = vpack.c.bf16 %v342, %v342
        %v344 = vld [vmem:[#allocation2 + $0x20] sm:$0xf]
        %v345 = vunpack.c.l.bf16 %v344
        %v354 = vunpack.c.l.b16 %v333
        %v355 = vunpack.c.l.b16 %v334
        %v356 = vunpack.c.l.b16 %v335
        %v357 = vunpack.c.l.b16 %v336
        %v358 = vunpack.c.l.b16 %v337
        %v359 = vunpack.c.l.b16 %v338
        %v360 = vunpack.c.l.b16 %v339
        %v361 = vunpack.c.l.b16 %v340
        %v362 = vpack.c.b16 %v355, %v354
        %v363 = vpack.c.b16 %v357, %v356
        %v364 = vpack.c.b16 %v359, %v358
        %v365 = vpack.c.b16 %v361, %v360
        %vm370 = vcmask 523264
        %v372 = vsel %vm370, %v343, 0
        %374 = vmatprep.subr.bf16.mxu0 0
        %375 = vmatpush1.bf16.msra.mxu0 %v362
        %376 = vmatprep.subr.bf16.mxu0 0
        %377 = vmatpush1.bf16.msra.mxu0 %v363
        %378 = vmatprep.subr.bf16.mxu0 0
        %379 = vmatpush1.bf16.msra.mxu0 %v364
        %380 = vmatprep.subr.bf16.mxu0 0
        %381 = vmatpush1.bf16.msra.mxu0 %v365
        %382 = vmatprep.subr.bf16.mxu0 0
        %383 = vmatpush1.bf16.msra.mxu0 0
        %384 = vmatprep.subr.bf16.mxu0 0
        %385 = vmatpush1.bf16.msra.mxu0 0
        %386 = vmatprep.subr.bf16.mxu0 0
        %387 = vmatpush1.bf16.msra.mxu0 0
        %388 = vmatprep.subr.bf16.mxu0 0
        %389 = vmatpush1.bf16.msra.mxu0 0
        %390 = vmatprep.subr.bf16.mxu0 0
        %391 = vmatpush1.bf16.msra.mxu0 0
        %392 = vmatprep.subr.bf16.mxu0 0
        %393 = vmatpush1.bf16.msra.mxu0 0
        %394 = vmatprep.subr.bf16.mxu0 0
        %395 = vmatpush1.bf16.msra.mxu0 0
        %396 = vmatprep.subr.bf16.mxu0 0
        %397 = vmatpush1.bf16.msra.mxu0 0
        %398 = vmatprep.subr.bf16.mxu0 0
        %399 = vmatpush1.bf16.msra.mxu0 0
        %400 = vmatprep.subr.bf16.mxu0 0
        %401 = vmatpush1.bf16.msra.mxu0 0
        %402 = vmatprep.subr.bf16.mxu0 0
        %403 = vmatpush1.bf16.msra.mxu0 0
        %404 = vmatprep.subr.bf16.mxu0 0
        %405 = vmatpush1.bf16.msra.mxu0 0
        %406 = vmatprep.mubr.bf16.mxu0 0
        %407 = vmatmul.mubr.bf16.gmra.mrb[0].mxu0 %v372
        %v408 = vpop.f32.mrb[0].mxu0
        %v409 = vadd.f32 %v345, %v408
        %v410 = vpop.f32.mrb[0].mxu0
        %v411 = vpop.f32.mrb[0].mxu0
        %v412 = vpop.f32.mrb[0].mxu0
        %413 = vdwg.mxu0
        %vm414 = vcmask 261120
        %v415 = vsel %vm414, %v409, 0.0
        %416 = vadd.xlane.f32.xlu0 %v415
        %v417 = vpop.xlane.xlu0 %416
        %v418 = vmul.f32 %v409, %v409
        %v419 = vsel %vm414, %v418, 0.0
        %420 = vadd.xlane.f32.xlu0 %v419
        %v421 = vpop.xlane.xlu0 %420
        %v422 = vmul.f32 %v417, 0.03125
        %v423 = vmul.f32 %v421, 0.03125
        %v424 = vmul.f32 %v422, %v422
        %v425 = vsub.f32 %v423, %v424
        %v426 = vsub.f32 %v409, %v422
        %v427 = vadd.f32 %v425, 1e-12
        %v428 = vrsqrt.pop %v427
        %v429 = vmul.f32 %v426, %v428
        %v430 = vld [vmem:[%s5] sm:$0x1]
        %v431 = vlaneseq
        %v432 = vshrl.u32 %v431, 7
        %v433 = vsub.s32 0, %v432
        %v434 = vrot.slane %v430, %v433
        %v435 = vmul.f32 %v429, %v434
        %v436 = vld [vmem:[%s5 + $0x1] sm:$0x1]
        %v437 = vlaneseq
        %v438 = vshrl.u32 %v437, 7
        %v439 = vsub.s32 0, %v438
        %v440 = vrot.slane %v436, %v439
        %v441 = vadd.f32 %v435, %v440
        %v442 = vld [vmem:[#allocation2 + $0x48] sm:$0xf]
        %v443 = vld [vmem:[#allocation2 + $0x4c] sm:$0xf]
        %v444 = vld [vmem:[#allocation2 + $0x50] sm:$0xf]
        %v445 = vld [vmem:[#allocation2 + $0x54] sm:$0xf]
        %v446 = vpack.c.bf16 %v441, %v441
        %v447 = vld [vmem:[%s5 + $0x4] sm:$0x1]
        %v448 = vlaneseq
        %v449 = vshrl.u32 %v448, 7
        %v450 = vsub.s32 0, %v449
        %v451 = vrot.slane %v447, %v450
        %v456 = vunpack.c.l.b16 %v442
        %v457 = vunpack.c.l.b16 %v443
        %v458 = vunpack.c.l.b16 %v444
        %v459 = vunpack.c.l.b16 %v445
        %v460 = vpack.c.b16 %v457, %v456
        %v461 = vpack.c.b16 %v459, %v458
        %v465 = vsel %vm414, %v446, 0
        %467 = vmatprep.subr.bf16.mxu0 0
        %468 = vmatpush1.bf16.msra.mxu0 %v460
        %469 = vmatprep.subr.bf16.mxu0 0
        %470 = vmatpush1.bf16.msra.mxu0 %v461
        %471 = vmatprep.subr.bf16.mxu0 0
        %472 = vmatpush1.bf16.msra.mxu0 0
        %473 = vmatprep.subr.bf16.mxu0 0
        %474 = vmatpush1.bf16.msra.mxu0 0
        %475 = vmatprep.subr.bf16.mxu0 0
        %476 = vmatpush1.bf16.msra.mxu0 0
        %477 = vmatprep.subr.bf16.mxu0 0
        %478 = vmatpush1.bf16.msra.mxu0 0
        %479 = vmatprep.subr.bf16.mxu0 0
        %480 = vmatpush1.bf16.msra.mxu0 0
        %481 = vmatprep.subr.bf16.mxu0 0
        %482 = vmatpush1.bf16.msra.mxu0 0
        %483 = vmatprep.subr.bf16.mxu0 0
        %484 = vmatpush1.bf16.msra.mxu0 0
        %485 = vmatprep.subr.bf16.mxu0 0
        %486 = vmatpush1.bf16.msra.mxu0 0
        %487 = vmatprep.subr.bf16.mxu0 0
        %488 = vmatpush1.bf16.msra.mxu0 0
        %489 = vmatprep.subr.bf16.mxu0 0
        %490 = vmatpush1.bf16.msra.mxu0 0
        %491 = vmatprep.subr.bf16.mxu0 0
        %492 = vmatpush1.bf16.msra.mxu0 0
        %493 = vmatprep.subr.bf16.mxu0 0
        %494 = vmatpush1.bf16.msra.mxu0 0
        %495 = vmatprep.subr.bf16.mxu0 0
        %496 = vmatpush1.bf16.msra.mxu0 0
        %497 = vmatprep.subr.bf16.mxu0 0
        %498 = vmatpush1.bf16.msra.mxu0 0
        %499 = vmatprep.mubr.bf16.mxu0 0
        %500 = vmatmul.mubr.bf16.gmra.mrb[0].mxu0 %v465
        %v501 = vpop.f32.mrb[0].mxu0
        %v502 = vadd.f32 %v451, %v501
        %v503 = vpop.f32.mrb[0].mxu0
        %v504 = vpop.f32.mrb[0].mxu0
        %v505 = vpop.f32.mrb[0].mxu0
        %506 = vdwg.mxu0
        %v507 = vmul.f32 %v502, 0.25
        %v508 = vpack.c.bf16 %v507, %v507
        %v509 = vpack.c.bf16 %v502, %v502
        %v511 = vlaneseq
        %v512 = vshrl.u32 %v511, 7
        %v513 = vsub.s32 0, %v512
        %v514 = vrot.slane %v311, %v513
        %517 = vrot.lane.b32.xlu0 %v509, 96
        %v518 = vpop.permute.xlu0 %517
        %vm519 = vcmask 130048
        %v521 = vsel %vm519, %v508, 0
        %v524 = vsel %vm519, %v518, 0
        %526 = vmatprep.subr.bf16.mxu0 0
        %527 = vmatpush1.bf16.xpose.msra.mxu0 %v524
        %528 = vmatprep.subr.bf16.mxu0 0
        %529 = vmatpush1.bf16.xpose.msra.mxu0 0
        %530 = vmatprep.subr.bf16.mxu0 0
        %531 = vmatpush1.bf16.xpose.msra.mxu0 0
        %532 = vmatprep.subr.bf16.mxu0 0
        %533 = vmatpush1.bf16.xpose.msra.mxu0 0
        %534 = vmatprep.subr.bf16.mxu0 0
        %535 = vmatpush1.bf16.xpose.msra.mxu0 0
        %536 = vmatprep.subr.bf16.mxu0 0
        %537 = vmatpush1.bf16.xpose.msra.mxu0 0
        %538 = vmatprep.subr.bf16.mxu0 0
        %539 = vmatpush1.bf16.xpose.msra.mxu0 0
        %540 = vmatprep.subr.bf16.mxu0 0
        %541 = vmatpush1.bf16.xpose.msra.mxu0 0
        %542 = vmatprep.subr.bf16.mxu0 0
        %543 = vmatpush1.bf16.xpose.msra.mxu0 0
        %544 = vmatprep.subr.bf16.mxu0 0
        %545 = vmatpush1.bf16.xpose.msra.mxu0 0
        %546 = vmatprep.subr.bf16.mxu0 0
        %547 = vmatpush1.bf16.xpose.msra.mxu0 0
        %548 = vmatprep.subr.bf16.mxu0 0
        %549 = vmatpush1.bf16.xpose.msra.mxu0 0
        %550 = vmatprep.subr.bf16.mxu0 0
        %551 = vmatpush1.bf16.xpose.msra.mxu0 0
        %552 = vmatprep.subr.bf16.mxu0 0
        %553 = vmatpush1.bf16.xpose.msra.mxu0 0
        %554 = vmatprep.subr.bf16.mxu0 0
        %555 = vmatpush1.bf16.xpose.msra.mxu0 0
        %556 = vmatprep.subr.bf16.mxu0 0
        %557 = vmatpush1.bf16.xpose.msra.mxu0 0
        %558 = vmatprep.mubr.bf16.mxu0 0
        %559 = vmatmul.mubr.bf16.gmra.mrb[0].mxu0 %v521
        %v560 = vpop.f32.mrb[0].mxu0
        %v561 = vadd.f32 %v514, %v560
        %v562 = vpop.f32.mrb[0].mxu0
        %v563 = vpop.f32.mrb[0].mxu0
        %v564 = vpop.f32.mrb[0].mxu0
        %565 = vdwg.mxu0
        %vm566 = vcmask 64512
        %v567 = vsel %vm566, %v561, -inf
        %568 = vmax.xlane.f32.xlu0 %v567
        %v569 = vpop.xlane.xlu0 %568
        %v570 = vsub.f32 %v561, %v569
        %v571 = vmul.f32 %v570, 1.442695
        %v572 = vpow.pop %v571
        %v573 = vsel %vm566, %v572, 0.0
        %574 = vadd.xlane.f32.xlu0 %v573
        %v575 = vpop.xlane.xlu0 %574
        %v576 = vrcp.pop %v575
        %v577 = vmul.f32 %v572, %v576
        %v578 = vpack.c.bf16 %v577, %v577
        %579 = vrot.lane.b32.xlu0 %v509, 64
        %v580 = vpop.permute.xlu0 %579
        %v582 = vsel %vm566, %v578, 0
        %vm584 = vcmask 1043456
        %v586 = vsel %vm584, %v580, 0
        %588 = vmatprep.subr.bf16.mxu0 0
        %589 = vmatpush1.bf16.msra.mxu0 %v586
        %590 = vmatprep.subr.bf16.mxu0 0
        %591 = vmatpush1.bf16.msra.mxu0 0
        %592 = vmatprep.subr.bf16.mxu0 0
        %593 = vmatpush1.bf16.msra.mxu0 0
        %594 = vmatprep.subr.bf16.mxu0 0
        %595 = vmatpush1.bf16.msra.mxu0 0
        %596 = vmatprep.subr.bf16.mxu0 0
        %597 = vmatpush1.bf16.msra.mxu0 0
        %598 = vmatprep.subr.bf16.mxu0 0
        %599 = vmatpush1.bf16.msra.mxu0 0
        %600 = vmatprep.subr.bf16.mxu0 0
        %601 = vmatpush1.bf16.msra.mxu0 0
        %602 = vmatprep.subr.bf16.mxu0 0
        %603 = vmatpush1.bf16.msra.mxu0 0
        %604 = vmatprep.subr.bf16.mxu0 0
        %605 = vmatpush1.bf16.msra.mxu0 0
        %606 = vmatprep.subr.bf16.mxu0 0
        %607 = vmatpush1.bf16.msra.mxu0 0
        %608 = vmatprep.subr.bf16.mxu0 0
        %609 = vmatpush1.bf16.msra.mxu0 0
        %610 = vmatprep.subr.bf16.mxu0 0
        %611 = vmatpush1.bf16.msra.mxu0 0
        %612 = vmatprep.subr.bf16.mxu0 0
        %613 = vmatpush1.bf16.msra.mxu0 0
        %614 = vmatprep.subr.bf16.mxu0 0
        %615 = vmatpush1.bf16.msra.mxu0 0
        %616 = vmatprep.subr.bf16.mxu0 0
        %617 = vmatpush1.bf16.msra.mxu0 0
        %618 = vmatprep.subr.bf16.mxu0 0
        %619 = vmatpush1.bf16.msra.mxu0 0
        %620 = vmatprep.mubr.bf16.mxu0 0
        %621 = vmatmul.mubr.bf16.gmra.mrb[0].mxu0 %v582
        %v622 = vpop.f32.mrb[0].mxu0
        %v623 = vadd.f32 0.0, %v622
        %v624 = vpop.f32.mrb[0].mxu0
        %v625 = vpop.f32.mrb[0].mxu0
        %v626 = vpop.f32.mrb[0].mxu0
        %627 = vdwg.mxu0
        %629 = vrot.lane.b32.xlu0 %v508, 112
        %v630 = vpop.permute.xlu0 %629
        %631 = vrot.lane.b32.xlu0 %v509, 80
        %v632 = vpop.permute.xlu0 %631
        %v634 = vsel %vm519, %v630, 0
        %v637 = vsel %vm519, %v632, 0
        %639 = vmatprep.subr.bf16.mxu0 0
        %640 = vmatpush1.bf16.xpose.msra.mxu0 %v637
        %641 = vmatprep.subr.bf16.mxu0 0
        %642 = vmatpush1.bf16.xpose.msra.mxu0 0
        %643 = vmatprep.subr.bf16.mxu0 0
        %644 = vmatpush1.bf16.xpose.msra.mxu0 0
        %645 = vmatprep.subr.bf16.mxu0 0
        %646 = vmatpush1.bf16.xpose.msra.mxu0 0
        %647 = vmatprep.subr.bf16.mxu0 0
        %648 = vmatpush1.bf16.xpose.msra.mxu0 0
        %649 = vmatprep.subr.bf16.mxu0 0
        %650 = vmatpush1.bf16.xpose.msra.mxu0 0
        %651 = vmatprep.subr.bf16.mxu0 0
        %652 = vmatpush1.bf16.xpose.msra.mxu0 0
        %653 = vmatprep.subr.bf16.mxu0 0
        %654 = vmatpush1.bf16.xpose.msra.mxu0 0
        %655 = vmatprep.subr.bf16.mxu0 0
        %656 = vmatpush1.bf16.xpose.msra.mxu0 0
        %657 = vmatprep.subr.bf16.mxu0 0
        %658 = vmatpush1.bf16.xpose.msra.mxu0 0
        %659 = vmatprep.subr.bf16.mxu0 0
        %660 = vmatpush1.bf16.xpose.msra.mxu0 0
        %661 = vmatprep.subr.bf16.mxu0 0
        %662 = vmatpush1.bf16.xpose.msra.mxu0 0
        %663 = vmatprep.subr.bf16.mxu0 0
        %664 = vmatpush1.bf16.xpose.msra.mxu0 0
        %665 = vmatprep.subr.bf16.mxu0 0
        %666 = vmatpush1.bf16.xpose.msra.mxu0 0
        %667 = vmatprep.subr.bf16.mxu0 0
        %668 = vmatpush1.bf16.xpose.msra.mxu0 0
        %669 = vmatprep.subr.bf16.mxu0 0
        %670 = vmatpush1.bf16.xpose.msra.mxu0 0
        %671 = vmatprep.mubr.bf16.mxu0 0
        %672 = vmatmul.mubr.bf16.gmra.mrb[0].mxu0 %v634
        %v673 = vpop.f32.mrb[0].mxu0
        %v674 = vadd.f32 %v514, %v673
        %v675 = vpop.f32.mrb[0].mxu0
        %v676 = vpop.f32.mrb[0].mxu0
        %v677 = vpop.f32.mrb[0].mxu0
        %678 = vdwg.mxu0
        %v679 = vsel %vm566, %v674, -inf
        %680 = vmax.xlane.f32.xlu0 %v679
        %v681 = vpop.xlane.xlu0 %680
        %v682 = vsub.f32 %v674, %v681
        %v683 = vmul.f32 %v682, 1.442695
        %v684 = vpow.pop %v683
        %v685 = vsel %vm566, %v684, 0.0
        %686 = vadd.xlane.f32.xlu0 %v685
        %v687 = vpop.xlane.xlu0 %686
        %v688 = vrcp.pop %v687
        %v689 = vmul.f32 %v684, %v688
        %v690 = vpack.c.bf16 %v689, %v689
        %691 = vrot.lane.b32.xlu0 %v509, 48
        %v692 = vpop.permute.xlu0 %691
        %v694 = vsel %vm566, %v690, 0
        %v697 = vsel %vm584, %v692, 0
        %699 = vmatprep.subr.bf16.mxu0 0
        %700 = vmatpush1.bf16.msra.mxu0 %v697
        %701 = vmatprep.subr.bf16.mxu0 0
        %702 = vmatpush1.bf16.msra.mxu0 0
        %703 = vmatprep.subr.bf16.mxu0 0
        %704 = vmatpush1.bf16.msra.mxu0 0
        %705 = vmatprep.subr.bf16.mxu0 0
        %706 = vmatpush1.bf16.msra.mxu0 0
        %707 = vmatprep.subr.bf16.mxu0 0
        %708 = vmatpush1.bf16.msra.mxu0 0
        %709 = vmatprep.subr.bf16.mxu0 0
        %710 = vmatpush1.bf16.msra.mxu0 0
        %711 = vmatprep.subr.bf16.mxu0 0
        %712 = vmatpush1.bf16.msra.mxu0 0
        %713 = vmatprep.subr.bf16.mxu0 0
        %714 = vmatpush1.bf16.msra.mxu0 0
        %715 = vmatprep.subr.bf16.mxu0 0
        %716 = vmatpush1.bf16.msra.mxu0 0
        %717 = vmatprep.subr.bf16.mxu0 0
        %718 = vmatpush1.bf16.msra.mxu0 0
        %719 = vmatprep.subr.bf16.mxu0 0
        %720 = vmatpush1.bf16.msra.mxu0 0
        %721 = vmatprep.subr.bf16.mxu0 0
        %722 = vmatpush1.bf16.msra.mxu0 0
        %723 = vmatprep.subr.bf16.mxu0 0
        %724 = vmatpush1.bf16.msra.mxu0 0
        %725 = vmatprep.subr.bf16.mxu0 0
        %726 = vmatpush1.bf16.msra.mxu0 0
        %727 = vmatprep.subr.bf16.mxu0 0
        %728 = vmatpush1.bf16.msra.mxu0 0
        %729 = vmatprep.subr.bf16.mxu0 0
        %730 = vmatpush1.bf16.msra.mxu0 0
        %731 = vmatprep.mubr.bf16.mxu0 0
        %732 = vmatmul.mubr.bf16.gmra.mrb[0].mxu0 %v694
        %v733 = vpop.f32.mrb[0].mxu0
        %v734 = vadd.f32 0.0, %v733
        %v735 = vpop.f32.mrb[0].mxu0
        %v736 = vpop.f32.mrb[0].mxu0
        %v737 = vpop.f32.mrb[0].mxu0
        %738 = vdwg.mxu0
        %740 = vrot.lane.b32.xlu0 %v734, 16
        %v741 = vpop.permute.xlu0 %740
        %v743 = vsel %vm519, %v623, %v741
        %v744 = vld [vmem:[#allocation2 + $0x58] sm:$0xf]
        %v745 = vld [vmem:[#allocation2 + $0x5c] sm:$0xf]
        %v746 = vld [vmem:[#allocation2 + $0x60] sm:$0xf]
        %v747 = vld [vmem:[#allocation2 + $0x64] sm:$0xf]
        %v748 = vpack.c.bf16 %v743, %v743
        %v749 = vld [vmem:[%s5 + $0x5] sm:$0x1]
        %v750 = vlaneseq
        %v751 = vshrl.u32 %v750, 7
        %v752 = vsub.s32 0, %v751
        %v753 = vrot.slane %v749, %v752
        %v758 = vunpack.c.l.b16 %v744
        %v759 = vunpack.c.l.b16 %v745
        %v760 = vunpack.c.l.b16 %v746
        %v761 = vunpack.c.l.b16 %v747
        %v762 = vpack.c.b16 %v759, %v758
        %v763 = vpack.c.b16 %v761, %v760
        %v767 = vsel %vm414, %v748, 0
        %769 = vmatprep.subr.bf16.mxu0 0
        %770 = vmatpush1.bf16.msra.mxu0 %v762
        %771 = vmatprep.subr.bf16.mxu0 0
        %772 = vmatpush1.bf16.msra.mxu0 %v763
        %773 = vmatprep.subr.bf16.mxu0 0
        %774 = vmatpush1.bf16.msra.mxu0 0
        %775 = vmatprep.subr.bf16.mxu0 0
        %776 = vmatpush1.bf16.msra.mxu0 0
        %777 = vmatprep.subr.bf16.mxu0 0
        %778 = vmatpush1.bf16.msra.mxu0 0
        %779 = vmatprep.subr.bf16.mxu0 0
        %780 = vmatpush1.bf16.msra.mxu0 0
        %781 = vmatprep.subr.bf16.mxu0 0
        %782 = vmatpush1.bf16.msra.mxu0 0
        %783 = vmatprep.subr.bf16.mxu0 0
        %784 = vmatpush1.bf16.msra.mxu0 0
        %785 = vmatprep.subr.bf16.mxu0 0
        %786 = vmatpush1.bf16.msra.mxu0 0
        %787 = vmatprep.subr.bf16.mxu0 0
        %788 = vmatpush1.bf16.msra.mxu0 0
        %789 = vmatprep.subr.bf16.mxu0 0
        %790 = vmatpush1.bf16.msra.mxu0 0
        %791 = vmatprep.subr.bf16.mxu0 0
        %792 = vmatpush1.bf16.msra.mxu0 0
        %793 = vmatprep.subr.bf16.mxu0 0
        %794 = vmatpush1.bf16.msra.mxu0 0
        %795 = vmatprep.subr.bf16.mxu0 0
        %796 = vmatpush1.bf16.msra.mxu0 0
        %797 = vmatprep.subr.bf16.mxu0 0
        %798 = vmatpush1.bf16.msra.mxu0 0
        %799 = vmatprep.subr.bf16.mxu0 0
        %800 = vmatpush1.bf16.msra.mxu0 0
        %801 = vmatprep.mubr.bf16.mxu0 0
        %802 = vmatmul.mubr.bf16.gmra.mrb[0].mxu0 %v767
        %v803 = vpop.f32.mrb[0].mxu0
        %v804 = vadd.f32 %v753, %v803
        %v805 = vpop.f32.mrb[0].mxu0
        %v806 = vpop.f32.mrb[0].mxu0
        %v807 = vpop.f32.mrb[0].mxu0
        %808 = vdwg.mxu0
        %v809 = vadd.f32 %v441, %v804
        %v810 = vsel %vm414, %v809, 0.0
        %811 = vadd.xlane.f32.xlu0 %v810
        %v812 = vpop.xlane.xlu0 %811
        %v813 = vmul.f32 %v809, %v809
        %v814 = vsel %vm414, %v813, 0.0
        %815 = vadd.xlane.f32.xlu0 %v814
        %v816 = vpop.xlane.xlu0 %815
        %v817 = vmul.f32 %v812, 0.03125
        %v818 = vmul.f32 %v816, 0.03125
        %v819 = vmul.f32 %v817, %v817
        %v820 = vsub.f32 %v818, %v819
        %v821 = vsub.f32 %v809, %v817
        %v822 = vadd.f32 %v820, 1e-12
        %v823 = vrsqrt.pop %v822
        %v824 = vmul.f32 %v821, %v823
        %v825 = vld [vmem:[%s5 + $0x8] sm:$0x1]
        %v826 = vlaneseq
        %v827 = vshrl.u32 %v826, 7
        %v828 = vsub.s32 0, %v827
        %v829 = vrot.slane %v825, %v828
        %v830 = vmul.f32 %v824, %v829
        %v831 = vld [vmem:[%s5 + $0x9] sm:$0x1]
        %v832 = vlaneseq
        %v833 = vshrl.u32 %v832, 7
        %v834 = vsub.s32 0, %v833
        %v835 = vrot.slane %v831, %v834
        %v836 = vadd.f32 %v830, %v835
        %v837 = vld [vmem:[#allocation2 + $0x68] sm:$0xf]
        %v838 = vld [vmem:[#allocation2 + $0x6c] sm:$0xf]
        %v839 = vld [vmem:[#allocation2 + $0x70] sm:$0xf]
        %v840 = vld [vmem:[#allocation2 + $0x74] sm:$0xf]
        %v841 = vpack.c.bf16 %v836, %v836
        %v842 = vld [vmem:[%s5 + $0x6] sm:$0x1]
        %v843 = vlaneseq
        %v844 = vshrl.u32 %v843, 7
        %v845 = vsub.s32 0, %v844
        %v846 = vrot.slane %v842, %v845
        %v851 = vunpack.c.l.b16 %v837
        %v852 = vunpack.c.l.b16 %v838
        %v853 = vunpack.c.l.b16 %v839
        %v854 = vunpack.c.l.b16 %v840
        %v855 = vpack.c.b16 %v852, %v851
        %v856 = vpack.c.b16 %v854, %v853
        %v860 = vsel %vm414, %v841, 0
        %862 = vmatprep.subr.bf16.mxu0 0
        %863 = vmatpush1.bf16.msra.mxu0 %v855
        %864 = vmatprep.subr.bf16.mxu0 0
        %865 = vmatpush1.bf16.msra.mxu0 %v856
        %866 = vmatprep.subr.bf16.mxu0 0
        %867 = vmatpush1.bf16.msra.mxu0 0
        %868 = vmatprep.subr.bf16.mxu0 0
        %869 = vmatpush1.bf16.msra.mxu0 0
        %870 = vmatprep.subr.bf16.mxu0 0
        %871 = vmatpush1.bf16.msra.mxu0 0
        %872 = vmatprep.subr.bf16.mxu0 0
        %873 = vmatpush1.bf16.msra.mxu0 0
        %874 = vmatprep.subr.bf16.mxu0 0
        %875 = vmatpush1.bf16.msra.mxu0 0
        %876 = vmatprep.subr.bf16.mxu0 0
        %877 = vmatpush1.bf16.msra.mxu0 0
        %878 = vmatprep.subr.bf16.mxu0 0
        %879 = vmatpush1.bf16.msra.mxu0 0
        %880 = vmatprep.subr.bf16.mxu0 0
        %881 = vmatpush1.bf16.msra.mxu0 0
        %882 = vmatprep.subr.bf16.mxu0 0
        %883 = vmatpush1.bf16.msra.mxu0 0
        %884 = vmatprep.subr.bf16.mxu0 0
        %885 = vmatpush1.bf16.msra.mxu0 0
        %886 = vmatprep.subr.bf16.mxu0 0
        %887 = vmatpush1.bf16.msra.mxu0 0
        %888 = vmatprep.subr.bf16.mxu0 0
        %889 = vmatpush1.bf16.msra.mxu0 0
        %890 = vmatprep.subr.bf16.mxu0 0
        %891 = vmatpush1.bf16.msra.mxu0 0
        %892 = vmatprep.subr.bf16.mxu0 0
        %893 = vmatpush1.bf16.msra.mxu0 0
        %894 = vmatprep.mubr.bf16.mxu0 0
        %895 = vmatmul.mubr.bf16.gmra.mrb[0].mxu0 %v860
        %v896 = vpop.f32.mrb[0].mxu0
        %v897 = vadd.f32 %v846, %v896
        %v898 = vpop.f32.mrb[0].mxu0
        %v899 = vpop.f32.mrb[0].mxu0
        %v900 = vpop.f32.mrb[0].mxu0
        %901 = vdwg.mxu0
        %v902 = vmul.f32 %v897, 0.5
        %v903 = vmul.f32 %v897, 0.044715
        %v904 = vmul.f32 %v903, %v897
        %v905 = vmul.f32 %v904, %v897
        %v906 = vadd.f32 %v897, %v905
        %v907 = vmul.f32 %v906, 0.7978846
        %v908 = vtanh.pop %v907
        %v909 = vadd.f32 %v908, 1.0
        %v910 = vmul.f32 %v902, %v909
        %v911 = vld [vmem:[#allocation2 + $0x78] sm:$0xf]
        %v912 = vld [vmem:[#allocation2 + $0x7c] sm:$0xf]
        %v913 = vld [vmem:[#allocation2 + $0x80] sm:$0xf]
        %v914 = vld [vmem:[#allocation2 + $0x84] sm:$0xf]
        %v915 = vld [vmem:[#allocation2 + $0x88] sm:$0xf]
        %v916 = vld [vmem:[#allocation2 + $0x8c] sm:$0xf]
        %v917 = vld [vmem:[#allocation2 + $0x90] sm:$0xf]
        %v918 = vld [vmem:[#allocation2 + $0x94] sm:$0xf]
        %v919 = vpack.c.bf16 %v910, %v910
        %v920 = vld [vmem:[%s5 + $0x7] sm:$0x1]
        %v921 = vlaneseq
        %v922 = vshrl.u32 %v921, 7
        %v923 = vsub.s32 0, %v922
        %v924 = vrot.slane %v920, %v923
        %v933 = vunpack.c.l.b16 %v911
        %v934 = vunpack.c.l.b16 %v912
        %v935 = vunpack.c.l.b16 %v913
        %v936 = vunpack.c.l.b16 %v914
        %v937 = vunpack.c.l.b16 %v915
        %v938 = vunpack.c.l.b16 %v916
        %v939 = vunpack.c.l.b16 %v917
        %v940 = vunpack.c.l.b16 %v918
        %v941 = vpack.c.b16 %v934, %v933
        %v942 = vpack.c.b16 %v936, %v935
        %v943 = vpack.c.b16 %v938, %v937
        %v944 = vpack.c.b16 %v940, %v939
        %v950 = vsel %vm370, %v919, 0
        %952 = vmatprep.subr.bf16.mxu0 0
        %953 = vmatpush1.bf16.msra.mxu0 %v941
        %954 = vmatprep.subr.bf16.mxu0 0
        %955 = vmatpush1.bf16.msra.mxu0 %v942
        %956 = vmatprep.subr.bf16.mxu0 0
        %957 = vmatpush1.bf16.msra.mxu0 %v943
        %958 = vmatprep.subr.bf16.mxu0 0
        %959 = vmatpush1.bf16.msra.mxu0 %v944
        %960 = vmatprep.subr.bf16.mxu0 0
        %961 = vmatpush1.bf16.msra.mxu0 0
        %962 = vmatprep.subr.bf16.mxu0 0
        %963 = vmatpush1.bf16.msra.mxu0 0
        %964 = vmatprep.subr.bf16.mxu0 0
        %965 = vmatpush1.bf16.msra.mxu0 0
        %966 = vmatprep.subr.bf16.mxu0 0
        %967 = vmatpush1.bf16.msra.mxu0 0
        %968 = vmatprep.subr.bf16.mxu0 0
        %969 = vmatpush1.bf16.msra.mxu0 0
        %970 = vmatprep.subr.bf16.mxu0 0
        %971 = vmatpush1.bf16.msra.mxu0 0
        %972 = vmatprep.subr.bf16.mxu0 0
        %973 = vmatpush1.bf16.msra.mxu0 0
        %974 = vmatprep.subr.bf16.mxu0 0
        %975 = vmatpush1.bf16.msra.mxu0 0
        %976 = vmatprep.subr.bf16.mxu0 0
        %977 = vmatpush1.bf16.msra.mxu0 0
        %978 = vmatprep.subr.bf16.mxu0 0
        %979 = vmatpush1.bf16.msra.mxu0 0
        %980 = vmatprep.subr.bf16.mxu0 0
        %981 = vmatpush1.bf16.msra.mxu0 0
        %982 = vmatprep.subr.bf16.mxu0 0
        %983 = vmatpush1.bf16.msra.mxu0 0
        %984 = vmatprep.mubr.bf16.mxu0 0
        %985 = vmatmul.mubr.bf16.gmra.mrb[0].mxu0 %v950
        %v986 = vpop.f32.mrb[0].mxu0
        %v987 = vadd.f32 %v924, %v986
        %v988 = vpop.f32.mrb[0].mxu0
        %v989 = vpop.f32.mrb[0].mxu0
        %v990 = vpop.f32.mrb[0].mxu0
        %991 = vdwg.mxu0
        %v992 = vadd.f32 %v836, %v987
        %v993 = vsel %vm414, %v992, 0.0
        %994 = vadd.xlane.f32.xlu0 %v993
        %v995 = vpop.xlane.xlu0 %994
        %v996 = vmul.f32 %v992, %v992
        %v997 = vsel %vm414, %v996, 0.0
        %998 = vadd.xlane.f32.xlu0 %v997
        %v999 = vpop.xlane.xlu0 %998
        %v1000 = vmul.f32 %v995, 0.03125
        %v1001 = vmul.f32 %v999, 0.03125
        %v1002 = vmul.f32 %v1000, %v1000
        %v1003 = vsub.f32 %v1001, %v1002
        %v1004 = vsub.f32 %v992, %v1000
        %v1005 = vadd.f32 %v1003, 1e-12
        %v1006 = vrsqrt.pop %v1005
        %v1007 = vmul.f32 %v1004, %v1006
        %v1008 = vld [vmem:[%s5 + $0xa] sm:$0x1]
        %v1009 = vlaneseq
        %v1010 = vshrl.u32 %v1009, 7
        %v1011 = vsub.s32 0, %v1010
        %v1012 = vrot.slane %v1008, %v1011
        %v1013 = vmul.f32 %v1007, %v1012
        %v1014 = vld [vmem:[%s5 + $0xb] sm:$0x1]
        %v1015 = vlaneseq
        %v1016 = vshrl.u32 %v1015, 7
        %v1017 = vsub.s32 0, %v1016
        %v1018 = vrot.slane %v1014, %v1017
        %v1019 = vadd.f32 %v1013, %v1018
        %v1020 = vld [vmem:[#allocation2 + $0x98] sm:$0xf]
        %v1021 = vld [vmem:[#allocation2 + $0x9c] sm:$0xf]
        %v1022 = vld [vmem:[#allocation2 + $0xa0] sm:$0xf]
        %v1023 = vld [vmem:[#allocation2 + $0xa4] sm:$0xf]
        %v1024 = vpack.c.bf16 %v1019, %v1019
        %v1025 = vld [vmem:[%s5 + $0xc] sm:$0x1]
        %v1026 = vlaneseq
        %v1027 = vshrl.u32 %v1026, 7
        %v1028 = vsub.s32 0, %v1027
        %v1029 = vrot.slane %v1025, %v1028
        %v1034 = vunpack.c.l.b16 %v1020
        %v1035 = vunpack.c.l.b16 %v1021
        %v1036 = vunpack.c.l.b16 %v1022
        %v1037 = vunpack.c.l.b16 %v1023
        %v1038 = vpack.c.b16 %v1035, %v1034
        %v1039 = vpack.c.b16 %v1037, %v1036
        %v1043 = vsel %vm414, %v1024, 0
        %1045 = vmatprep.subr.bf16.mxu0 0
        %1046 = vmatpush1.bf16.msra.mxu0 %v1038
        %1047 = vmatprep.subr.bf16.mxu0 0
        %1048 = vmatpush1.bf16.msra.mxu0 %v1039
        %1049 = vmatprep.subr.bf16.mxu0 0
        %1050 = vmatpush1.bf16.msra.mxu0 0
        %1051 = vmatprep.subr.bf16.mxu0 0
        %1052 = vmatpush1.bf16.msra.mxu0 0
        %1053 = vmatprep.subr.bf16.mxu0 0
        %1054 = vmatpush1.bf16.msra.mxu0 0
        %1055 = vmatprep.subr.bf16.mxu0 0
        %1056 = vmatpush1.bf16.msra.mxu0 0
        %1057 = vmatprep.subr.bf16.mxu0 0
        %1058 = vmatpush1.bf16.msra.mxu0 0
        %1059 = vmatprep.subr.bf16.mxu0 0
        %1060 = vmatpush1.bf16.msra.mxu0 0
        %1061 = vmatprep.subr.bf16.mxu0 0
        %1062 = vmatpush1.bf16.msra.mxu0 0
        %1063 = vmatprep.subr.bf16.mxu0 0
        %1064 = vmatpush1.bf16.msra.mxu0 0
        %1065 = vmatprep.subr.bf16.mxu0 0
        %1066 = vmatpush1.bf16.msra.mxu0 0
        %1067 = vmatprep.subr.bf16.mxu0 0
        %1068 = vmatpush1.bf16.msra.mxu0 0
        %1069 = vmatprep.subr.bf16.mxu0 0
        %1070 = vmatpush1.bf16.msra.mxu0 0
        %1071 = vmatprep.subr.bf16.mxu0 0
        %1072 = vmatpush1.bf16.msra.mxu0 0
        %1073 = vmatprep.subr.bf16.mxu0 0
        %1074 = vmatpush1.bf16.msra.mxu0 0
        %1075 = vmatprep.subr.bf16.mxu0 0
        %1076 = vmatpush1.bf16.msra.mxu0 0
        %1077 = vmatprep.mubr.bf16.mxu0 0
        %1078 = vmatmul.mubr.bf16.gmra.mrb[0].mxu0 %v1043
        %v1079 = vpop.f32.mrb[0].mxu0
        %v1080 = vadd.f32 %v1029, %v1079
        %v1081 = vpop.f32.mrb[0].mxu0
        %v1082 = vpop.f32.mrb[0].mxu0
        %v1083 = vpop.f32.mrb[0].mxu0
        %1084 = vdwg.mxu0
        %v1085 = vmul.f32 %v1080, 0.25
        %v1086 = vpack.c.bf16 %v1085, %v1085
        %v1087 = vpack.c.bf16 %v1080, %v1080
        %1089 = vrot.lane.b32.xlu0 %v1087, 96
        %v1090 = vpop.permute.xlu0 %1089
        %v1092 = vsel %vm519, %v1086, 0
        %v1095 = vsel %vm519, %v1090, 0
        %1097 = vmatprep.subr.bf16.mxu0 0
        %1098 = vmatpush1.bf16.xpose.msra.mxu0 %v1095
        %1099 = vmatprep.subr.bf16.mxu0 0
        %1100 = vmatpush1.bf16.xpose.msra.mxu0 0
        %1101 = vmatprep.subr.bf16.mxu0 0
        %1102 = vmatpush1.bf16.xpose.msra.mxu0 0
        %1103 = vmatprep.subr.bf16.mxu0 0
        %1104 = vmatpush1.bf16.xpose.msra.mxu0 0
        %1105 = vmatprep.subr.bf16.mxu0 0
        %1106 = vmatpush1.bf16.xpose.msra.mxu0 0
        %1107 = vmatprep.subr.bf16.mxu0 0
        %1108 = vmatpush1.bf16.xpose.msra.mxu0 0
        %1109 = vmatprep.subr.bf16.mxu0 0
        %1110 = vmatpush1.bf16.xpose.msra.mxu0 0
        %1111 = vmatprep.subr.bf16.mxu0 0
        %1112 = vmatpush1.bf16.xpose.msra.mxu0 0
        %1113 = vmatprep.subr.bf16.mxu0 0
        %1114 = vmatpush1.bf16.xpose.msra.mxu0 0
        %1115 = vmatprep.subr.bf16.mxu0 0
        %1116 = vmatpush1.bf16.xpose.msra.mxu0 0
        %1117 = vmatprep.subr.bf16.mxu0 0
        %1118 = vmatpush1.bf16.xpose.msra.mxu0 0
        %1119 = vmatprep.subr.bf16.mxu0 0
        %1120 = vmatpush1.bf16.xpose.msra.mxu0 0
        %1121 = vmatprep.subr.bf16.mxu0 0
        %1122 = vmatpush1.bf16.xpose.msra.mxu0 0
        %1123 = vmatprep.subr.bf16.mxu0 0
        %1124 = vmatpush1.bf16.xpose.msra.mxu0 0
        %1125 = vmatprep.subr.bf16.mxu0 0
        %1126 = vmatpush1.bf16.xpose.msra.mxu0 0
        %1127 = vmatprep.subr.bf16.mxu0 0
        %1128 = vmatpush1.bf16.xpose.msra.mxu0 0
        %1129 = vmatprep.mubr.bf16.mxu0 0
        %1130 = vmatmul.mubr.bf16.gmra.mrb[0].mxu0 %v1092
        %v1131 = vpop.f32.mrb[0].mxu0
        %v1132 = vadd.f32 %v514, %v1131
        %v1133 = vpop.f32.mrb[0].mxu0
        %v1134 = vpop.f32.mrb[0].mxu0
        %v1135 = vpop.f32.mrb[0].mxu0
        %1136 = vdwg.mxu0
        %v1137 = vsel %vm566, %v1132, -inf
        %1138 = vmax.xlane.f32.xlu0 %v1137
        %v1139 = vpop.xlane.xlu0 %1138
        %v1140 = vsub.f32 %v1132, %v1139
        %v1141 = vmul.f32 %v1140, 1.442695
        %v1142 = vpow.pop %v1141
        %v1143 = vsel %vm566, %v1142, 0.0
        %1144 = vadd.xlane.f32.xlu0 %v1143
        %v1145 = vpop.xlane.xlu0 %1144
        %v1146 = vrcp.pop %v1145
        %v1147 = vmul.f32 %v1142, %v1146
        %v1148 = vpack.c.bf16 %v1147, %v1147
        %1149 = vrot.lane.b32.xlu0 %v1087, 64
        %v1150 = vpop.permute.xlu0 %1149
        %v1152 = vsel %vm566, %v1148, 0
        %v1155 = vsel %vm584, %v1150, 0
        %1157 = vmatprep.subr.bf16.mxu0 0
        %1158 = vmatpush1.bf16.msra.mxu0 %v1155
        %1159 = vmatprep.subr.bf16.mxu0 0
        %1160 = vmatpush1.bf16.msra.mxu0 0
        %1161 = vmatprep.subr.bf16.mxu0 0
        %1162 = vmatpush1.bf16.msra.mxu0 0
        %1163 = vmatprep.subr.bf16.mxu0 0
        %1164 = vmatpush1.bf16.msra.mxu0 0
        %1165 = vmatprep.subr.bf16.mxu0 0
        %1166 = vmatpush1.bf16.msra.mxu0 0
        %1167 = vmatprep.subr.bf16.mxu0 0
        %1168 = vmatpush1.bf16.msra.mxu0 0
        %1169 = vmatprep.subr.bf16.mxu0 0
        %1170 = vmatpush1.bf16.msra.mxu0 0
        %1171 = vmatprep.subr.bf16.mxu0 0
        %1172 = vmatpush1.bf16.msra.mxu0 0
        %1173 = vmatprep.subr.bf16.mxu0 0
        %1174 = vmatpush1.bf16.msra.mxu0 0
        %1175 = vmatprep.subr.bf16.mxu0 0
        %1176 = vmatpush1.bf16.msra.mxu0 0
        %1177 = vmatprep.subr.bf16.mxu0 0
        %1178 = vmatpush1.bf16.msra.mxu0 0
        %1179 = vmatprep.subr.bf16.mxu0 0
        %1180 = vmatpush1.bf16.msra.mxu0 0
        %1181 = vmatprep.subr.bf16.mxu0 0
        %1182 = vmatpush1.bf16.msra.mxu0 0
        %1183 = vmatprep.subr.bf16.mxu0 0
        %1184 = vmatpush1.bf16.msra.mxu0 0
        %1185 = vmatprep.subr.bf16.mxu0 0
        %1186 = vmatpush1.bf16.msra.mxu0 0
        %1187 = vmatprep.subr.bf16.mxu0 0
        %1188 = vmatpush1.bf16.msra.mxu0 0
        %1189 = vmatprep.mubr.bf16.mxu0 0
        %1190 = vmatmul.mubr.bf16.gmra.mrb[0].mxu0 %v1152
        %v1191 = vpop.f32.mrb[0].mxu0
        %v1192 = vadd.f32 0.0, %v1191
        %v1193 = vpop.f32.mrb[0].mxu0
        %v1194 = vpop.f32.mrb[0].mxu0
        %v1195 = vpop.f32.mrb[0].mxu0
        %1196 = vdwg.mxu0
        %1198 = vrot.lane.b32.xlu0 %v1086, 112
        %v1199 = vpop.permute.xlu0 %1198
        %1200 = vrot.lane.b32.xlu0 %v1087, 80
        %v1201 = vpop.permute.xlu0 %1200
        %v1203 = vsel %vm519, %v1199, 0
        %v1206 = vsel %vm519, %v1201, 0
        %1208 = vmatprep.subr.bf16.mxu0 0
        %1209 = vmatpush1.bf16.xpose.msra.mxu0 %v1206
        %1210 = vmatprep.subr.bf16.mxu0 0
        %1211 = vmatpush1.bf16.xpose.msra.mxu0 0
        %1212 = vmatprep.subr.bf16.mxu0 0
        %1213 = vmatpush1.bf16.xpose.msra.mxu0 0
        %1214 = vmatprep.subr.bf16.mxu0 0
        %1215 = vmatpush1.bf16.xpose.msra.mxu0 0
        %1216 = vmatprep.subr.bf16.mxu0 0
        %1217 = vmatpush1.bf16.xpose.msra.mxu0 0
        %1218 = vmatprep.subr.bf16.mxu0 0
        %1219 = vmatpush1.bf16.xpose.msra.mxu0 0
        %1220 = vmatprep.subr.bf16.mxu0 0
        %1221 = vmatpush1.bf16.xpose.msra.mxu0 0
        %1222 = vmatprep.subr.bf16.mxu0 0
        %1223 = vmatpush1.bf16.xpose.msra.mxu0 0
        %1224 = vmatprep.subr.bf16.mxu0 0
        %1225 = vmatpush1.bf16.xpose.msra.mxu0 0
        %1226 = vmatprep.subr.bf16.mxu0 0
        %1227 = vmatpush1.bf16.xpose.msra.mxu0 0
        %1228 = vmatprep.subr.bf16.mxu0 0
        %1229 = vmatpush1.bf16.xpose.msra.mxu0 0
        %1230 = vmatprep.subr.bf16.mxu0 0
        %1231 = vmatpush1.bf16.xpose.msra.mxu0 0
        %1232 = vmatprep.subr.bf16.mxu0 0
        %1233 = vmatpush1.bf16.xpose.msra.mxu0 0
        %1234 = vmatprep.subr.bf16.mxu0 0
        %1235 = vmatpush1.bf16.xpose.msra.mxu0 0
        %1236 = vmatprep.subr.bf16.mxu0 0
        %1237 = vmatpush1.bf16.xpose.msra.mxu0 0
        %1238 = vmatprep.subr.bf16.mxu0 0
        %1239 = vmatpush1.bf16.xpose.msra.mxu0 0
        %1240 = vmatprep.mubr.bf16.mxu0 0
        %1241 = vmatmul.mubr.bf16.gmra.mrb[0].mxu0 %v1203
        %v1242 = vpop.f32.mrb[0].mxu0
        %v1243 = vadd.f32 %v514, %v1242
        %v1244 = vpop.f32.mrb[0].mxu0
        %v1245 = vpop.f32.mrb[0].mxu0
        %v1246 = vpop.f32.mrb[0].mxu0
        %1247 = vdwg.mxu0
        %v1248 = vsel %vm566, %v1243, -inf
        %1249 = vmax.xlane.f32.xlu0 %v1248
        %v1250 = vpop.xlane.xlu0 %1249
        %v1251 = vsub.f32 %v1243, %v1250
        %v1252 = vmul.f32 %v1251, 1.442695
        %v1253 = vpow.pop %v1252
        %v1254 = vsel %vm566, %v1253, 0.0
        %1255 = vadd.xlane.f32.xlu0 %v1254
        %v1256 = vpop.xlane.xlu0 %1255
        %v1257 = vrcp.pop %v1256
        %v1258 = vmul.f32 %v1253, %v1257
        %v1259 = vpack.c.bf16 %v1258, %v1258
        %1260 = vrot.lane.b32.xlu0 %v1087, 48
        %v1261 = vpop.permute.xlu0 %1260
        %v1263 = vsel %vm566, %v1259, 0
        %v1266 = vsel %vm584, %v1261, 0
        %1268 = vmatprep.subr.bf16.mxu0 0
        %1269 = vmatpush1.bf16.msra.mxu0 %v1266
        %1270 = vmatprep.subr.bf16.mxu0 0
        %1271 = vmatpush1.bf16.msra.mxu0 0
        %1272 = vmatprep.subr.bf16.mxu0 0
        %1273 = vmatpush1.bf16.msra.mxu0 0
        %1274 = vmatprep.subr.bf16.mxu0 0
        %1275 = vmatpush1.bf16.msra.mxu0 0
        %1276 = vmatprep.subr.bf16.mxu0 0
        %1277 = vmatpush1.bf16.msra.mxu0 0
        %1278 = vmatprep.subr.bf16.mxu0 0
        %1279 = vmatpush1.bf16.msra.mxu0 0
        %1280 = vmatprep.subr.bf16.mxu0 0
        %1281 = vmatpush1.bf16.msra.mxu0 0
        %1282 = vmatprep.subr.bf16.mxu0 0
        %1283 = vmatpush1.bf16.msra.mxu0 0
        %1284 = vmatprep.subr.bf16.mxu0 0
        %1285 = vmatpush1.bf16.msra.mxu0 0
        %1286 = vmatprep.subr.bf16.mxu0 0
        %1287 = vmatpush1.bf16.msra.mxu0 0
        %1288 = vmatprep.subr.bf16.mxu0 0
        %1289 = vmatpush1.bf16.msra.mxu0 0
        %1290 = vmatprep.subr.bf16.mxu0 0
        %1291 = vmatpush1.bf16.msra.mxu0 0
        %1292 = vmatprep.subr.bf16.mxu0 0
        %1293 = vmatpush1.bf16.msra.mxu0 0
        %1294 = vmatprep.subr.bf16.mxu0 0
        %1295 = vmatpush1.bf16.msra.mxu0 0
        %1296 = vmatprep.subr.bf16.mxu0 0
        %1297 = vmatpush1.bf16.msra.mxu0 0
        %1298 = vmatprep.subr.bf16.mxu0 0
        %1299 = vmatpush1.bf16.msra.mxu0 0
        %1300 = vmatprep.mubr.bf16.mxu0 0
        %1301 = vmatmul.mubr.bf16.gmra.mrb[0].mxu0 %v1263
        %v1302 = vpop.f32.mrb[0].mxu0
        %v1303 = vadd.f32 0.0, %v1302
        %v1304 = vpop.f32.mrb[0].mxu0
        %v1305 = vpop.f32.mrb[0].mxu0
        %v1306 = vpop.f32.mrb[0].mxu0
        %1307 = vdwg.mxu0
        %1309 = vrot.lane.b32.xlu0 %v1303, 16
        %v1310 = vpop.permute.xlu0 %1309
        %v1312 = vsel %vm519, %v1192, %v1310
        %v1313 = vld [vmem:[#allocation2 + $0xa8] sm:$0xf]
        %v1314 = vld [vmem:[#allocation2 + $0xac] sm:$0xf]
        %v1315 = vld [vmem:[#allocation2 + $0xb0] sm:$0xf]
        %v1316 = vld [vmem:[#allocation2 + $0xb4] sm:$0xf]
        %v1317 = vpack.c.bf16 %v1312, %v1312
        %v1318 = vld [vmem:[%s5 + $0xd] sm:$0x1]
        %v1319 = vlaneseq
        %v1320 = vshrl.u32 %v1319, 7
        %v1321 = vsub.s32 0, %v1320
        %v1322 = vrot.slane %v1318, %v1321
        %v1327 = vunpack.c.l.b16 %v1313
        %v1328 = vunpack.c.l.b16 %v1314
        %v1329 = vunpack.c.l.b16 %v1315
        %v1330 = vunpack.c.l.b16 %v1316
        %v1331 = vpack.c.b16 %v1328, %v1327
        %v1332 = vpack.c.b16 %v1330, %v1329
        %v1336 = vsel %vm414, %v1317, 0
        %1338 = vmatprep.subr.bf16.mxu0 0
        %1339 = vmatpush1.bf16.msra.mxu0 %v1331
        %1340 = vmatprep.subr.bf16.mxu0 0
        %1341 = vmatpush1.bf16.msra.mxu0 %v1332
        %1342 = vmatprep.subr.bf16.mxu0 0
        %1343 = vmatpush1.bf16.msra.mxu0 0
        %1344 = vmatprep.subr.bf16.mxu0 0
        %1345 = vmatpush1.bf16.msra.mxu0 0
        %1346 = vmatprep.subr.bf16.mxu0 0
        %1347 = vmatpush1.bf16.msra.mxu0 0
        %1348 = vmatprep.subr.bf16.mxu0 0
        %1349 = vmatpush1.bf16.msra.mxu0 0
        %1350 = vmatprep.subr.bf16.mxu0 0
        %1351 = vmatpush1.bf16.msra.mxu0 0
        %1352 = vmatprep.subr.bf16.mxu0 0
        %1353 = vmatpush1.bf16.msra.mxu0 0
        %1354 = vmatprep.subr.bf16.mxu0 0
        %1355 = vmatpush1.bf16.msra.mxu0 0
        %1356 = vmatprep.subr.bf16.mxu0 0
        %1357 = vmatpush1.bf16.msra.mxu0 0
        %1358 = vmatprep.subr.bf16.mxu0 0
        %1359 = vmatpush1.bf16.msra.mxu0 0
        %1360 = vmatprep.subr.bf16.mxu0 0
        %1361 = vmatpush1.bf16.msra.mxu0 0
        %1362 = vmatprep.subr.bf16.mxu0 0
        %1363 = vmatpush1.bf16.msra.mxu0 0
        %1364 = vmatprep.subr.bf16.mxu0 0
        %1365 = vmatpush1.bf16.msra.mxu0 0
        %1366 = vmatprep.subr.bf16.mxu0 0
        %1367 = vmatpush1.bf16.msra.mxu0 0
        %1368 = vmatprep.subr.bf16.mxu0 0
        %1369 = vmatpush1.bf16.msra.mxu0 0
        %1370 = vmatprep.mubr.bf16.mxu0 0
        %1371 = vmatmul.mubr.bf16.gmra.mrb[0].mxu0 %v1336
        %v1372 = vpop.f32.mrb[0].mxu0
        %v1373 = vadd.f32 %v1322, %v1372
        %v1374 = vpop.f32.mrb[0].mxu0
        %v1375 = vpop.f32.mrb[0].mxu0
        %v1376 = vpop.f32.mrb[0].mxu0
        %1377 = vdwg.mxu0
        %v1378 = vadd.f32 %v1019, %v1373
        %v1379 = vsel %vm414, %v1378, 0.0
        %1380 = vadd.xlane.f32.xlu0 %v1379
        %v1381 = vpop.xlane.xlu0 %1380
        %v1382 = vmul.f32 %v1378, %v1378
        %v1383 = vsel %vm414, %v1382, 0.0
        %1384 = vadd.xlane.f32.xlu0 %v1383
        %v1385 = vpop.xlane.xlu0 %1384
        %v1386 = vmul.f32 %v1381, 0.03125
        %v1387 = vmul.f32 %v1385, 0.03125
        %v1388 = vmul.f32 %v1386, %v1386
        %v1389 = vsub.f32 %v1387, %v1388
        %v1390 = vsub.f32 %v1378, %v1386
        %v1391 = vadd.f32 %v1389, 1e-12
        %v1392 = vrsqrt.pop %v1391
        %v1393 = vmul.f32 %v1390, %v1392
        %v1394 = vld [vmem:[%s5 + $0x10] sm:$0x1]
        %v1395 = vlaneseq
        %v1396 = vshrl.u32 %v1395, 7
        %v1397 = vsub.s32 0, %v1396
        %v1398 = vrot.slane %v1394, %v1397
        %v1399 = vmul.f32 %v1393, %v1398
        %v1400 = vld [vmem:[%s5 + $0x11] sm:$0x1]
        %v1401 = vlaneseq
        %v1402 = vshrl.u32 %v1401, 7
        %v1403 = vsub.s32 0, %v1402
        %v1404 = vrot.slane %v1400, %v1403
        %v1405 = vadd.f32 %v1399, %v1404
        %v1406 = vld [vmem:[#allocation2 + $0xb8] sm:$0xf]
        %v1407 = vld [vmem:[#allocation2 + $0xbc] sm:$0xf]
        %v1408 = vld [vmem:[#allocation2 + $0xc0] sm:$0xf]
        %v1409 = vld [vmem:[#allocation2 + $0xc4] sm:$0xf]
        %v1410 = vpack.c.bf16 %v1405, %v1405
        %v1411 = vld [vmem:[%s5 + $0xe] sm:$0x1]
        %v1412 = vlaneseq
        %v1413 = vshrl.u32 %v1412, 7
        %v1414 = vsub.s32 0, %v1413
        %v1415 = vrot.slane %v1411, %v1414
        %v1420 = vunpack.c.l.b16 %v1406
        %v1421 = vunpack.c.l.b16 %v1407
        %v1422 = vunpack.c.l.b16 %v1408
        %v1423 = vunpack.c.l.b16 %v1409
        %v1424 = vpack.c.b16 %v1421, %v1420
        %v1425 = vpack.c.b16 %v1423, %v1422
        %v1429 = vsel %vm414, %v1410, 0
        %1431 = vmatprep.subr.bf16.mxu0 0
        %1432 = vmatpush1.bf16.msra.mxu0 %v1424
        %1433 = vmatprep.subr.bf16.mxu0 0
        %1434 = vmatpush1.bf16.msra.mxu0 %v1425
        %1435 = vmatprep.subr.bf16.mxu0 0
        %1436 = vmatpush1.bf16.msra.mxu0 0
        %1437 = vmatprep.subr.bf16.mxu0 0
        %1438 = vmatpush1.bf16.msra.mxu0 0
        %1439 = vmatprep.subr.bf16.mxu0 0
        %1440 = vmatpush1.bf16.msra.mxu0 0
        %1441 = vmatprep.subr.bf16.mxu0 0
        %1442 = vmatpush1.bf16.msra.mxu0 0
        %1443 = vmatprep.subr.bf16.mxu0 0
        %1444 = vmatpush1.bf16.msra.mxu0 0
        %1445 = vmatprep.subr.bf16.mxu0 0
        %1446 = vmatpush1.bf16.msra.mxu0 0
        %1447 = vmatprep.subr.bf16.mxu0 0
        %1448 = vmatpush1.bf16.msra.mxu0 0
        %1449 = vmatprep.subr.bf16.mxu0 0
        %1450 = vmatpush1.bf16.msra.mxu0 0
        %1451 = vmatprep.subr.bf16.mxu0 0
        %1452 = vmatpush1.bf16.msra.mxu0 0
        %1453 = vmatprep.subr.bf16.mxu0 0
        %1454 = vmatpush1.bf16.msra.mxu0 0
        %1455 = vmatprep.subr.bf16.mxu0 0
        %1456 = vmatpush1.bf16.msra.mxu0 0
        %1457 = vmatprep.subr.bf16.mxu0 0
        %1458 = vmatpush1.bf16.msra.mxu0 0
        %1459 = vmatprep.subr.bf16.mxu0 0
        %1460 = vmatpush1.bf16.msra.mxu0 0
        %1461 = vmatprep.subr.bf16.mxu0 0
        %1462 = vmatpush1.bf16.msra.mxu0 0
        %1463 = vmatprep.mubr.bf16.mxu0 0
        %1464 = vmatmul.mubr.bf16.gmra.mrb[0].mxu0 %v1429
        %v1465 = vpop.f32.mrb[0].mxu0
        %v1466 = vadd.f32 %v1415, %v1465
        %v1467 = vpop.f32.mrb[0].mxu0
        %v1468 = vpop.f32.mrb[0].mxu0
        %v1469 = vpop.f32.mrb[0].mxu0
        %1470 = vdwg.mxu0
        %v1471 = vmul.f32 %v1466, 0.5
        %v1472 = vmul.f32 %v1466, 0.044715
        %v1473 = vmul.f32 %v1472, %v1466
        %v1474 = vmul.f32 %v1473, %v1466
        %v1475 = vadd.f32 %v1466, %v1474
        %v1476 = vmul.f32 %v1475, 0.7978846
        %v1477 = vtanh.pop %v1476
        %v1478 = vadd.f32 %v1477, 1.0
        %v1479 = vmul.f32 %v1471, %v1478
        %v1480 = vld [vmem:[#allocation2 + $0xc8] sm:$0xf]
        %v1481 = vld [vmem:[#allocation2 + $0xcc] sm:$0xf]
        %v1482 = vld [vmem:[#allocation2 + $0xd0] sm:$0xf]
        %v1483 = vld [vmem:[#allocation2 + $0xd4] sm:$0xf]
        %v1484 = vld [vmem:[#allocation2 + $0xd8] sm:$0xf]
        %v1485 = vld [vmem:[#allocation2 + $0xdc] sm:$0xf]
        %v1486 = vld [vmem:[#allocation2 + $0xe0] sm:$0xf]
        %v1487 = vld [vmem:[#allocation2 + $0xe4] sm:$0xf]
        %v1488 = vpack.c.bf16 %v1479, %v1479
        %v1489 = vld [vmem:[%s5 + $0xf] sm:$0x1]
        %v1490 = vlaneseq
        %v1491 = vshrl.u32 %v1490, 7
        %v1492 = vsub.s32 0, %v1491
        %v1493 = vrot.slane %v1489, %v1492
        %v1502 = vunpack.c.l.b16 %v1480
        %v1503 = vunpack.c.l.b16 %v1481
        %v1504 = vunpack.c.l.b16 %v1482
        %v1505 = vunpack.c.l.b16 %v1483
        %v1506 = vunpack.c.l.b16 %v1484
        %v1507 = vunpack.c.l.b16 %v1485
        %v1508 = vunpack.c.l.b16 %v1486
        %v1509 = vunpack.c.l.b16 %v1487
        %v1510 = vpack.c.b16 %v1503, %v1502
        %v1511 = vpack.c.b16 %v1505, %v1504
        %v1512 = vpack.c.b16 %v1507, %v1506
        %v1513 = vpack.c.b16 %v1509, %v1508
        %v1519 = vsel %vm370, %v1488, 0
        %1521 = vmatprep.subr.bf16.mxu0 0
        %1522 = vmatpush1.bf16.msra.mxu0 %v1510
        %1523 = vmatprep.subr.bf16.mxu0 0
        %1524 = vmatpush1.bf16.msra.mxu0 %v1511
        %1525 = vmatprep.subr.bf16.mxu0 0
        %1526 = vmatpush1.bf16.msra.mxu0 %v1512
        %1527 = vmatprep.subr.bf16.mxu0 0
        %1528 = vmatpush1.bf16.msra.mxu0 %v1513
        %1529 = vmatprep.subr.bf16.mxu0 0
        %1530 = vmatpush1.bf16.msra.mxu0 0
        %1531 = vmatprep.subr.bf16.mxu0 0
        %1532 = vmatpush1.bf16.msra.mxu0 0
        %1533 = vmatprep.subr.bf16.mxu0 0
        %1534 = vmatpush1.bf16.msra.mxu0 0
        %1535 = vmatprep.subr.bf16.mxu0 0
        %1536 = vmatpush1.bf16.msra.mxu0 0
        %1537 = vmatprep.subr.bf16.mxu0 0
        %1538 = vmatpush1.bf16.msra.mxu0 0
        %1539 = vmatprep.subr.bf16.mxu0 0
        %1540 = vmatpush1.bf16.msra.mxu0 0
        %1541 = vmatprep.subr.bf16.mxu0 0
        %1542 = vmatpush1.bf16.msra.mxu0 0
        %1543 = vmatprep.subr.bf16.mxu0 0
        %1544 = vmatpush1.bf16.msra.mxu0 0
        %1545 = vmatprep.subr.bf16.mxu0 0
        %1546 = vmatpush1.bf16.msra.mxu0 0
        %1547 = vmatprep.subr.bf16.mxu0 0
        %1548 = vmatpush1.bf16.msra.mxu0 0
        %1549 = vmatprep.subr.bf16.mxu0 0
        %1550 = vmatpush1.bf16.msra.mxu0 0
        %1551 = vmatprep.subr.bf16.mxu0 0
        %1552 = vmatpush1.bf16.msra.mxu0 0
        %1553 = vmatprep.mubr.bf16.mxu0 0
        %1554 = vmatmul.mubr.bf16.gmra.mrb[0].mxu0 %v1519
        %v1555 = vpop.f32.mrb[0].mxu0
        %v1556 = vadd.f32 %v1493, %v1555
        %v1557 = vpop.f32.mrb[0].mxu0
        %v1558 = vpop.f32.mrb[0].mxu0
        %v1559 = vpop.f32.mrb[0].mxu0
        %1560 = vdwg.mxu0
        %v1561 = vadd.f32 %v1405, %v1556
        %v1562 = vsel %vm414, %v1561, 0.0
        %1563 = vadd.xlane.f32.xlu0 %v1562
        %v1564 = vpop.xlane.xlu0 %1563
        %v1565 = vmul.f32 %v1561, %v1561
        %v1566 = vsel %vm414, %v1565, 0.0
        %1567 = vadd.xlane.f32.xlu0 %v1566
        %v1568 = vpop.xlane.xlu0 %1567
        %v1569 = vmul.f32 %v1564, 0.03125
        %v1570 = vmul.f32 %v1568, 0.03125
        %v1571 = vmul.f32 %v1569, %v1569
        %v1572 = vsub.f32 %v1570, %v1571
        %v1573 = vsub.f32 %v1561, %v1569
        %v1574 = vadd.f32 %v1572, 1e-12
        %v1575 = vrsqrt.pop %v1574
        %v1576 = vmul.f32 %v1573, %v1575
        %v1577 = vld [vmem:[%s5 + $0x12] sm:$0x1]
        %v1578 = vlaneseq
        %v1579 = vshrl.u32 %v1578, 7
        %v1580 = vsub.s32 0, %v1579
        %v1581 = vrot.slane %v1577, %v1580
        %v1582 = vmul.f32 %v1576, %v1581
        %v1583 = vld [vmem:[%s5 + $0x13] sm:$0x1]
        %v1584 = vlaneseq
        %v1585 = vshrl.u32 %v1584, 7
        %v1586 = vsub.s32 0, %v1585
        %v1587 = vrot.slane %v1583, %v1586
        %v1588 = vadd.f32 %v1582, %v1587
        %v1589 = vld [vmem:[%s299] sm:$0xff]
        %1590 = vset.pattern.permute.xlu0 0
        %1591 = vperm.xlu0 %1590, %v1589
        %v1592 = vpop.permute.xlu0 %1591
        %vm1593 = vcmp.eq.s32.totalorder %v1592, %v315
        %v1594 = vld [vmem:[#allocation2 + $0x24] sm:$0xf]
        %v1595 = vld [vmem:[#allocation2 + $0x28] sm:$0xf]
        %v1596 = vld [vmem:[#allocation2 + $0x2c] sm:$0xf]
        %v1597 = vld [vmem:[#allocation2 + $0x30] sm:$0xf]
        %v1598 = vld [vmem:[#allocation2 + $0x34] sm:$0xf]
        %v1599 = vld [vmem:[#allocation2 + $0x38] sm:$0xf]
        %v1600 = vld [vmem:[#allocation2 + $0x3c] sm:$0xf]
        %v1601 = vld [vmem:[#allocation2 + $0x40] sm:$0xf]
        %v1602 = vsel %vm1593, 1, 0
        %v1603 = vcvt.s32.f32 %v1602
        %v1604 = vpack.c.bf16 %v1603, %v1603
        %v1605 = vld [vmem:[#allocation2 + $0x44] sm:$0xf]
        %v1606 = vunpack.c.l.bf16 %v1605
        %v1615 = vunpack.c.l.b16 %v1594
        %v1616 = vunpack.c.l.b16 %v1595
        %v1617 = vunpack.c.l.b16 %v1596
        %v1618 = vunpack.c.l.b16 %v1597
        %v1619 = vunpack.c.l.b16 %v1598
        %v1620 = vunpack.c.l.b16 %v1599
        %v1621 = vunpack.c.l.b16 %v1600
        %v1622 = vunpack.c.l.b16 %v1601
        %v1623 = vpack.c.b16 %v1616, %v1615
        %v1624 = vpack.c.b16 %v1618, %v1617
        %v1625 = vpack.c.b16 %v1620, %v1619
        %v1626 = vpack.c.b16 %v1622, %v1621
        %v1632 = vsel %vm370, %v1604, 0
        %1634 = vmatprep.subr.bf16.mxu0 0
        %1635 = vmatpush1.bf16.msra.mxu0 %v1623
        %1636 = vmatprep.subr.bf16.mxu0 0
        %1637 = vmatpush1.bf16.msra.mxu0 %v1624
        %1638 = vmatprep.subr.bf16.mxu0 0
        %1639 = vmatpush1.bf16.msra.mxu0 %v1625
        %1640 = vmatprep.subr.bf16.mxu0 0
        %1641 = vmatpush1.bf16.msra.mxu0 %v1626
        %1642 = vmatprep.subr.bf16.mxu0 0
        %1643 = vmatpush1.bf16.msra.mxu0 0
        %1644 = vmatprep.subr.bf16.mxu0 0
        %1645 = vmatpush1.bf16.msra.mxu0 0
        %1646 = vmatprep.subr.bf16.mxu0 0
        %1647 = vmatpush1.bf16.msra.mxu0 0
        %1648 = vmatprep.subr.bf16.mxu0 0
        %1649 = vmatpush1.bf16.msra.mxu0 0
        %1650 = vmatprep.subr.bf16.mxu0 0
        %1651 = vmatpush1.bf16.msra.mxu0 0
        %1652 = vmatprep.subr.bf16.mxu0 0
        %1653 = vmatpush1.bf16.msra.mxu0 0
        %1654 = vmatprep.subr.bf16.mxu0 0
        %1655 = vmatpush1.bf16.msra.mxu0 0
        %1656 = vmatprep.subr.bf16.mxu0 0
        %1657 = vmatpush1.bf16.msra.mxu0 0
        %1658 = vmatprep.subr.bf16.mxu0 0
        %1659 = vmatpush1.bf16.msra.mxu0 0
        %1660 = vmatprep.subr.bf16.mxu0 0
        %1661 = vmatpush1.bf16.msra.mxu0 0
        %1662 = vmatprep.subr.bf16.mxu0 0
        %1663 = vmatpush1.bf16.msra.mxu0 0
        %1664 = vmatprep.subr.bf16.mxu0 0
        %1665 = vmatpush1.bf16.msra.mxu0 0
        %1666 = vmatprep.mubr.bf16.mxu0 0
        %1667 = vmatmul.mubr.bf16.gmra.mrb[0].mxu0 %v1632
        %v1668 = vpop.f32.mrb[0].mxu0
        %v1669 = vadd.f32 %v1606, %v1668
        %v1670 = vpop.f32.mrb[0].mxu0
        %v1671 = vpop.f32.mrb[0].mxu0
        %v1672 = vpop.f32.mrb[0].mxu0
        %1673 = vdwg.mxu0
        %v1674 = vsel %vm414, %v1669, 0.0
        %1675 = vadd.xlane.f32.xlu0 %v1674
        %v1676 = vpop.xlane.xlu0 %1675
        %v1677 = vmul.f32 %v1669, %v1669
        %v1678 = vsel %vm414, %v1677, 0.0
        %1679 = vadd.xlane.f32.xlu0 %v1678
        %v1680 = vpop.xlane.xlu0 %1679
        %v1681 = vmul.f32 %v1676, 0.03125
        %v1682 = vmul.f32 %v1680, 0.03125
        %v1683 = vmul.f32 %v1681, %v1681
        %v1684 = vsub.f32 %v1682, %v1683
        %v1685 = vsub.f32 %v1669, %v1681
        %v1686 = vadd.f32 %v1684, 1e-12
        %v1687 = vrsqrt.pop %v1686
        %v1688 = vmul.f32 %v1685, %v1687
        %v1689 = vld [vmem:[%s5 + $0x2] sm:$0x1]
        %v1690 = vlaneseq
        %v1691 = vshrl.u32 %v1690, 7
        %v1692 = vsub.s32 0, %v1691
        %v1693 = vrot.slane %v1689, %v1692
        %v1694 = vmul.f32 %v1688, %v1693
        %v1695 = vld [vmem:[%s5 + $0x3] sm:$0x1]
        %v1696 = vlaneseq
        %v1697 = vshrl.u32 %v1696, 7
        %v1698 = vsub.s32 0, %v1697
        %v1699 = vrot.slane %v1695, %v1698
        %v1700 = vadd.f32 %v1694, %v1699
        %v1701 = vld [vmem:[#allocation2 + $0xe8] sm:$0xf]
        %v1702 = vld [vmem:[#allocation2 + $0xec] sm:$0xf]
        %v1703 = vld [vmem:[#allocation2 + $0xf0] sm:$0xf]
        %v1704 = vld [vmem:[#allocation2 + $0xf4] sm:$0xf]
        %v1705 = vpack.c.bf16 %v1700, %v1700
        %v1706 = vld [vmem:[%s5 + $0x14] sm:$0x1]
        %v1707 = vlaneseq
        %v1708 = vshrl.u32 %v1707, 7
        %v1709 = vsub.s32 0, %v1708
        %v1710 = vrot.slane %v1706, %v1709
        %v1715 = vunpack.c.l.b16 %v1701
        %v1716 = vunpack.c.l.b16 %v1702
        %v1717 = vunpack.c.l.b16 %v1703
        %v1718 = vunpack.c.l.b16 %v1704
        %v1719 = vpack.c.b16 %v1716, %v1715
        %v1720 = vpack.c.b16 %v1718, %v1717
        %v1724 = vsel %vm414, %v1705, 0
        %1726 = vmatprep.subr.bf16.mxu0 0
        %1727 = vmatpush1.bf16.msra.mxu0 %v1719
        %1728 = vmatprep.subr.bf16.mxu0 0
        %1729 = vmatpush1.bf16.msra.mxu0 %v1720
        %1730 = vmatprep.subr.bf16.mxu0 0
        %1731 = vmatpush1.bf16.msra.mxu0 0
        %1732 = vmatprep.subr.bf16.mxu0 0
        %1733 = vmatpush1.bf16.msra.mxu0 0
        %1734 = vmatprep.subr.bf16.mxu0 0
        %1735 = vmatpush1.bf16.msra.mxu0 0
        %1736 = vmatprep.subr.bf16.mxu0 0
        %1737 = vmatpush1.bf16.msra.mxu0 0
        %1738 = vmatprep.subr.bf16.mxu0 0
        %1739 = vmatpush1.bf16.msra.mxu0 0
        %1740 = vmatprep.subr.bf16.mxu0 0
        %1741 = vmatpush1.bf16.msra.mxu0 0
        %1742 = vmatprep.subr.bf16.mxu0 0
        %1743 = vmatpush1.bf16.msra.mxu0 0
        %1744 = vmatprep.subr.bf16.mxu0 0
        %1745 = vmatpush1.bf16.msra.mxu0 0
        %1746 = vmatprep.subr.bf16.mxu0 0
        %1747 = vmatpush1.bf16.msra.mxu0 0
        %1748 = vmatprep.subr.bf16.mxu0 0
        %1749 = vmatpush1.bf16.msra.mxu0 0
        %1750 = vmatprep.subr.bf16.mxu0 0
        %1751 = vmatpush1.bf16.msra.mxu0 0
        %1752 = vmatprep.subr.bf16.mxu0 0
        %1753 = vmatpush1.bf16.msra.mxu0 0
        %1754 = vmatprep.subr.bf16.mxu0 0
        %1755 = vmatpush1.bf16.msra.mxu0 0
        %1756 = vmatprep.subr.bf16.mxu0 0
        %1757 = vmatpush1.bf16.msra.mxu0 0
        %1758 = vmatprep.mubr.bf16.mxu0 0
        %1759 = vmatmul.mubr.bf16.gmra.mrb[0].mxu0 %v1724
        %v1760 = vpop.f32.mrb[0].mxu0
        %v1761 = vadd.f32 %v1710, %v1760
        %v1762 = vpop.f32.mrb[0].mxu0
        %v1763 = vpop.f32.mrb[0].mxu0
        %v1764 = vpop.f32.mrb[0].mxu0
        %1765 = vdwg.mxu0
        %v1766 = vmul.f32 %v1761, 0.25
        %v1767 = vpack.c.bf16 %v1766, %v1766
        %v1768 = vpack.c.bf16 %v1761, %v1761
        %1770 = vrot.lane.b32.xlu0 %v1768, 96
        %v1771 = vpop.permute.xlu0 %1770
        %v1773 = vsel %vm519, %v1767, 0
        %v1776 = vsel %vm519, %v1771, 0
        %1778 = vmatprep.subr.bf16.mxu0 0
        %1779 = vmatpush1.bf16.xpose.msra.mxu0 %v1776
        %1780 = vmatprep.subr.bf16.mxu0 0
        %1781 = vmatpush1.bf16.xpose.msra.mxu0 0
        %1782 = vmatprep.subr.bf16.mxu0 0
        %1783 = vmatpush1.bf16.xpose.msra.mxu0 0
        %1784 = vmatprep.subr.bf16.mxu0 0
        %1785 = vmatpush1.bf16.xpose.msra.mxu0 0
        %1786 = vmatprep.subr.bf16.mxu0 0
        %1787 = vmatpush1.bf16.xpose.msra.mxu0 0
        %1788 = vmatprep.subr.bf16.mxu0 0
        %1789 = vmatpush1.bf16.xpose.msra.mxu0 0
        %1790 = vmatprep.subr.bf16.mxu0 0
        %1791 = vmatpush1.bf16.xpose.msra.mxu0 0
        %1792 = vmatprep.subr.bf16.mxu0 0
        %1793 = vmatpush1.bf16.xpose.msra.mxu0 0
        %1794 = vmatprep.subr.bf16.mxu0 0
        %1795 = vmatpush1.bf16.xpose.msra.mxu0 0
        %1796 = vmatprep.subr.bf16.mxu0 0
        %1797 = vmatpush1.bf16.xpose.msra.mxu0 0
        %1798 = vmatprep.subr.bf16.mxu0 0
        %1799 = vmatpush1.bf16.xpose.msra.mxu0 0
        %1800 = vmatprep.subr.bf16.mxu0 0
        %1801 = vmatpush1.bf16.xpose.msra.mxu0 0
        %1802 = vmatprep.subr.bf16.mxu0 0
        %1803 = vmatpush1.bf16.xpose.msra.mxu0 0
        %1804 = vmatprep.subr.bf16.mxu0 0
        %1805 = vmatpush1.bf16.xpose.msra.mxu0 0
        %1806 = vmatprep.subr.bf16.mxu0 0
        %1807 = vmatpush1.bf16.xpose.msra.mxu0 0
        %1808 = vmatprep.subr.bf16.mxu0 0
        %1809 = vmatpush1.bf16.xpose.msra.mxu0 0
        %1810 = vmatprep.mubr.bf16.mxu0 0
        %1811 = vmatmul.mubr.bf16.gmra.mrb[0].mxu0 %v1773
        %v1812 = vpop.f32.mrb[0].mxu0
        %v1813 = vadd.f32 %v327, %v1812
        %v1814 = vpop.f32.mrb[0].mxu0
        %v1815 = vpop.f32.mrb[0].mxu0
        %v1816 = vpop.f32.mrb[0].mxu0
        %1817 = vdwg.mxu0
        %v1818 = vsel %vm566, %v1813, -inf
        %1819 = vmax.xlane.f32.xlu0 %v1818
        %v1820 = vpop.xlane.xlu0 %1819
        %v1821 = vsub.f32 %v1813, %v1820
        %v1822 = vmul.f32 %v1821, 1.442695
        %v1823 = vpow.pop %v1822
        %v1824 = vsel %vm566, %v1823, 0.0
        %1825 = vadd.xlane.f32.xlu0 %v1824
        %v1826 = vpop.xlane.xlu0 %1825
        %v1827 = vrcp.pop %v1826
        %v1828 = vmul.f32 %v1823, %v1827
        %v1829 = vpack.c.bf16 %v1828, %v1828
        %1830 = vrot.lane.b32.xlu0 %v1768, 64
        %v1831 = vpop.permute.xlu0 %1830
        %v1833 = vsel %vm566, %v1829, 0
        %v1836 = vsel %vm584, %v1831, 0
        %1838 = vmatprep.subr.bf16.mxu0 0
        %1839 = vmatpush1.bf16.msra.mxu0 %v1836
        %1840 = vmatprep.subr.bf16.mxu0 0
        %1841 = vmatpush1.bf16.msra.mxu0 0
        %1842 = vmatprep.subr.bf16.mxu0 0
        %1843 = vmatpush1.bf16.msra.mxu0 0
        %1844 = vmatprep.subr.bf16.mxu0 0
        %1845 = vmatpush1.bf16.msra.mxu0 0
        %1846 = vmatprep.subr.bf16.mxu0 0
        %1847 = vmatpush1.bf16.msra.mxu0 0
        %1848 = vmatprep.subr.bf16.mxu0 0
        %1849 = vmatpush1.bf16.msra.mxu0 0
        %1850 = vmatprep.subr.bf16.mxu0 0
        %1851 = vmatpush1.bf16.msra.mxu0 0
        %1852 = vmatprep.subr.bf16.mxu0 0
        %1853 = vmatpush1.bf16.msra.mxu0 0
        %1854 = vmatprep.subr.bf16.mxu0 0
        %1855 = vmatpush1.bf16.msra.mxu0 0
        %1856 = vmatprep.subr.bf16.mxu0 0
        %1857 = vmatpush1.bf16.msra.mxu0 0
        %1858 = vmatprep.subr.bf16.mxu0 0
        %1859 = vmatpush1.bf16.msra.mxu0 0
        %1860 = vmatprep.subr.bf16.mxu0 0
        %1861 = vmatpush1.bf16.msra.mxu0 0
        %1862 = vmatprep.subr.bf16.mxu0 0
        %1863 = vmatpush1.bf16.msra.mxu0 0
        %1864 = vmatprep.subr.bf16.mxu0 0
        %1865 = vmatpush1.bf16.msra.mxu0 0
        %1866 = vmatprep.subr.bf16.mxu0 0
        %1867 = vmatpush1.bf16.msra.mxu0 0
        %1868 = vmatprep.subr.bf16.mxu0 0
        %1869 = vmatpush1.bf16.msra.mxu0 0
        %1870 = vmatprep.mubr.bf16.mxu0 0
        %1871 = vmatmul.mubr.bf16.gmra.mrb[0].mxu0 %v1833
        %v1872 = vpop.f32.mrb[0].mxu0
        %v1873 = vadd.f32 0.0, %v1872
        %v1874 = vpop.f32.mrb[0].mxu0
        %v1875 = vpop.f32.mrb[0].mxu0
        %v1876 = vpop.f32.mrb[0].mxu0
        %1877 = vdwg.mxu0
        %1879 = vrot.lane.b32.xlu0 %v1767, 112
        %v1880 = vpop.permute.xlu0 %1879
        %1881 = vrot.lane.b32.xlu0 %v1768, 80
        %v1882 = vpop.permute.xlu0 %1881
        %v1884 = vsel %vm519, %v1880, 0
        %v1887 = vsel %vm519, %v1882, 0
        %1889 = vmatprep.subr.bf16.mxu0 0
        %1890 = vmatpush1.bf16.xpose.msra.mxu0 %v1887
        %1891 = vmatprep.subr.bf16.mxu0 0
        %1892 = vmatpush1.bf16.xpose.msra.mxu0 0
        %1893 = vmatprep.subr.bf16.mxu0 0
        %1894 = vmatpush1.bf16.xpose.msra.mxu0 0
        %1895 = vmatprep.subr.bf16.mxu0 0
        %1896 = vmatpush1.bf16.xpose.msra.mxu0 0
        %1897 = vmatprep.subr.bf16.mxu0 0
        %1898 = vmatpush1.bf16.xpose.msra.mxu0 0
        %1899 = vmatprep.subr.bf16.mxu0 0
        %1900 = vmatpush1.bf16.xpose.msra.mxu0 0
        %1901 = vmatprep.subr.bf16.mxu0 0
        %1902 = vmatpush1.bf16.xpose.msra.mxu0 0
        %1903 = vmatprep.subr.bf16.mxu0 0
        %1904 = vmatpush1.bf16.xpose.msra.mxu0 0
        %1905 = vmatprep.subr.bf16.mxu0 0
        %1906 = vmatpush1.bf16.xpose.msra.mxu0 0
        %1907 = vmatprep.subr.bf16.mxu0 0
        %1908 = vmatpush1.bf16.xpose.msra.mxu0 0
        %1909 = vmatprep.subr.bf16.mxu0 0
        %1910 = vmatpush1.bf16.xpose.msra.mxu0 0
        %1911 = vmatprep.subr.bf16.mxu0 0
        %1912 = vmatpush1.bf16.xpose.msra.mxu0 0
        %1913 = vmatprep.subr.bf16.mxu0 0
        %1914 = vmatpush1.bf16.xpose.msra.mxu0 0
        %1915 = vmatprep.subr.bf16.mxu0 0
        %1916 = vmatpush1.bf16.xpose.msra.mxu0 0
        %1917 = vmatprep.subr.bf16.mxu0 0
        %1918 = vmatpush1.bf16.xpose.msra.mxu0 0
        %1919 = vmatprep.subr.bf16.mxu0 0
        %1920 = vmatpush1.bf16.xpose.msra.mxu0 0
        %1921 = vmatprep.mubr.bf16.mxu0 0
        %1922 = vmatmul.mubr.bf16.gmra.mrb[0].mxu0 %v1884
        %v1923 = vpop.f32.mrb[0].mxu0
        %v1924 = vadd.f32 %v327, %v1923
        %v1925 = vpop.f32.mrb[0].mxu0
        %v1926 = vpop.f32.mrb[0].mxu0
        %v1927 = vpop.f32.mrb[0].mxu0
        %1928 = vdwg.mxu0
        %v1929 = vsel %vm566, %v1924, -inf
        %1930 = vmax.xlane.f32.xlu0 %v1929
        %v1931 = vpop.xlane.xlu0 %1930
        %v1932 = vsub.f32 %v1924, %v1931
        %v1933 = vmul.f32 %v1932, 1.442695
        %v1934 = vpow.pop %v1933
        %v1935 = vsel %vm566, %v1934, 0.0
        %1936 = vadd.xlane.f32.xlu0 %v1935
        %v1937 = vpop.xlane.xlu0 %1936
        %v1938 = vrcp.pop %v1937
        %v1939 = vmul.f32 %v1934, %v1938
        %v1940 = vpack.c.bf16 %v1939, %v1939
        %1941 = vrot.lane.b32.xlu0 %v1768, 48
        %v1942 = vpop.permute.xlu0 %1941
        %v1944 = vsel %vm566, %v1940, 0
        %v1947 = vsel %vm584, %v1942, 0
        %1949 = vmatprep.subr.bf16.mxu0 0
        %1950 = vmatpush1.bf16.msra.mxu0 %v1947
        %1951 = vmatprep.subr.bf16.mxu0 0
        %1952 = vmatpush1.bf16.msra.mxu0 0
        %1953 = vmatprep.subr.bf16.mxu0 0
        %1954 = vmatpush1.bf16.msra.mxu0 0
        %1955 = vmatprep.subr.bf16.mxu0 0
        %1956 = vmatpush1.bf16.msra.mxu0 0
        %1957 = vmatprep.subr.bf16.mxu0 0
        %1958 = vmatpush1.bf16.msra.mxu0 0
        %1959 = vmatprep.subr.bf16.mxu0 0
        %1960 = vmatpush1.bf16.msra.mxu0 0
        %1961 = vmatprep.subr.bf16.mxu0 0
        %1962 = vmatpush1.bf16.msra.mxu0 0
        %1963 = vmatprep.subr.bf16.mxu0 0
        %1964 = vmatpush1.bf16.msra.mxu0 0
        %1965 = vmatprep.subr.bf16.mxu0 0
        %1966 = vmatpush1.bf16.msra.mxu0 0
        %1967 = vmatprep.subr.bf16.mxu0 0
        %1968 = vmatpush1.bf16.msra.mxu0 0
        %1969 = vmatprep.subr.bf16.mxu0 0
        %1970 = vmatpush1.bf16.msra.mxu0 0
        %1971 = vmatprep.subr.bf16.mxu0 0
        %1972 = vmatpush1.bf16.msra.mxu0 0
        %1973 = vmatprep.subr.bf16.mxu0 0
        %1974 = vmatpush1.bf16.msra.mxu0 0
        %1975 = vmatprep.subr.bf16.mxu0 0
        %1976 = vmatpush1.bf16.msra.mxu0 0
        %1977 = vmatprep.subr.bf16.mxu0 0
        %1978 = vmatpush1.bf16.msra.mxu0 0
        %1979 = vmatprep.subr.bf16.mxu0 0
        %1980 = vmatpush1.bf16.msra.mxu0 0
        %1981 = vmatprep.mubr.bf16.mxu0 0
        %1982 = vmatmul.mubr.bf16.gmra.mrb[0].mxu0 %v1944
        %v1983 = vpop.f32.mrb[0].mxu0
        %v1984 = vadd.f32 0.0, %v1983
        %v1985 = vpop.f32.mrb[0].mxu0
        %v1986 = vpop.f32.mrb[0].mxu0
        %v1987 = vpop.f32.mrb[0].mxu0
        %1988 = vdwg.mxu0
        %1990 = vrot.lane.b32.xlu0 %v1984, 16
        %v1991 = vpop.permute.xlu0 %1990
        %v1993 = vsel %vm519, %v1873, %v1991
        %v1994 = vld [vmem:[#allocation2 + $0xf8] sm:$0xf]
        %v1995 = vld [vmem:[#allocation2 + $0xfc] sm:$0xf]
        %v1996 = vld [vmem:[#allocation2 + $0x100] sm:$0xf]
        %v1997 = vld [vmem:[#allocation2 + $0x104] sm:$0xf]
        %v1998 = vpack.c.bf16 %v1993, %v1993
        %v1999 = vld [vmem:[%s5 + $0x15] sm:$0x1]
        %v2000 = vlaneseq
        %v2001 = vshrl.u32 %v2000, 7
        %v2002 = vsub.s32 0, %v2001
        %v2003 = vrot.slane %v1999, %v2002
        %v2008 = vunpack.c.l.b16 %v1994
        %v2009 = vunpack.c.l.b16 %v1995
        %v2010 = vunpack.c.l.b16 %v1996
        %v2011 = vunpack.c.l.b16 %v1997
        %v2012 = vpack.c.b16 %v2009, %v2008
        %v2013 = vpack.c.b16 %v2011, %v2010
        %v2017 = vsel %vm414, %v1998, 0
        %2019 = vmatprep.subr.bf16.mxu0 0
        %2020 = vmatpush1.bf16.msra.mxu0 %v2012
        %2021 = vmatprep.subr.bf16.mxu0 0
        %2022 = vmatpush1.bf16.msra.mxu0 %v2013
        %2023 = vmatprep.subr.bf16.mxu0 0
        %2024 = vmatpush1.bf16.msra.mxu0 0
        %2025 = vmatprep.subr.bf16.mxu0 0
        %2026 = vmatpush1.bf16.msra.mxu0 0
        %2027 = vmatprep.subr.bf16.mxu0 0
        %2028 = vmatpush1.bf16.msra.mxu0 0
        %2029 = vmatprep.subr.bf16.mxu0 0
        %2030 = vmatpush1.bf16.msra.mxu0 0
        %2031 = vmatprep.subr.bf16.mxu0 0
        %2032 = vmatpush1.bf16.msra.mxu0 0
        %2033 = vmatprep.subr.bf16.mxu0 0
        %2034 = vmatpush1.bf16.msra.mxu0 0
        %2035 = vmatprep.subr.bf16.mxu0 0
        %2036 = vmatpush1.bf16.msra.mxu0 0
        %2037 = vmatprep.subr.bf16.mxu0 0
        %2038 = vmatpush1.bf16.msra.mxu0 0
        %2039 = vmatprep.subr.bf16.mxu0 0
        %2040 = vmatpush1.bf16.msra.mxu0 0
        %2041 = vmatprep.subr.bf16.mxu0 0
        %2042 = vmatpush1.bf16.msra.mxu0 0
        %2043 = vmatprep.subr.bf16.mxu0 0
        %2044 = vmatpush1.bf16.msra.mxu0 0
        %2045 = vmatprep.subr.bf16.mxu0 0
        %2046 = vmatpush1.bf16.msra.mxu0 0
        %2047 = vmatprep.subr.bf16.mxu0 0
        %2048 = vmatpush1.bf16.msra.mxu0 0
        %2049 = vmatprep.subr.bf16.mxu0 0
        %2050 = vmatpush1.bf16.msra.mxu0 0
        %2051 = vmatprep.mubr.bf16.mxu0 0
        %2052 = vmatmul.mubr.bf16.gmra.mrb[0].mxu0 %v2017
        %v2053 = vpop.f32.mrb[0].mxu0
        %v2054 = vadd.f32 %v2003, %v2053
        %v2055 = vpop.f32.mrb[0].mxu0
        %v2056 = vpop.f32.mrb[0].mxu0
        %v2057 = vpop.f32.mrb[0].mxu0
        %2058 = vdwg.mxu0
        %v2059 = vadd.f32 %v1700, %v2054
        %v2060 = vsel %vm414, %v2059, 0.0
        %2061 = vadd.xlane.f32.xlu0 %v2060
        %v2062 = vpop.xlane.xlu0 %2061
        %v2063 = vmul.f32 %v2059, %v2059
        %v2064 = vsel %vm414, %v2063, 0.0
        %2065 = vadd.xlane.f32.xlu0 %v2064
        %v2066 = vpop.xlane.xlu0 %2065
        %v2067 = vmul.f32 %v2062, 0.03125
        %v2068 = vmul.f32 %v2066, 0.03125
        %v2069 = vmul.f32 %v2067, %v2067
        %v2070 = vsub.f32 %v2068, %v2069
        %v2071 = vsub.f32 %v2059, %v2067
        %v2072 = vadd.f32 %v2070, 1e-12
        %v2073 = vrsqrt.pop %v2072
        %v2074 = vmul.f32 %v2071, %v2073
        %v2075 = vld [vmem:[%s5 + $0x1b] sm:$0x1]
        %v2076 = vlaneseq
        %v2077 = vshrl.u32 %v2076, 7
        %v2078 = vsub.s32 0, %v2077
        %v2079 = vrot.slane %v2075, %v2078
        %v2080 = vmul.f32 %v2074, %v2079
        %v2081 = vld [vmem:[%s5 + $0x1c] sm:$0x1]
        %v2082 = vlaneseq
        %v2083 = vshrl.u32 %v2082, 7
        %v2084 = vsub.s32 0, %v2083
        %v2085 = vrot.slane %v2081, %v2084
        %v2086 = vadd.f32 %v2080, %v2085
        %v2087 = vld [vmem:[#allocation2 + $0x108] sm:$0xf]
        %v2088 = vld [vmem:[#allocation2 + $0x10c] sm:$0xf]
        %v2089 = vld [vmem:[#allocation2 + $0x110] sm:$0xf]
        %v2090 = vld [vmem:[#allocation2 + $0x114] sm:$0xf]
        %v2091 = vpack.c.bf16 %v2086, %v2086
        %v2092 = vld [vmem:[%s5 + $0x16] sm:$0x1]
        %v2093 = vlaneseq
        %v2094 = vshrl.u32 %v2093, 7
        %v2095 = vsub.s32 0, %v2094
        %v2096 = vrot.slane %v2092, %v2095
        %v2101 = vunpack.c.l.b16 %v2087
        %v2102 = vunpack.c.l.b16 %v2088
        %v2103 = vunpack.c.l.b16 %v2089
        %v2104 = vunpack.c.l.b16 %v2090
        %v2105 = vpack.c.b16 %v2102, %v2101
        %v2106 = vpack.c.b16 %v2104, %v2103
        %v2110 = vsel %vm414, %v2091, 0
        %2112 = vmatprep.subr.bf16.mxu0 0
        %2113 = vmatpush1.bf16.msra.mxu0 %v2105
        %2114 = vmatprep.subr.bf16.mxu0 0
        %2115 = vmatpush1.bf16.msra.mxu0 %v2106
        %2116 = vmatprep.subr.bf16.mxu0 0
        %2117 = vmatpush1.bf16.msra.mxu0 0
        %2118 = vmatprep.subr.bf16.mxu0 0
        %2119 = vmatpush1.bf16.msra.mxu0 0
        %2120 = vmatprep.subr.bf16.mxu0 0
        %2121 = vmatpush1.bf16.msra.mxu0 0
        %2122 = vmatprep.subr.bf16.mxu0 0
        %2123 = vmatpush1.bf16.msra.mxu0 0
        %2124 = vmatprep.subr.bf16.mxu0 0
        %2125 = vmatpush1.bf16.msra.mxu0 0
        %2126 = vmatprep.subr.bf16.mxu0 0
        %2127 = vmatpush1.bf16.msra.mxu0 0
        %2128 = vmatprep.subr.bf16.mxu0 0
        %2129 = vmatpush1.bf16.msra.mxu0 0
        %2130 = vmatprep.subr.bf16.mxu0 0
        %2131 = vmatpush1.bf16.msra.mxu0 0
        %2132 = vmatprep.subr.bf16.mxu0 0
        %2133 = vmatpush1.bf16.msra.mxu0 0
        %2134 = vmatprep.subr.bf16.mxu0 0
        %2135 = vmatpush1.bf16.msra.mxu0 0
        %2136 = vmatprep.subr.bf16.mxu0 0
        %2137 = vmatpush1.bf16.msra.mxu0 0
        %2138 = vmatprep.subr.bf16.mxu0 0
        %2139 = vmatpush1.bf16.msra.mxu0 0
        %2140 = vmatprep.subr.bf16.mxu0 0
        %2141 = vmatpush1.bf16.msra.mxu0 0
        %2142 = vmatprep.subr.bf16.mxu0 0
        %2143 = vmatpush1.bf16.msra.mxu0 0
        %2144 = vmatprep.mubr.bf16.mxu0 0
        %2145 = vmatmul.mubr.bf16.gmra.mrb[0].mxu0 %v2110
        %v2146 = vpop.f32.mrb[0].mxu0
        %v2147 = vadd.f32 %v2096, %v2146
        %v2148 = vpop.f32.mrb[0].mxu0
        %v2149 = vpop.f32.mrb[0].mxu0
        %v2150 = vpop.f32.mrb[0].mxu0
        %2151 = vdwg.mxu0
        %v2152 = vmul.f32 %v2147, 0.25
        %v2153 = vld [vmem:[#allocation2 + $0x118] sm:$0xf]
        %v2154 = vld [vmem:[#allocation2 + $0x11c] sm:$0xf]
        %v2155 = vld [vmem:[#allocation2 + $0x120] sm:$0xf]
        %v2156 = vld [vmem:[#allocation2 + $0x124] sm:$0xf]
        %v2157 = vpack.c.bf16 %v1588, %v1588
        %v2158 = vld [vmem:[%s5 + $0x17] sm:$0x1]
        %v2159 = vlaneseq
        %v2160 = vshrl.u32 %v2159, 7
        %v2161 = vsub.s32 0, %v2160
        %v2162 = vrot.slane %v2158, %v2161
        %v2167 = vunpack.c.l.b16 %v2153
        %v2168 = vunpack.c.l.b16 %v2154
        %v2169 = vunpack.c.l.b16 %v2155
        %v2170 = vunpack.c.l.b16 %v2156
        %v2171 = vpack.c.b16 %v2168, %v2167
        %v2172 = vpack.c.b16 %v2170, %v2169
        %v2176 = vsel %vm414, %v2157, 0
        %2178 = vmatprep.subr.bf16.mxu0 0
        %2179 = vmatpush1.bf16.msra.mxu0 %v2171
        %2180 = vmatprep.subr.bf16.mxu0 0
        %2181 = vmatpush1.bf16.msra.mxu0 %v2172
        %2182 = vmatprep.subr.bf16.mxu0 0
        %2183 = vmatpush1.bf16.msra.mxu0 0
        %2184 = vmatprep.subr.bf16.mxu0 0
        %2185 = vmatpush1.bf16.msra.mxu0 0
        %2186 = vmatprep.subr.bf16.mxu0 0
        %2187 = vmatpush1.bf16.msra.mxu0 0
        %2188 = vmatprep.subr.bf16.mxu0 0
        %2189 = vmatpush1.bf16.msra.mxu0 0
        %2190 = vmatprep.subr.bf16.mxu0 0
        %2191 = vmatpush1.bf16.msra.mxu0 0
        %2192 = vmatprep.subr.bf16.mxu0 0
        %2193 = vmatpush1.bf16.msra.mxu0 0
        %2194 = vmatprep.subr.bf16.mxu0 0
        %2195 = vmatpush1.bf16.msra.mxu0 0
        %2196 = vmatprep.subr.bf16.mxu0 0
        %2197 = vmatpush1.bf16.msra.mxu0 0
        %2198 = vmatprep.subr.bf16.mxu0 0
        %2199 = vmatpush1.bf16.msra.mxu0 0
        %2200 = vmatprep.subr.bf16.mxu0 0
        %2201 = vmatpush1.bf16.msra.mxu0 0
        %2202 = vmatprep.subr.bf16.mxu0 0
        %2203 = vmatpush1.bf16.msra.mxu0 0
        %2204 = vmatprep.subr.bf16.mxu0 0
        %2205 = vmatpush1.bf16.msra.mxu0 0
        %2206 = vmatprep.subr.bf16.mxu0 0
        %2207 = vmatpush1.bf16.msra.mxu0 0
        %2208 = vmatprep.subr.bf16.mxu0 0
        %2209 = vmatpush1.bf16.msra.mxu0 0
        %2210 = vmatprep.mubr.bf16.mxu0 0
        %2211 = vmatmul.mubr.bf16.gmra.mrb[0].mxu0 %v2176
        %v2212 = vpop.f32.mrb[0].mxu0
        %v2213 = vadd.f32 %v2162, %v2212
        %v2214 = vpop.f32.mrb[0].mxu0
        %v2215 = vpop.f32.mrb[0].mxu0
        %v2216 = vpop.f32.mrb[0].mxu0
        %2217 = vdwg.mxu0
        %v2218 = vpack.c.bf16 %v2152, %v2152
        %v2219 = vpack.c.bf16 %v2213, %v2213
        %v2221 = vsel %vm519, %v2218, 0
        %v2224 = vsel %vm519, %v2219, 0
        %2226 = vmatprep.subr.bf16.mxu0 0
        %2227 = vmatpush1.bf16.xpose.msra.mxu0 %v2224
        %2228 = vmatprep.subr.bf16.mxu0 0
        %2229 = vmatpush1.bf16.xpose.msra.mxu0 0
        %2230 = vmatprep.subr.bf16.mxu0 0
        %2231 = vmatpush1.bf16.xpose.msra.mxu0 0
        %2232 = vmatprep.subr.bf16.mxu0 0
        %2233 = vmatpush1.bf16.xpose.msra.mxu0 0
        %2234 = vmatprep.subr.bf16.mxu0 0
        %2235 = vmatpush1.bf16.xpose.msra.mxu0 0
        %2236 = vmatprep.subr.bf16.mxu0 0
        %2237 = vmatpush1.bf16.xpose.msra.mxu0 0
        %2238 = vmatprep.subr.bf16.mxu0 0
        %2239 = vmatpush1.bf16.xpose.msra.mxu0 0
        %2240 = vmatprep.subr.bf16.mxu0 0
        %2241 = vmatpush1.bf16.xpose.msra.mxu0 0
        %2242 = vmatprep.subr.bf16.mxu0 0
        %2243 = vmatpush1.bf16.xpose.msra.mxu0 0
        %2244 = vmatprep.subr.bf16.mxu0 0
        %2245 = vmatpush1.bf16.xpose.msra.mxu0 0
        %2246 = vmatprep.subr.bf16.mxu0 0
        %2247 = vmatpush1.bf16.xpose.msra.mxu0 0
        %2248 = vmatprep.subr.bf16.mxu0 0
        %2249 = vmatpush1.bf16.xpose.msra.mxu0 0
        %2250 = vmatprep.subr.bf16.mxu0 0
        %2251 = vmatpush1.bf16.xpose.msra.mxu0 0
        %2252 = vmatprep.subr.bf16.mxu0 0
        %2253 = vmatpush1.bf16.xpose.msra.mxu0 0
        %2254 = vmatprep.subr.bf16.mxu0 0
        %2255 = vmatpush1.bf16.xpose.msra.mxu0 0
        %2256 = vmatprep.subr.bf16.mxu0 0
        %2257 = vmatpush1.bf16.xpose.msra.mxu0 0
        %2258 = vmatprep.mubr.bf16.mxu0 0
        %2259 = vmatmul.mubr.bf16.gmra.mrb[0].mxu0 %v2221
        %v2260 = vpop.f32.mrb[0].mxu0
        %v2261 = vadd.f32 %v514, %v2260
        %v2262 = vpop.f32.mrb[0].mxu0
        %v2263 = vpop.f32.mrb[0].mxu0
        %v2264 = vpop.f32.mrb[0].mxu0
        %2265 = vdwg.mxu0
        %v2266 = vsel %vm566, %v2261, -inf
        %2267 = vmax.xlane.f32.xlu0 %v2266
        %v2268 = vpop.xlane.xlu0 %2267
        %v2269 = vsub.f32 %v2261, %v2268
        %v2270 = vmul.f32 %v2269, 1.442695
        %v2271 = vpow.pop %v2270
        %v2272 = vsel %vm566, %v2271, 0.0
        %2273 = vadd.xlane.f32.xlu0 %v2272
        %v2274 = vpop.xlane.xlu0 %2273
        %v2275 = vrcp.pop %v2274
        %v2276 = vmul.f32 %v2271, %v2275
        %v2277 = vpack.c.bf16 %v2276, %v2276
        %2279 = vrot.lane.b32.xlu0 %v2219, 96
        %v2280 = vpop.permute.xlu0 %2279
        %v2282 = vsel %vm566, %v2277, 0
        %v2285 = vsel %vm584, %v2280, 0
        %2287 = vmatprep.subr.bf16.mxu0 0
        %2288 = vmatpush1.bf16.msra.mxu0 %v2285
        %2289 = vmatprep.subr.bf16.mxu0 0
        %2290 = vmatpush1.bf16.msra.mxu0 0
        %2291 = vmatprep.subr.bf16.mxu0 0
        %2292 = vmatpush1.bf16.msra.mxu0 0
        %2293 = vmatprep.subr.bf16.mxu0 0
        %2294 = vmatpush1.bf16.msra.mxu0 0
        %2295 = vmatprep.subr.bf16.mxu0 0
        %2296 = vmatpush1.bf16.msra.mxu0 0
        %2297 = vmatprep.subr.bf16.mxu0 0
        %2298 = vmatpush1.bf16.msra.mxu0 0
        %2299 = vmatprep.subr.bf16.mxu0 0
        %2300 = vmatpush1.bf16.msra.mxu0 0
        %2301 = vmatprep.subr.bf16.mxu0 0
        %2302 = vmatpush1.bf16.msra.mxu0 0
        %2303 = vmatprep.subr.bf16.mxu0 0
        %2304 = vmatpush1.bf16.msra.mxu0 0
        %2305 = vmatprep.subr.bf16.mxu0 0
        %2306 = vmatpush1.bf16.msra.mxu0 0
        %2307 = vmatprep.subr.bf16.mxu0 0
        %2308 = vmatpush1.bf16.msra.mxu0 0
        %2309 = vmatprep.subr.bf16.mxu0 0
        %2310 = vmatpush1.bf16.msra.mxu0 0
        %2311 = vmatprep.subr.bf16.mxu0 0
        %2312 = vmatpush1.bf16.msra.mxu0 0
        %2313 = vmatprep.subr.bf16.mxu0 0
        %2314 = vmatpush1.bf16.msra.mxu0 0
        %2315 = vmatprep.subr.bf16.mxu0 0
        %2316 = vmatpush1.bf16.msra.mxu0 0
        %2317 = vmatprep.subr.bf16.mxu0 0
        %2318 = vmatpush1.bf16.msra.mxu0 0
        %2319 = vmatprep.mubr.bf16.mxu0 0
        %2320 = vmatmul.mubr.bf16.gmra.mrb[0].mxu0 %v2282
        %v2321 = vpop.f32.mrb[0].mxu0
        %v2322 = vadd.f32 0.0, %v2321
        %v2323 = vpop.f32.mrb[0].mxu0
        %v2324 = vpop.f32.mrb[0].mxu0
        %v2325 = vpop.f32.mrb[0].mxu0
        %2326 = vdwg.mxu0
        %2328 = vrot.lane.b32.xlu0 %v2218, 112
        %v2329 = vpop.permute.xlu0 %2328
        %2330 = vrot.lane.b32.xlu0 %v2219, 112
        %v2331 = vpop.permute.xlu0 %2330
        %v2333 = vsel %vm519, %v2329, 0
        %v2336 = vsel %vm519, %v2331, 0
        %2338 = vmatprep.subr.bf16.mxu0 0
        %2339 = vmatpush1.bf16.xpose.msra.mxu0 %v2336
        %2340 = vmatprep.subr.bf16.mxu0 0
        %2341 = vmatpush1.bf16.xpose.msra.mxu0 0
        %2342 = vmatprep.subr.bf16.mxu0 0
        %2343 = vmatpush1.bf16.xpose.msra.mxu0 0
        %2344 = vmatprep.subr.bf16.mxu0 0
        %2345 = vmatpush1.bf16.xpose.msra.mxu0 0
        %2346 = vmatprep.subr.bf16.mxu0 0
        %2347 = vmatpush1.bf16.xpose.msra.mxu0 0
        %2348 = vmatprep.subr.bf16.mxu0 0
        %2349 = vmatpush1.bf16.xpose.msra.mxu0 0
        %2350 = vmatprep.subr.bf16.mxu0 0
        %2351 = vmatpush1.bf16.xpose.msra.mxu0 0
        %2352 = vmatprep.subr.bf16.mxu0 0
        %2353 = vmatpush1.bf16.xpose.msra.mxu0 0
        %2354 = vmatprep.subr.bf16.mxu0 0
        %2355 = vmatpush1.bf16.xpose.msra.mxu0 0
        %2356 = vmatprep.subr.bf16.mxu0 0
        %2357 = vmatpush1.bf16.xpose.msra.mxu0 0
        %2358 = vmatprep.subr.bf16.mxu0 0
        %2359 = vmatpush1.bf16.xpose.msra.mxu0 0
        %2360 = vmatprep.subr.bf16.mxu0 0
        %2361 = vmatpush1.bf16.xpose.msra.mxu0 0
        %2362 = vmatprep.subr.bf16.mxu0 0
        %2363 = vmatpush1.bf16.xpose.msra.mxu0 0
        %2364 = vmatprep.subr.bf16.mxu0 0
        %2365 = vmatpush1.bf16.xpose.msra.mxu0 0
        %2366 = vmatprep.subr.bf16.mxu0 0
        %2367 = vmatpush1.bf16.xpose.msra.mxu0 0
        %2368 = vmatprep.subr.bf16.mxu0 0
        %2369 = vmatpush1.bf16.xpose.msra.mxu0 0
        %2370 = vmatprep.mubr.bf16.mxu0 0
        %2371 = vmatmul.mubr.bf16.gmra.mrb[0].mxu0 %v2333
        %v2372 = vpop.f32.mrb[0].mxu0
        %v2373 = vadd.f32 %v514, %v2372
        %v2374 = vpop.f32.mrb[0].mxu0
        %v2375 = vpop.f32.mrb[0].mxu0
        %v2376 = vpop.f32.mrb[0].mxu0
        %2377 = vdwg.mxu0
        %v2378 = vsel %vm566, %v2373, -inf
        %2379 = vmax.xlane.f32.xlu0 %v2378
        %v2380 = vpop.xlane.xlu0 %2379
        %v2381 = vsub.f32 %v2373, %v2380
        %v2382 = vmul.f32 %v2381, 1.442695
        %v2383 = vpow.pop %v2382
        %v2384 = vsel %vm566, %v2383, 0.0
        %2385 = vadd.xlane.f32.xlu0 %v2384
        %v2386 = vpop.xlane.xlu0 %2385
        %v2387 = vrcp.pop %v2386
        %v2388 = vmul.f32 %v2383, %v2387
        %v2389 = vpack.c.bf16 %v2388, %v2388
        %2390 = vrot.lane.b32.xlu0 %v2219, 80
        %v2391 = vpop.permute.xlu0 %2390
        %v2393 = vsel %vm566, %v2389, 0
        %v2396 = vsel %vm584, %v2391, 0
        %2398 = vmatprep.subr.bf16.mxu0 0
        %2399 = vmatpush1.bf16.msra.mxu0 %v2396
        %2400 = vmatprep.subr.bf16.mxu0 0
        %2401 = vmatpush1.bf16.msra.mxu0 0
        %2402 = vmatprep.subr.bf16.mxu0 0
        %2403 = vmatpush1.bf16.msra.mxu0 0
        %2404 = vmatprep.subr.bf16.mxu0 0
        %2405 = vmatpush1.bf16.msra.mxu0 0
        %2406 = vmatprep.subr.bf16.mxu0 0
        %2407 = vmatpush1.bf16.msra.mxu0 0
        %2408 = vmatprep.subr.bf16.mxu0 0
        %2409 = vmatpush1.bf16.msra.mxu0 0
        %2410 = vmatprep.subr.bf16.mxu0 0
        %2411 = vmatpush1.bf16.msra.mxu0 0
        %2412 = vmatprep.subr.bf16.mxu0 0
        %2413 = vmatpush1.bf16.msra.mxu0 0
        %2414 = vmatprep.subr.bf16.mxu0 0
        %2415 = vmatpush1.bf16.msra.mxu0 0
        %2416 = vmatprep.subr.bf16.mxu0 0
        %2417 = vmatpush1.bf16.msra.mxu0 0
        %2418 = vmatprep.subr.bf16.mxu0 0
        %2419 = vmatpush1.bf16.msra.mxu0 0
        %2420 = vmatprep.subr.bf16.mxu0 0
        %2421 = vmatpush1.bf16.msra.mxu0 0
        %2422 = vmatprep.subr.bf16.mxu0 0
        %2423 = vmatpush1.bf16.msra.mxu0 0
        %2424 = vmatprep.subr.bf16.mxu0 0
        %2425 = vmatpush1.bf16.msra.mxu0 0
        %2426 = vmatprep.subr.bf16.mxu0 0
        %2427 = vmatpush1.bf16.msra.mxu0 0
        %2428 = vmatprep.subr.bf16.mxu0 0
        %2429 = vmatpush1.bf16.msra.mxu0 0
        %2430 = vmatprep.mubr.bf16.mxu0 0
        %2431 = vmatmul.mubr.bf16.gmra.mrb[0].mxu0 %v2393
        %v2432 = vpop.f32.mrb[0].mxu0
        %v2433 = vadd.f32 0.0, %v2432
        %v2434 = vpop.f32.mrb[0].mxu0
        %v2435 = vpop.f32.mrb[0].mxu0
        %v2436 = vpop.f32.mrb[0].mxu0
        %2437 = vdwg.mxu0
        %2439 = vrot.lane.b32.xlu0 %v2433, 16
        %v2440 = vpop.permute.xlu0 %2439
        %v2442 = vsel %vm519, %v2322, %v2440
        %v2443 = vld [vmem:[#allocation2 + $0x128] sm:$0xf]
        %v2444 = vld [vmem:[#allocation2 + $0x12c] sm:$0xf]
        %v2445 = vld [vmem:[#allocation2 + $0x130] sm:$0xf]
        %v2446 = vld [vmem:[#allocation2 + $0x134] sm:$0xf]
        %v2447 = vpack.c.bf16 %v2442, %v2442
        %v2448 = vld [vmem:[%s5 + $0x18] sm:$0x1]
        %v2449 = vlaneseq
        %v2450 = vshrl.u32 %v2449, 7
        %v2451 = vsub.s32 0, %v2450
        %v2452 = vrot.slane %v2448, %v2451
        %v2457 = vunpack.c.l.b16 %v2443
        %v2458 = vunpack.c.l.b16 %v2444
        %v2459 = vunpack.c.l.b16 %v2445
        %v2460 = vunpack.c.l.b16 %v2446
        %v2461 = vpack.c.b16 %v2458, %v2457
        %v2462 = vpack.c.b16 %v2460, %v2459
        %v2466 = vsel %vm414, %v2447, 0
        %2468 = vmatprep.subr.bf16.mxu0 0
        %2469 = vmatpush1.bf16.msra.mxu0 %v2461
        %2470 = vmatprep.subr.bf16.mxu0 0
        %2471 = vmatpush1.bf16.msra.mxu0 %v2462
        %2472 = vmatprep.subr.bf16.mxu0 0
        %2473 = vmatpush1.bf16.msra.mxu0 0
        %2474 = vmatprep.subr.bf16.mxu0 0
        %2475 = vmatpush1.bf16.msra.mxu0 0
        %2476 = vmatprep.subr.bf16.mxu0 0
        %2477 = vmatpush1.bf16.msra.mxu0 0
        %2478 = vmatprep.subr.bf16.mxu0 0
        %2479 = vmatpush1.bf16.msra.mxu0 0
        %2480 = vmatprep.subr.bf16.mxu0 0
        %2481 = vmatpush1.bf16.msra.mxu0 0
        %2482 = vmatprep.subr.bf16.mxu0 0
        %2483 = vmatpush1.bf16.msra.mxu0 0
        %2484 = vmatprep.subr.bf16.mxu0 0
        %2485 = vmatpush1.bf16.msra.mxu0 0
        %2486 = vmatprep.subr.bf16.mxu0 0
        %2487 = vmatpush1.bf16.msra.mxu0 0
        %2488 = vmatprep.subr.bf16.mxu0 0
        %2489 = vmatpush1.bf16.msra.mxu0 0
        %2490 = vmatprep.subr.bf16.mxu0 0
        %2491 = vmatpush1.bf16.msra.mxu0 0
        %2492 = vmatprep.subr.bf16.mxu0 0
        %2493 = vmatpush1.bf16.msra.mxu0 0
        %2494 = vmatprep.subr.bf16.mxu0 0
        %2495 = vmatpush1.bf16.msra.mxu0 0
        %2496 = vmatprep.subr.bf16.mxu0 0
        %2497 = vmatpush1.bf16.msra.mxu0 0
        %2498 = vmatprep.subr.bf16.mxu0 0
        %2499 = vmatpush1.bf16.msra.mxu0 0
        %2500 = vmatprep.mubr.bf16.mxu0 0
        %2501 = vmatmul.mubr.bf16.gmra.mrb[0].mxu0 %v2466
        %v2502 = vpop.f32.mrb[0].mxu0
        %v2503 = vadd.f32 %v2452, %v2502
        %v2504 = vpop.f32.mrb[0].mxu0
        %v2505 = vpop.f32.mrb[0].mxu0
        %v2506 = vpop.f32.mrb[0].mxu0
        %2507 = vdwg.mxu0
        %v2508 = vadd.f32 %v2086, %v2503
        %v2509 = vsel %vm414, %v2508, 0.0
        %2510 = vadd.xlane.f32.xlu0 %v2509
        %v2511 = vpop.xlane.xlu0 %2510
        %v2512 = vmul.f32 %v2508, %v2508
        %v2513 = vsel %vm414, %v2512, 0.0
        %2514 = vadd.xlane.f32.xlu0 %v2513
        %v2515 = vpop.xlane.xlu0 %2514
        %v2516 = vmul.f32 %v2511, 0.03125
        %v2517 = vmul.f32 %v2515, 0.03125
        %v2518 = vmul.f32 %v2516, %v2516
        %v2519 = vsub.f32 %v2517, %v2518
        %v2520 = vsub.f32 %v2508, %v2516
        %v2521 = vadd.f32 %v2519, 1e-12
        %v2522 = vrsqrt.pop %v2521
        %v2523 = vmul.f32 %v2520, %v2522
        %v2524 = vld [vmem:[%s5 + $0x1d] sm:$0x1]
        %v2525 = vlaneseq
        %v2526 = vshrl.u32 %v2525, 7
        %v2527 = vsub.s32 0, %v2526
        %v2528 = vrot.slane %v2524, %v2527
        %v2529 = vmul.f32 %v2523, %v2528
        %v2530 = vld [vmem:[%s5 + $0x1e] sm:$0x1]
        %v2531 = vlaneseq
        %v2532 = vshrl.u32 %v2531, 7
        %v2533 = vsub.s32 0, %v2532
        %v2534 = vrot.slane %v2530, %v2533
        %v2535 = vadd.f32 %v2529, %v2534
        %v2536 = vld [vmem:[#allocation2 + $0x138] sm:$0xf]
        %v2537 = vld [vmem:[#allocation2 + $0x13c] sm:$0xf]
        %v2538 = vld [vmem:[#allocation2 + $0x140] sm:$0xf]
        %v2539 = vld [vmem:[#allocation2 + $0x144] sm:$0xf]
        %v2540 = vpack.c.bf16 %v2535, %v2535
        %v2541 = vld [vmem:[%s5 + $0x19] sm:$0x1]
        %v2542 = vlaneseq
        %v2543 = vshrl.u32 %v2542, 7
        %v2544 = vsub.s32 0, %v2543
        %v2545 = vrot.slane %v2541, %v2544
        %v2550 = vunpack.c.l.b16 %v2536
        %v2551 = vunpack.c.l.b16 %v2537
        %v2552 = vunpack.c.l.b16 %v2538
        %v2553 = vunpack.c.l.b16 %v2539
        %v2554 = vpack.c.b16 %v2551, %v2550
        %v2555 = vpack.c.b16 %v2553, %v2552
        %v2559 = vsel %vm414, %v2540, 0
        %2561 = vmatprep.subr.bf16.mxu0 0
        %2562 = vmatpush1.bf16.msra.mxu0 %v2554
        %2563 = vmatprep.subr.bf16.mxu0 0
        %2564 = vmatpush1.bf16.msra.mxu0 %v2555
        %2565 = vmatprep.subr.bf16.mxu0 0
        %2566 = vmatpush1.bf16.msra.mxu0 0
        %2567 = vmatprep.subr.bf16.mxu0 0
        %2568 = vmatpush1.bf16.msra.mxu0 0
        %2569 = vmatprep.subr.bf16.mxu0 0
        %2570 = vmatpush1.bf16.msra.mxu0 0
        %2571 = vmatprep.subr.bf16.mxu0 0
        %2572 = vmatpush1.bf16.msra.mxu0 0
        %2573 = vmatprep.subr.bf16.mxu0 0
        %2574 = vmatpush1.bf16.msra.mxu0 0
        %2575 = vmatprep.subr.bf16.mxu0 0
        %2576 = vmatpush1.bf16.msra.mxu0 0
        %2577 = vmatprep.subr.bf16.mxu0 0
        %2578 = vmatpush1.bf16.msra.mxu0 0
        %2579 = vmatprep.subr.bf16.mxu0 0
        %2580 = vmatpush1.bf16.msra.mxu0 0
        %2581 = vmatprep.subr.bf16.mxu0 0
        %2582 = vmatpush1.bf16.msra.mxu0 0
        %2583 = vmatprep.subr.bf16.mxu0 0
        %2584 = vmatpush1.bf16.msra.mxu0 0
        %2585 = vmatprep.subr.bf16.mxu0 0
        %2586 = vmatpush1.bf16.msra.mxu0 0
        %2587 = vmatprep.subr.bf16.mxu0 0
        %2588 = vmatpush1.bf16.msra.mxu0 0
        %2589 = vmatprep.subr.bf16.mxu0 0
        %2590 = vmatpush1.bf16.msra.mxu0 0
        %2591 = vmatprep.subr.bf16.mxu0 0
        %2592 = vmatpush1.bf16.msra.mxu0 0
        %2593 = vmatprep.mubr.bf16.mxu0 0
        %2594 = vmatmul.mubr.bf16.gmra.mrb[0].mxu0 %v2559
        %v2595 = vpop.f32.mrb[0].mxu0
        %v2596 = vadd.f32 %v2545, %v2595
        %v2597 = vpop.f32.mrb[0].mxu0
        %v2598 = vpop.f32.mrb[0].mxu0
        %v2599 = vpop.f32.mrb[0].mxu0
        %2600 = vdwg.mxu0
        %v2601 = vmul.f32 %v2596, 0.5
        %v2602 = vmul.f32 %v2596, 0.044715
        %v2603 = vmul.f32 %v2602, %v2596
        %v2604 = vmul.f32 %v2603, %v2596
        %v2605 = vadd.f32 %v2596, %v2604
        %v2606 = vmul.f32 %v2605, 0.7978846
        %v2607 = vtanh.pop %v2606
        %v2608 = vadd.f32 %v2607, 1.0
        %v2609 = vmul.f32 %v2601, %v2608
        %v2610 = vld [vmem:[#allocation2 + $0x148] sm:$0xf]
        %v2611 = vld [vmem:[#allocation2 + $0x14c] sm:$0xf]
        %v2612 = vld [vmem:[#allocation2 + $0x150] sm:$0xf]
        %v2613 = vld [vmem:[#allocation2 + $0x154] sm:$0xf]
        %v2614 = vld [vmem:[#allocation2 + $0x158] sm:$0xf]
        %v2615 = vld [vmem:[#allocation2 + $0x15c] sm:$0xf]
        %v2616 = vld [vmem:[#allocation2 + $0x160] sm:$0xf]
        %v2617 = vld [vmem:[#allocation2 + $0x164] sm:$0xf]
        %v2618 = vpack.c.bf16 %v2609, %v2609
        %v2619 = vld [vmem:[%s5 + $0x1a] sm:$0x1]
        %v2620 = vlaneseq
        %v2621 = vshrl.u32 %v2620, 7
        %v2622 = vsub.s32 0, %v2621
        %v2623 = vrot.slane %v2619, %v2622
        %v2632 = vunpack.c.l.b16 %v2610
        %v2633 = vunpack.c.l.b16 %v2611
        %v2634 = vunpack.c.l.b16 %v2612
        %v2635 = vunpack.c.l.b16 %v2613
        %v2636 = vunpack.c.l.b16 %v2614
        %v2637 = vunpack.c.l.b16 %v2615
        %v2638 = vunpack.c.l.b16 %v2616
        %v2639 = vunpack.c.l.b16 %v2617
        %v2640 = vpack.c.b16 %v2633, %v2632
        %v2641 = vpack.c.b16 %v2635, %v2634
        %v2642 = vpack.c.b16 %v2637, %v2636
        %v2643 = vpack.c.b16 %v2639, %v2638
        %v2649 = vsel %vm370, %v2618, 0
        %2651 = vmatprep.subr.bf16.mxu0 0
        %2652 = vmatpush1.bf16.msra.mxu0 %v2640
        %2653 = vmatprep.subr.bf16.mxu0 0
        %2654 = vmatpush1.bf16.msra.mxu0 %v2641
        %2655 = vmatprep.subr.bf16.mxu0 0
        %2656 = vmatpush1.bf16.msra.mxu0 %v2642
        %2657 = vmatprep.subr.bf16.mxu0 0
        %2658 = vmatpush1.bf16.msra.mxu0 %v2643
        %2659 = vmatprep.subr.bf16.mxu0 0
        %2660 = vmatpush1.bf16.msra.mxu0 0
        %2661 = vmatprep.subr.bf16.mxu0 0
        %2662 = vmatpush1.bf16.msra.mxu0 0
        %2663 = vmatprep.subr.bf16.mxu0 0
        %2664 = vmatpush1.bf16.msra.mxu0 0
        %2665 = vmatprep.subr.bf16.mxu0 0
        %2666 = vmatpush1.bf16.msra.mxu0 0
        %2667 = vmatprep.subr.bf16.mxu0 0
        %2668 = vmatpush1.bf16.msra.mxu0 0
        %2669 = vmatprep.subr.bf16.mxu0 0
        %2670 = vmatpush1.bf16.msra.mxu0 0
        %2671 = vmatprep.subr.bf16.mxu0 0
        %2672 = vmatpush1.bf16.msra.mxu0 0
        %2673 = vmatprep.subr.bf16.mxu0 0
        %2674 = vmatpush1.bf16.msra.mxu0 0
        %2675 = vmatprep.subr.bf16.mxu0 0
        %2676 = vmatpush1.bf16.msra.mxu0 0
        %2677 = vmatprep.subr.bf16.mxu0 0
        %2678 = vmatpush1.bf16.msra.mxu0 0
        %2679 = vmatprep.subr.bf16.mxu0 0
        %2680 = vmatpush1.bf16.msra.mxu0 0
        %2681 = vmatprep.subr.bf16.mxu0 0
        %2682 = vmatpush1.bf16.msra.mxu0 0
        %2683 = vmatprep.mubr.bf16.mxu0 0
        %2684 = vmatmul.mubr.bf16.gmra.mrb[0].mxu0 %v2649
        %v2685 = vpop.f32.mrb[0].mxu0
        %v2686 = vadd.f32 %v2623, %v2685
        %v2687 = vpop.f32.mrb[0].mxu0
        %v2688 = vpop.f32.mrb[0].mxu0
        %v2689 = vpop.f32.mrb[0].mxu0
        %2690 = vdwg.mxu0
        %v2691 = vadd.f32 %v2535, %v2686
        %v2692 = vsel %vm414, %v2691, 0.0
        %2693 = vadd.xlane.f32.xlu0 %v2692
        %v2694 = vpop.xlane.xlu0 %2693
        %v2695 = vmul.f32 %v2691, %v2691
        %v2696 = vsel %vm414, %v2695, 0.0
        %2697 = vadd.xlane.f32.xlu0 %v2696
        %v2698 = vpop.xlane.xlu0 %2697
        %v2699 = vmul.f32 %v2694, 0.03125
        %v2700 = vmul.f32 %v2698, 0.03125
        %v2701 = vmul.f32 %v2699, %v2699
        %v2702 = vsub.f32 %v2700, %v2701
        %v2703 = vsub.f32 %v2691, %v2699
        %v2704 = vadd.f32 %v2702, 1e-12
        %v2705 = vrsqrt.pop %v2704
        %v2706 = vmul.f32 %v2703, %v2705
        %v2707 = vld [vmem:[%s5 + $0x1f] sm:$0x1]
        %v2708 = vlaneseq
        %v2709 = vshrl.u32 %v2708, 7
        %v2710 = vsub.s32 0, %v2709
        %v2711 = vrot.slane %v2707, %v2710
        %v2712 = vmul.f32 %v2706, %v2711
        %v2713 = vld [vmem:[%s5 + $0x20] sm:$0x1]
        %v2714 = vlaneseq
        %v2715 = vshrl.u32 %v2714, 7
        %v2716 = vsub.s32 0, %v2715
        %v2717 = vrot.slane %v2713, %v2716
        %v2718 = vadd.f32 %v2712, %v2717
        %v2719 = vld [vmem:[#allocation2 + $0x168] sm:$0xf]
        %v2720 = vld [vmem:[#allocation2 + $0x16c] sm:$0xf]
        %v2721 = vld [vmem:[#allocation2 + $0x170] sm:$0xf]
        %v2722 = vld [vmem:[#allocation2 + $0x174] sm:$0xf]
        %v2723 = vpack.c.bf16 %v2718, %v2718
        %v2724 = vld [vmem:[%s5 + $0x21] sm:$0x1]
        %v2725 = vlaneseq
        %v2726 = vshrl.u32 %v2725, 7
        %v2727 = vsub.s32 0, %v2726
        %v2728 = vrot.slane %v2724, %v2727
        %v2733 = vunpack.c.l.b16 %v2719
        %v2734 = vunpack.c.l.b16 %v2720
        %v2735 = vunpack.c.l.b16 %v2721
        %v2736 = vunpack.c.l.b16 %v2722
        %v2737 = vpack.c.b16 %v2734, %v2733
        %v2738 = vpack.c.b16 %v2736, %v2735
        %v2742 = vsel %vm414, %v2723, 0
        %2744 = vmatprep.subr.bf16.mxu0 0
        %2745 = vmatpush1.bf16.msra.mxu0 %v2737
        %2746 = vmatprep.subr.bf16.mxu0 0
        %2747 = vmatpush1.bf16.msra.mxu0 %v2738
        %2748 = vmatprep.subr.bf16.mxu0 0
        %2749 = vmatpush1.bf16.msra.mxu0 0
        %2750 = vmatprep.subr.bf16.mxu0 0
        %2751 = vmatpush1.bf16.msra.mxu0 0
        %2752 = vmatprep.subr.bf16.mxu0 0
        %2753 = vmatpush1.bf16.msra.mxu0 0
        %2754 = vmatprep.subr.bf16.mxu0 0
        %2755 = vmatpush1.bf16.msra.mxu0 0
        %2756 = vmatprep.subr.bf16.mxu0 0
        %2757 = vmatpush1.bf16.msra.mxu0 0
        %2758 = vmatprep.subr.bf16.mxu0 0
        %2759 = vmatpush1.bf16.msra.mxu0 0
        %2760 = vmatprep.subr.bf16.mxu0 0
        %2761 = vmatpush1.bf16.msra.mxu0 0
        %2762 = vmatprep.subr.bf16.mxu0 0
        %2763 = vmatpush1.bf16.msra.mxu0 0
        %2764 = vmatprep.subr.bf16.mxu0 0
        %2765 = vmatpush1.bf16.msra.mxu0 0
        %2766 = vmatprep.subr.bf16.mxu0 0
        %2767 = vmatpush1.bf16.msra.mxu0 0
        %2768 = vmatprep.subr.bf16.mxu0 0
        %2769 = vmatpush1.bf16.msra.mxu0 0
        %2770 = vmatprep.subr.bf16.mxu0 0
        %2771 = vmatpush1.bf16.msra.mxu0 0
        %2772 = vmatprep.subr.bf16.mxu0 0
        %2773 = vmatpush1.bf16.msra.mxu0 0
        %2774 = vmatprep.subr.bf16.mxu0 0
        %2775 = vmatpush1.bf16.msra.mxu0 0
        %2776 = vmatprep.mubr.bf16.mxu0 0
        %2777 = vmatmul.mubr.bf16.gmra.mrb[0].mxu0 %v2742
        %v2778 = vpop.f32.mrb[0].mxu0
        %v2779 = vadd.f32 %v2728, %v2778
        %v2780 = vpop.f32.mrb[0].mxu0
        %v2781 = vpop.f32.mrb[0].mxu0
        %v2782 = vpop.f32.mrb[0].mxu0
        %2783 = vdwg.mxu0
        %v2784 = vmul.f32 %v2779, 0.25
        %v2785 = vpack.c.bf16 %v2784, %v2784
        %v2786 = vpack.c.bf16 %v2779, %v2779
        %2788 = vrot.lane.b32.xlu0 %v2786, 96
        %v2789 = vpop.permute.xlu0 %2788
        %v2791 = vsel %vm519, %v2785, 0
        %v2794 = vsel %vm519, %v2789, 0
        %2796 = vmatprep.subr.bf16.mxu0 0
        %2797 = vmatpush1.bf16.xpose.msra.mxu0 %v2794
        %2798 = vmatprep.subr.bf16.mxu0 0
        %2799 = vmatpush1.bf16.xpose.msra.mxu0 0
        %2800 = vmatprep.subr.bf16.mxu0 0
        %2801 = vmatpush1.bf16.xpose.msra.mxu0 0
        %2802 = vmatprep.subr.bf16.mxu0 0
        %2803 = vmatpush1.bf16.xpose.msra.mxu0 0
        %2804 = vmatprep.subr.bf16.mxu0 0
        %2805 = vmatpush1.bf16.xpose.msra.mxu0 0
        %2806 = vmatprep.subr.bf16.mxu0 0
        %2807 = vmatpush1.bf16.xpose.msra.mxu0 0
        %2808 = vmatprep.subr.bf16.mxu0 0
        %2809 = vmatpush1.bf16.xpose.msra.mxu0 0
        %2810 = vmatprep.subr.bf16.mxu0 0
        %2811 = vmatpush1.bf16.xpose.msra.mxu0 0
        %2812 = vmatprep.subr.bf16.mxu0 0
        %2813 = vmatpush1.bf16.xpose.msra.mxu0 0
        %2814 = vmatprep.subr.bf16.mxu0 0
        %2815 = vmatpush1.bf16.xpose.msra.mxu0 0
        %2816 = vmatprep.subr.bf16.mxu0 0
        %2817 = vmatpush1.bf16.xpose.msra.mxu0 0
        %2818 = vmatprep.subr.bf16.mxu0 0
        %2819 = vmatpush1.bf16.xpose.msra.mxu0 0
        %2820 = vmatprep.subr.bf16.mxu0 0
        %2821 = vmatpush1.bf16.xpose.msra.mxu0 0
        %2822 = vmatprep.subr.bf16.mxu0 0
        %2823 = vmatpush1.bf16.xpose.msra.mxu0 0
        %2824 = vmatprep.subr.bf16.mxu0 0
        %2825 = vmatpush1.bf16.xpose.msra.mxu0 0
        %2826 = vmatprep.subr.bf16.mxu0 0
        %2827 = vmatpush1.bf16.xpose.msra.mxu0 0
        %2828 = vmatprep.mubr.bf16.mxu0 0
        %2829 = vmatmul.mubr.bf16.gmra.mrb[0].mxu0 %v2791
        %v2830 = vpop.f32.mrb[0].mxu0
        %v2831 = vadd.f32 %v327, %v2830
        %v2832 = vpop.f32.mrb[0].mxu0
        %v2833 = vpop.f32.mrb[0].mxu0
        %v2834 = vpop.f32.mrb[0].mxu0
        %2835 = vdwg.mxu0
        %v2836 = vsel %vm566, %v2831, -inf
        %2837 = vmax.xlane.f32.xlu0 %v2836
        %v2838 = vpop.xlane.xlu0 %2837
        %v2839 = vsub.f32 %v2831, %v2838
        %v2840 = vmul.f32 %v2839, 1.442695
        %v2841 = vpow.pop %v2840
        %v2842 = vsel %vm566, %v2841, 0.0
        %2843 = vadd.xlane.f32.xlu0 %v2842
        %v2844 = vpop.xlane.xlu0 %2843
        %v2845 = vrcp.pop %v2844
        %v2846 = vmul.f32 %v2841, %v2845
        %v2847 = vpack.c.bf16 %v2846, %v2846
        %2848 = vrot.lane.b32.xlu0 %v2786, 64
        %v2849 = vpop.permute.xlu0 %2848
        %v2851 = vsel %vm566, %v2847, 0
        %v2854 = vsel %vm584, %v2849, 0
        %2856 = vmatprep.subr.bf16.mxu0 0
        %2857 = vmatpush1.bf16.msra.mxu0 %v2854
        %2858 = vmatprep.subr.bf16.mxu0 0
        %2859 = vmatpush1.bf16.msra.mxu0 0
        %2860 = vmatprep.subr.bf16.mxu0 0
        %2861 = vmatpush1.bf16.msra.mxu0 0
        %2862 = vmatprep.subr.bf16.mxu0 0
        %2863 = vmatpush1.bf16.msra.mxu0 0
        %2864 = vmatprep.subr.bf16.mxu0 0
        %2865 = vmatpush1.bf16.msra.mxu0 0
        %2866 = vmatprep.subr.bf16.mxu0 0
        %2867 = vmatpush1.bf16.msra.mxu0 0
        %2868 = vmatprep.subr.bf16.mxu0 0
        %2869 = vmatpush1.bf16.msra.mxu0 0
        %2870 = vmatprep.subr.bf16.mxu0 0
        %2871 = vmatpush1.bf16.msra.mxu0 0
        %2872 = vmatprep.subr.bf16.mxu0 0
        %2873 = vmatpush1.bf16.msra.mxu0 0
        %2874 = vmatprep.subr.bf16.mxu0 0
        %2875 = vmatpush1.bf16.msra.mxu0 0
        %2876 = vmatprep.subr.bf16.mxu0 0
        %2877 = vmatpush1.bf16.msra.mxu0 0
        %2878 = vmatprep.subr.bf16.mxu0 0
        %2879 = vmatpush1.bf16.msra.mxu0 0
        %2880 = vmatprep.subr.bf16.mxu0 0
        %2881 = vmatpush1.bf16.msra.mxu0 0
        %2882 = vmatprep.subr.bf16.mxu0 0
        %2883 = vmatpush1.bf16.msra.mxu0 0
        %2884 = vmatprep.subr.bf16.mxu0 0
        %2885 = vmatpush1.bf16.msra.mxu0 0
        %2886 = vmatprep.subr.bf16.mxu0 0
        %2887 = vmatpush1.bf16.msra.mxu0 0
        %2888 = vmatprep.mubr.bf16.mxu0 0
        %2889 = vmatmul.mubr.bf16.gmra.mrb[0].mxu0 %v2851
        %v2890 = vpop.f32.mrb[0].mxu0
        %v2891 = vadd.f32 0.0, %v2890
        %v2892 = vpop.f32.mrb[0].mxu0
        %v2893 = vpop.f32.mrb[0].mxu0
        %v2894 = vpop.f32.mrb[0].mxu0
        %2895 = vdwg.mxu0
        %2897 = vrot.lane.b32.xlu0 %v2785, 112
        %v2898 = vpop.permute.xlu0 %2897
        %2899 = vrot.lane.b32.xlu0 %v2786, 80
        %v2900 = vpop.permute.xlu0 %2899
        %v2902 = vsel %vm519, %v2898, 0
        %v2905 = vsel %vm519, %v2900, 0
        %2907 = vmatprep.subr.bf16.mxu0 0
        %2908 = vmatpush1.bf16.xpose.msra.mxu0 %v2905
        %2909 = vmatprep.subr.bf16.mxu0 0
        %2910 = vmatpush1.bf16.xpose.msra.mxu0 0
        %2911 = vmatprep.subr.bf16.mxu0 0
        %2912 = vmatpush1.bf16.xpose.msra.mxu0 0
        %2913 = vmatprep.subr.bf16.mxu0 0
        %2914 = vmatpush1.bf16.xpose.msra.mxu0 0
        %2915 = vmatprep.subr.bf16.mxu0 0
        %2916 = vmatpush1.bf16.xpose.msra.mxu0 0
        %2917 = vmatprep.subr.bf16.mxu0 0
        %2918 = vmatpush1.bf16.xpose.msra.mxu0 0
        %2919 = vmatprep.subr.bf16.mxu0 0
        %2920 = vmatpush1.bf16.xpose.msra.mxu0 0
        %2921 = vmatprep.subr.bf16.mxu0 0
        %2922 = vmatpush1.bf16.xpose.msra.mxu0 0
        %2923 = vmatprep.subr.bf16.mxu0 0
        %2924 = vmatpush1.bf16.xpose.msra.mxu0 0
        %2925 = vmatprep.subr.bf16.mxu0 0
        %2926 = vmatpush1.bf16.xpose.msra.mxu0 0
        %2927 = vmatprep.subr.bf16.mxu0 0
        %2928 = vmatpush1.bf16.xpose.msra.mxu0 0
        %2929 = vmatprep.subr.bf16.mxu0 0
        %2930 = vmatpush1.bf16.xpose.msra.mxu0 0
        %2931 = vmatprep.subr.bf16.mxu0 0
        %2932 = vmatpush1.bf16.xpose.msra.mxu0 0
        %2933 = vmatprep.subr.bf16.mxu0 0
        %2934 = vmatpush1.bf16.xpose.msra.mxu0 0
        %2935 = vmatprep.subr.bf16.mxu0 0
        %2936 = vmatpush1.bf16.xpose.msra.mxu0 0
        %2937 = vmatprep.subr.bf16.mxu0 0
        %2938 = vmatpush1.bf16.xpose.msra.mxu0 0
        %2939 = vmatprep.mubr.bf16.mxu0 0
        %2940 = vmatmul.mubr.bf16.gmra.mrb[0].mxu0 %v2902
        %v2941 = vpop.f32.mrb[0].mxu0
        %v2942 = vadd.f32 %v327, %v2941
        %v2943 = vpop.f32.mrb[0].mxu0
        %v2944 = vpop.f32.mrb[0].mxu0
        %v2945 = vpop.f32.mrb[0].mxu0
        %2946 = vdwg.mxu0
        %v2947 = vsel %vm566, %v2942, -inf
        %2948 = vmax.xlane.f32.xlu0 %v2947
        %v2949 = vpop.xlane.xlu0 %2948
        %v2950 = vsub.f32 %v2942, %v2949
        %v2951 = vmul.f32 %v2950, 1.442695
        %v2952 = vpow.pop %v2951
        %v2953 = vsel %vm566, %v2952, 0.0
        %2954 = vadd.xlane.f32.xlu0 %v2953
        %v2955 = vpop.xlane.xlu0 %2954
        %v2956 = vrcp.pop %v2955
        %v2957 = vmul.f32 %v2952, %v2956
        %v2958 = vpack.c.bf16 %v2957, %v2957
        %2959 = vrot.lane.b32.xlu0 %v2786, 48
        %v2960 = vpop.permute.xlu0 %2959
        %v2962 = vsel %vm566, %v2958, 0
        %v2965 = vsel %vm584, %v2960, 0
        %2967 = vmatprep.subr.bf16.mxu0 0
        %2968 = vmatpush1.bf16.msra.mxu0 %v2965
        %2969 = vmatprep.subr.bf16.mxu0 0
        %2970 = vmatpush1.bf16.msra.mxu0 0
        %2971 = vmatprep.subr.bf16.mxu0 0
        %2972 = vmatpush1.bf16.msra.mxu0 0
        %2973 = vmatprep.subr.bf16.mxu0 0
        %2974 = vmatpush1.bf16.msra.mxu0 0
        %2975 = vmatprep.subr.bf16.mxu0 0
        %2976 = vmatpush1.bf16.msra.mxu0 0
        %2977 = vmatprep.subr.bf16.mxu0 0
        %2978 = vmatpush1.bf16.msra.mxu0 0
        %2979 = vmatprep.subr.bf16.mxu0 0
        %2980 = vmatpush1.bf16.msra.mxu0 0
        %2981 = vmatprep.subr.bf16.mxu0 0
        %2982 = vmatpush1.bf16.msra.mxu0 0
        %2983 = vmatprep.subr.bf16.mxu0 0
        %2984 = vmatpush1.bf16.msra.mxu0 0
        %2985 = vmatprep.subr.bf16.mxu0 0
        %2986 = vmatpush1.bf16.msra.mxu0 0
        %2987 = vmatprep.subr.bf16.mxu0 0
        %2988 = vmatpush1.bf16.msra.mxu0 0
        %2989 = vmatprep.subr.bf16.mxu0 0
        %2990 = vmatpush1.bf16.msra.mxu0 0
        %2991 = vmatprep.subr.bf16.mxu0 0
        %2992 = vmatpush1.bf16.msra.mxu0 0
        %2993 = vmatprep.subr.bf16.mxu0 0
        %2994 = vmatpush1.bf16.msra.mxu0 0
        %2995 = vmatprep.subr.bf16.mxu0 0
        %2996 = vmatpush1.bf16.msra.mxu0 0
        %2997 = vmatprep.subr.bf16.mxu0 0
        %2998 = vmatpush1.bf16.msra.mxu0 0
        %2999 = vmatprep.mubr.bf16.mxu0 0
        %3000 = vmatmul.mubr.bf16.gmra.mrb[0].mxu0 %v2962
        %v3001 = vpop.f32.mrb[0].mxu0
        %v3002 = vadd.f32 0.0, %v3001
        %v3003 = vpop.f32.mrb[0].mxu0
        %v3004 = vpop.f32.mrb[0].mxu0
        %v3005 = vpop.f32.mrb[0].mxu0
        %3006 = vdwg.mxu0
        %3008 = vrot.lane.b32.xlu0 %v3002, 16
        %v3009 = vpop.permute.xlu0 %3008
        %v3011 = vsel %vm519, %v2891, %v3009
        %v3012 = vld [vmem:[#allocation2 + $0x178] sm:$0xf]
        %v3013 = vld [vmem:[#allocation2 + $0x17c] sm:$0xf]
        %v3014 = vld [vmem:[#allocation2 + $0x180] sm:$0xf]
        %v3015 = vld [vmem:[#allocation2 + $0x184] sm:$0xf]
        %v3016 = vpack.c.bf16 %v3011, %v3011
        %v3017 = vld [vmem:[%s5 + $0x22] sm:$0x1]
        %v3018 = vlaneseq
        %v3019 = vshrl.u32 %v3018, 7
        %v3020 = vsub.s32 0, %v3019
        %v3021 = vrot.slane %v3017, %v3020
        %v3026 = vunpack.c.l.b16 %v3012
        %v3027 = vunpack.c.l.b16 %v3013
        %v3028 = vunpack.c.l.b16 %v3014
        %v3029 = vunpack.c.l.b16 %v3015
        %v3030 = vpack.c.b16 %v3027, %v3026
        %v3031 = vpack.c.b16 %v3029, %v3028
        %v3035 = vsel %vm414, %v3016, 0
        %3037 = vmatprep.subr.bf16.mxu0 0
        %3038 = vmatpush1.bf16.msra.mxu0 %v3030
        %3039 = vmatprep.subr.bf16.mxu0 0
        %3040 = vmatpush1.bf16.msra.mxu0 %v3031
        %3041 = vmatprep.subr.bf16.mxu0 0
        %3042 = vmatpush1.bf16.msra.mxu0 0
        %3043 = vmatprep.subr.bf16.mxu0 0
        %3044 = vmatpush1.bf16.msra.mxu0 0
        %3045 = vmatprep.subr.bf16.mxu0 0
        %3046 = vmatpush1.bf16.msra.mxu0 0
        %3047 = vmatprep.subr.bf16.mxu0 0
        %3048 = vmatpush1.bf16.msra.mxu0 0
        %3049 = vmatprep.subr.bf16.mxu0 0
        %3050 = vmatpush1.bf16.msra.mxu0 0
        %3051 = vmatprep.subr.bf16.mxu0 0
        %3052 = vmatpush1.bf16.msra.mxu0 0
        %3053 = vmatprep.subr.bf16.mxu0 0
        %3054 = vmatpush1.bf16.msra.mxu0 0
        %3055 = vmatprep.subr.bf16.mxu0 0
        %3056 = vmatpush1.bf16.msra.mxu0 0
        %3057 = vmatprep.subr.bf16.mxu0 0
        %3058 = vmatpush1.bf16.msra.mxu0 0
        %3059 = vmatprep.subr.bf16.mxu0 0
        %3060 = vmatpush1.bf16.msra.mxu0 0
        %3061 = vmatprep.subr.bf16.mxu0 0
        %3062 = vmatpush1.bf16.msra.mxu0 0
        %3063 = vmatprep.subr.bf16.mxu0 0
        %3064 = vmatpush1.bf16.msra.mxu0 0
        %3065 = vmatprep.subr.bf16.mxu0 0
        %3066 = vmatpush1.bf16.msra.mxu0 0
        %3067 = vmatprep.subr.bf16.mxu0 0
        %3068 = vmatpush1.bf16.msra.mxu0 0
        %3069 = vmatprep.mubr.bf16.mxu0 0
        %3070 = vmatmul.mubr.bf16.gmra.mrb[0].mxu0 %v3035
        %v3071 = vpop.f32.mrb[0].mxu0
        %v3072 = vadd.f32 %v3021, %v3071
        %v3073 = vpop.f32.mrb[0].mxu0
        %v3074 = vpop.f32.mrb[0].mxu0
        %v3075 = vpop.f32.mrb[0].mxu0
        %3076 = vdwg.mxu0
        %v3077 = vadd.f32 %v2718, %v3072
        %v3078 = vsel %vm414, %v3077, 0.0
        %3079 = vadd.xlane.f32.xlu0 %v3078
        %v3080 = vpop.xlane.xlu0 %3079
        %v3081 = vmul.f32 %v3077, %v3077
        %v3082 = vsel %vm414, %v3081, 0.0
        %3083 = vadd.xlane.f32.xlu0 %v3082
        %v3084 = vpop.xlane.xlu0 %3083
        %v3085 = vmul.f32 %v3080, 0.03125
        %v3086 = vmul.f32 %v3084, 0.03125
        %v3087 = vmul.f32 %v3085, %v3085
        %v3088 = vsub.f32 %v3086, %v3087
        %v3089 = vsub.f32 %v3077, %v3085
        %v3090 = vadd.f32 %v3088, 1e-12
        %v3091 = vrsqrt.pop %v3090
        %v3092 = vmul.f32 %v3089, %v3091
        %v3093 = vld [vmem:[%s5 + $0x28] sm:$0x1]
        %v3094 = vlaneseq
        %v3095 = vshrl.u32 %v3094, 7
        %v3096 = vsub.s32 0, %v3095
        %v3097 = vrot.slane %v3093, %v3096
        %v3098 = vmul.f32 %v3092, %v3097
        %v3099 = vld [vmem:[%s5 + $0x29] sm:$0x1]
        %v3100 = vlaneseq
        %v3101 = vshrl.u32 %v3100, 7
        %v3102 = vsub.s32 0, %v3101
        %v3103 = vrot.slane %v3099, %v3102
        %v3104 = vadd.f32 %v3098, %v3103
        %v3105 = vld [vmem:[#allocation2 + $0x188] sm:$0xf]
        %v3106 = vld [vmem:[#allocation2 + $0x18c] sm:$0xf]
        %v3107 = vld [vmem:[#allocation2 + $0x190] sm:$0xf]
        %v3108 = vld [vmem:[#allocation2 + $0x194] sm:$0xf]
        %v3109 = vpack.c.bf16 %v3104, %v3104
        %v3110 = vld [vmem:[%s5 + $0x23] sm:$0x1]
        %v3111 = vlaneseq
        %v3112 = vshrl.u32 %v3111, 7
        %v3113 = vsub.s32 0, %v3112
        %v3114 = vrot.slane %v3110, %v3113
        %v3119 = vunpack.c.l.b16 %v3105
        %v3120 = vunpack.c.l.b16 %v3106
        %v3121 = vunpack.c.l.b16 %v3107
        %v3122 = vunpack.c.l.b16 %v3108
        %v3123 = vpack.c.b16 %v3120, %v3119
        %v3124 = vpack.c.b16 %v3122, %v3121
        %v3128 = vsel %vm414, %v3109, 0
        %3130 = vmatprep.subr.bf16.mxu0 0
        %3131 = vmatpush1.bf16.msra.mxu0 %v3123
        %3132 = vmatprep.subr.bf16.mxu0 0
        %3133 = vmatpush1.bf16.msra.mxu0 %v3124
        %3134 = vmatprep.subr.bf16.mxu0 0
        %3135 = vmatpush1.bf16.msra.mxu0 0
        %3136 = vmatprep.subr.bf16.mxu0 0
        %3137 = vmatpush1.bf16.msra.mxu0 0
        %3138 = vmatprep.subr.bf16.mxu0 0
        %3139 = vmatpush1.bf16.msra.mxu0 0
        %3140 = vmatprep.subr.bf16.mxu0 0
        %3141 = vmatpush1.bf16.msra.mxu0 0
        %3142 = vmatprep.subr.bf16.mxu0 0
        %3143 = vmatpush1.bf16.msra.mxu0 0
        %3144 = vmatprep.subr.bf16.mxu0 0
        %3145 = vmatpush1.bf16.msra.mxu0 0
        %3146 = vmatprep.subr.bf16.mxu0 0
        %3147 = vmatpush1.bf16.msra.mxu0 0
        %3148 = vmatprep.subr.bf16.mxu0 0
        %3149 = vmatpush1.bf16.msra.mxu0 0
        %3150 = vmatprep.subr.bf16.mxu0 0
        %3151 = vmatpush1.bf16.msra.mxu0 0
        %3152 = vmatprep.subr.bf16.mxu0 0
        %3153 = vmatpush1.bf16.msra.mxu0 0
        %3154 = vmatprep.subr.bf16.mxu0 0
        %3155 = vmatpush1.bf16.msra.mxu0 0
        %3156 = vmatprep.subr.bf16.mxu0 0
        %3157 = vmatpush1.bf16.msra.mxu0 0
        %3158 = vmatprep.subr.bf16.mxu0 0
        %3159 = vmatpush1.bf16.msra.mxu0 0
        %3160 = vmatprep.subr.bf16.mxu0 0
        %3161 = vmatpush1.bf16.msra.mxu0 0
        %3162 = vmatprep.mubr.bf16.mxu0 0
        %3163 = vmatmul.mubr.bf16.gmra.mrb[0].mxu0 %v3128
        %v3164 = vpop.f32.mrb[0].mxu0
        %v3165 = vadd.f32 %v3114, %v3164
        %v3166 = vpop.f32.mrb[0].mxu0
        %v3167 = vpop.f32.mrb[0].mxu0
        %v3168 = vpop.f32.mrb[0].mxu0
        %3169 = vdwg.mxu0
        %v3170 = vmul.f32 %v3165, 0.25
        %v3171 = vld [vmem:[#allocation2 + $0x198] sm:$0xf]
        %v3172 = vld [vmem:[#allocation2 + $0x19c] sm:$0xf]
        %v3173 = vld [vmem:[#allocation2 + $0x1a0] sm:$0xf]
        %v3174 = vld [vmem:[#allocation2 + $0x1a4] sm:$0xf]
        %v3175 = vld [vmem:[%s5 + $0x24] sm:$0x1]
        %v3176 = vlaneseq
        %v3177 = vshrl.u32 %v3176, 7
        %v3178 = vsub.s32 0, %v3177
        %v3179 = vrot.slane %v3175, %v3178
        %v3184 = vunpack.c.l.b16 %v3171
        %v3185 = vunpack.c.l.b16 %v3172
        %v3186 = vunpack.c.l.b16 %v3173
        %v3187 = vunpack.c.l.b16 %v3174
        %v3188 = vpack.c.b16 %v3185, %v3184
        %v3189 = vpack.c.b16 %v3187, %v3186
        %3192 = vmatprep.subr.bf16.mxu0 0
        %3193 = vmatpush1.bf16.msra.mxu0 %v3188
        %3194 = vmatprep.subr.bf16.mxu0 0
        %3195 = vmatpush1.bf16.msra.mxu0 %v3189
        %3196 = vmatprep.subr.bf16.mxu0 0
        %3197 = vmatpush1.bf16.msra.mxu0 0
        %3198 = vmatprep.subr.bf16.mxu0 0
        %3199 = vmatpush1.bf16.msra.mxu0 0
        %3200 = vmatprep.subr.bf16.mxu0 0
        %3201 = vmatpush1.bf16.msra.mxu0 0
        %3202 = vmatprep.subr.bf16.mxu0 0
        %3203 = vmatpush1.bf16.msra.mxu0 0
        %3204 = vmatprep.subr.bf16.mxu0 0
        %3205 = vmatpush1.bf16.msra.mxu0 0
        %3206 = vmatprep.subr.bf16.mxu0 0
        %3207 = vmatpush1.bf16.msra.mxu0 0
        %3208 = vmatprep.subr.bf16.mxu0 0
        %3209 = vmatpush1.bf16.msra.mxu0 0
        %3210 = vmatprep.subr.bf16.mxu0 0
        %3211 = vmatpush1.bf16.msra.mxu0 0
        %3212 = vmatprep.subr.bf16.mxu0 0
        %3213 = vmatpush1.bf16.msra.mxu0 0
        %3214 = vmatprep.subr.bf16.mxu0 0
        %3215 = vmatpush1.bf16.msra.mxu0 0
        %3216 = vmatprep.subr.bf16.mxu0 0
        %3217 = vmatpush1.bf16.msra.mxu0 0
        %3218 = vmatprep.subr.bf16.mxu0 0
        %3219 = vmatpush1.bf16.msra.mxu0 0
        %3220 = vmatprep.subr.bf16.mxu0 0
        %3221 = vmatpush1.bf16.msra.mxu0 0
        %3222 = vmatprep.subr.bf16.mxu0 0
        %3223 = vmatpush1.bf16.msra.mxu0 0
        %3224 = vmatprep.mubr.bf16.mxu0 0
        %3225 = vmatmul.mubr.bf16.gmra.mrb[0].mxu0 %v2176
        %v3226 = vpop.f32.mrb[0].mxu0
        %v3227 = vadd.f32 %v3179, %v3226
        %v3228 = vpop.f32.mrb[0].mxu0
        %v3229 = vpop.f32.mrb[0].mxu0
        %v3230 = vpop.f32.mrb[0].mxu0
        %3231 = vdwg.mxu0
        %v3232 = vpack.c.bf16 %v3170, %v3170
        %v3233 = vpack.c.bf16 %v3227, %v3227
        %v3235 = vsel %vm519, %v3232, 0
        %v3238 = vsel %vm519, %v3233, 0
        %3240 = vmatprep.subr.bf16.mxu0 0
        %3241 = vmatpush1.bf16.xpose.msra.mxu0 %v3238
        %3242 = vmatprep.subr.bf16.mxu0 0
        %3243 = vmatpush1.bf16.xpose.msra.mxu0 0
        %3244 = vmatprep.subr.bf16.mxu0 0
        %3245 = vmatpush1.bf16.xpose.msra.mxu0 0
        %3246 = vmatprep.subr.bf16.mxu0 0
        %3247 = vmatpush1.bf16.xpose.msra.mxu0 0
        %3248 = vmatprep.subr.bf16.mxu0 0
        %3249 = vmatpush1.bf16.xpose.msra.mxu0 0
        %3250 = vmatprep.subr.bf16.mxu0 0
        %3251 = vmatpush1.bf16.xpose.msra.mxu0 0
        %3252 = vmatprep.subr.bf16.mxu0 0
        %3253 = vmatpush1.bf16.xpose.msra.mxu0 0
        %3254 = vmatprep.subr.bf16.mxu0 0
        %3255 = vmatpush1.bf16.xpose.msra.mxu0 0
        %3256 = vmatprep.subr.bf16.mxu0 0
        %3257 = vmatpush1.bf16.xpose.msra.mxu0 0
        %3258 = vmatprep.subr.bf16.mxu0 0
        %3259 = vmatpush1.bf16.xpose.msra.mxu0 0
        %3260 = vmatprep.subr.bf16.mxu0 0
        %3261 = vmatpush1.bf16.xpose.msra.mxu0 0
        %3262 = vmatprep.subr.bf16.mxu0 0
        %3263 = vmatpush1.bf16.xpose.msra.mxu0 0
        %3264 = vmatprep.subr.bf16.mxu0 0
        %3265 = vmatpush1.bf16.xpose.msra.mxu0 0
        %3266 = vmatprep.subr.bf16.mxu0 0
        %3267 = vmatpush1.bf16.xpose.msra.mxu0 0
        %3268 = vmatprep.subr.bf16.mxu0 0
        %3269 = vmatpush1.bf16.xpose.msra.mxu0 0
        %3270 = vmatprep.subr.bf16.mxu0 0
        %3271 = vmatpush1.bf16.xpose.msra.mxu0 0
        %3272 = vmatprep.mubr.bf16.mxu0 0
        %3273 = vmatmul.mubr.bf16.gmra.mrb[0].mxu0 %v3235
        %v3274 = vpop.f32.mrb[0].mxu0
        %v3275 = vadd.f32 %v514, %v3274
        %v3276 = vpop.f32.mrb[0].mxu0
        %v3277 = vpop.f32.mrb[0].mxu0
        %v3278 = vpop.f32.mrb[0].mxu0
        %3279 = vdwg.mxu0
        %v3280 = vsel %vm566, %v3275, -inf
        %3281 = vmax.xlane.f32.xlu0 %v3280
        %v3282 = vpop.xlane.xlu0 %3281
        %v3283 = vsub.f32 %v3275, %v3282
        %v3284 = vmul.f32 %v3283, 1.442695
        %v3285 = vpow.pop %v3284
        %v3286 = vsel %vm566, %v3285, 0.0
        %3287 = vadd.xlane.f32.xlu0 %v3286
        %v3288 = vpop.xlane.xlu0 %3287
        %v3289 = vrcp.pop %v3288
        %v3290 = vmul.f32 %v3285, %v3289
        %v3291 = vpack.c.bf16 %v3290, %v3290
        %3293 = vrot.lane.b32.xlu0 %v3233, 96
        %v3294 = vpop.permute.xlu0 %3293
        %v3296 = vsel %vm566, %v3291, 0
        %v3299 = vsel %vm584, %v3294, 0
        %3301 = vmatprep.subr.bf16.mxu0 0
        %3302 = vmatpush1.bf16.msra.mxu0 %v3299
        %3303 = vmatprep.subr.bf16.mxu0 0
        %3304 = vmatpush1.bf16.msra.mxu0 0
        %3305 = vmatprep.subr.bf16.mxu0 0
        %3306 = vmatpush1.bf16.msra.mxu0 0
        %3307 = vmatprep.subr.bf16.mxu0 0
        %3308 = vmatpush1.bf16.msra.mxu0 0
        %3309 = vmatprep.subr.bf16.mxu0 0
        %3310 = vmatpush1.bf16.msra.mxu0 0
        %3311 = vmatprep.subr.bf16.mxu0 0
        %3312 = vmatpush1.bf16.msra.mxu0 0
        %3313 = vmatprep.subr.bf16.mxu0 0
        %3314 = vmatpush1.bf16.msra.mxu0 0
        %3315 = vmatprep.subr.bf16.mxu0 0
        %3316 = vmatpush1.bf16.msra.mxu0 0
        %3317 = vmatprep.subr.bf16.mxu0 0
        %3318 = vmatpush1.bf16.msra.mxu0 0
        %3319 = vmatprep.subr.bf16.mxu0 0
        %3320 = vmatpush1.bf16.msra.mxu0 0
        %3321 = vmatprep.subr.bf16.mxu0 0
        %3322 = vmatpush1.bf16.msra.mxu0 0
        %3323 = vmatprep.subr.bf16.mxu0 0
        %3324 = vmatpush1.bf16.msra.mxu0 0
        %3325 = vmatprep.subr.bf16.mxu0 0
        %3326 = vmatpush1.bf16.msra.mxu0 0
        %3327 = vmatprep.subr.bf16.mxu0 0
        %3328 = vmatpush1.bf16.msra.mxu0 0
        %3329 = vmatprep.subr.bf16.mxu0 0
        %3330 = vmatpush1.bf16.msra.mxu0 0
        %3331 = vmatprep.subr.bf16.mxu0 0
        %3332 = vmatpush1.bf16.msra.mxu0 0
        %3333 = vmatprep.mubr.bf16.mxu0 0
        %3334 = vmatmul.mubr.bf16.gmra.mrb[0].mxu0 %v3296
        %v3335 = vpop.f32.mrb[0].mxu0
        %v3336 = vadd.f32 0.0, %v3335
        %v3337 = vpop.f32.mrb[0].mxu0
        %v3338 = vpop.f32.mrb[0].mxu0
        %v3339 = vpop.f32.mrb[0].mxu0
        %3340 = vdwg.mxu0
        %3342 = vrot.lane.b32.xlu0 %v3232, 112
        %v3343 = vpop.permute.xlu0 %3342
        %3344 = vrot.lane.b32.xlu0 %v3233, 112
        %v3345 = vpop.permute.xlu0 %3344
        %v3347 = vsel %vm519, %v3343, 0
        %v3350 = vsel %vm519, %v3345, 0
        %3352 = vmatprep.subr.bf16.mxu0 0
        %3353 = vmatpush1.bf16.xpose.msra.mxu0 %v3350
        %3354 = vmatprep.subr.bf16.mxu0 0
        %3355 = vmatpush1.bf16.xpose.msra.mxu0 0
        %3356 = vmatprep.subr.bf16.mxu0 0
        %3357 = vmatpush1.bf16.xpose.msra.mxu0 0
        %3358 = vmatprep.subr.bf16.mxu0 0
        %3359 = vmatpush1.bf16.xpose.msra.mxu0 0
        %3360 = vmatprep.subr.bf16.mxu0 0
        %3361 = vmatpush1.bf16.xpose.msra.mxu0 0
        %3362 = vmatprep.subr.bf16.mxu0 0
        %3363 = vmatpush1.bf16.xpose.msra.mxu0 0
        %3364 = vmatprep.subr.bf16.mxu0 0
        %3365 = vmatpush1.bf16.xpose.msra.mxu0 0
        %3366 = vmatprep.subr.bf16.mxu0 0
        %3367 = vmatpush1.bf16.xpose.msra.mxu0 0
        %3368 = vmatprep.subr.bf16.mxu0 0
        %3369 = vmatpush1.bf16.xpose.msra.mxu0 0
        %3370 = vmatprep.subr.bf16.mxu0 0
        %3371 = vmatpush1.bf16.xpose.msra.mxu0 0
        %3372 = vmatprep.subr.bf16.mxu0 0
        %3373 = vmatpush1.bf16.xpose.msra.mxu0 0
        %3374 = vmatprep.subr.bf16.mxu0 0
        %3375 = vmatpush1.bf16.xpose.msra.mxu0 0
        %3376 = vmatprep.subr.bf16.mxu0 0
        %3377 = vmatpush1.bf16.xpose.msra.mxu0 0
        %3378 = vmatprep.subr.bf16.mxu0 0
        %3379 = vmatpush1.bf16.xpose.msra.mxu0 0
        %3380 = vmatprep.subr.bf16.mxu0 0
        %3381 = vmatpush1.bf16.xpose.msra.mxu0 0
        %3382 = vmatprep.subr.bf16.mxu0 0
        %3383 = vmatpush1.bf16.xpose.msra.mxu0 0
        %3384 = vmatprep.mubr.bf16.mxu0 0
        %3385 = vmatmul.mubr.bf16.gmra.mrb[0].mxu0 %v3347
        %v3386 = vpop.f32.mrb[0].mxu0
        %v3387 = vadd.f32 %v514, %v3386
        %v3388 = vpop.f32.mrb[0].mxu0
        %v3389 = vpop.f32.mrb[0].mxu0
        %v3390 = vpop.f32.mrb[0].mxu0
        %3391 = vdwg.mxu0
        %v3392 = vsel %vm566, %v3387, -inf
        %3393 = vmax.xlane.f32.xlu0 %v3392
        %v3394 = vpop.xlane.xlu0 %3393
        %v3395 = vsub.f32 %v3387, %v3394
        %v3396 = vmul.f32 %v3395, 1.442695
        %v3397 = vpow.pop %v3396
        %v3398 = vsel %vm566, %v3397, 0.0
        %3399 = vadd.xlane.f32.xlu0 %v3398
        %v3400 = vpop.xlane.xlu0 %3399
        %v3401 = vrcp.pop %v3400
        %v3402 = vmul.f32 %v3397, %v3401
        %v3403 = vpack.c.bf16 %v3402, %v3402
        %3404 = vrot.lane.b32.xlu0 %v3233, 80
        %v3405 = vpop.permute.xlu0 %3404
        %v3407 = vsel %vm566, %v3403, 0
        %v3410 = vsel %vm584, %v3405, 0
        %3412 = vmatprep.subr.bf16.mxu0 0
        %3413 = vmatpush1.bf16.msra.mxu0 %v3410
        %3414 = vmatprep.subr.bf16.mxu0 0
        %3415 = vmatpush1.bf16.msra.mxu0 0
        %3416 = vmatprep.subr.bf16.mxu0 0
        %3417 = vmatpush1.bf16.msra.mxu0 0
        %3418 = vmatprep.subr.bf16.mxu0 0
        %3419 = vmatpush1.bf16.msra.mxu0 0
        %3420 = vmatprep.subr.bf16.mxu0 0
        %3421 = vmatpush1.bf16.msra.mxu0 0
        %3422 = vmatprep.subr.bf16.mxu0 0
        %3423 = vmatpush1.bf16.msra.mxu0 0
        %3424 = vmatprep.subr.bf16.mxu0 0
        %3425 = vmatpush1.bf16.msra.mxu0 0
        %3426 = vmatprep.subr.bf16.mxu0 0
        %3427 = vmatpush1.bf16.msra.mxu0 0
        %3428 = vmatprep.subr.bf16.mxu0 0
        %3429 = vmatpush1.bf16.msra.mxu0 0
        %3430 = vmatprep.subr.bf16.mxu0 0
        %3431 = vmatpush1.bf16.msra.mxu0 0
        %3432 = vmatprep.subr.bf16.mxu0 0
        %3433 = vmatpush1.bf16.msra.mxu0 0
        %3434 = vmatprep.subr.bf16.mxu0 0
        %3435 = vmatpush1.bf16.msra.mxu0 0
        %3436 = vmatprep.subr.bf16.mxu0 0
        %3437 = vmatpush1.bf16.msra.mxu0 0
        %3438 = vmatprep.subr.bf16.mxu0 0
        %3439 = vmatpush1.bf16.msra.mxu0 0
        %3440 = vmatprep.subr.bf16.mxu0 0
        %3441 = vmatpush1.bf16.msra.mxu0 0
        %3442 = vmatprep.subr.bf16.mxu0 0
        %3443 = vmatpush1.bf16.msra.mxu0 0
        %3444 = vmatprep.mubr.bf16.mxu0 0
        %3445 = vmatmul.mubr.bf16.gmra.mrb[0].mxu0 %v3407
        %v3446 = vpop.f32.mrb[0].mxu0
        %v3447 = vadd.f32 0.0, %v3446
        %v3448 = vpop.f32.mrb[0].mxu0
        %v3449 = vpop.f32.mrb[0].mxu0
        %v3450 = vpop.f32.mrb[0].mxu0
        %3451 = vdwg.mxu0
        %3453 = vrot.lane.b32.xlu0 %v3447, 16
        %v3454 = vpop.permute.xlu0 %3453
        %v3456 = vsel %vm519, %v3336, %v3454
        %v3457 = vld [vmem:[#allocation2 + $0x1a8] sm:$0xf]
        %v3458 = vld [vmem:[#allocation2 + $0x1ac] sm:$0xf]
        %v3459 = vld [vmem:[#allocation2 + $0x1b0] sm:$0xf]
        %v3460 = vld [vmem:[#allocation2 + $0x1b4] sm:$0xf]
        %v3461 = vpack.c.bf16 %v3456, %v3456
        %v3462 = vld [vmem:[%s5 + $0x25] sm:$0x1]
        %v3463 = vlaneseq
        %v3464 = vshrl.u32 %v3463, 7
        %v3465 = vsub.s32 0, %v3464
        %v3466 = vrot.slane %v3462, %v3465
        %v3471 = vunpack.c.l.b16 %v3457
        %v3472 = vunpack.c.l.b16 %v3458
        %v3473 = vunpack.c.l.b16 %v3459
        %v3474 = vunpack.c.l.b16 %v3460
        %v3475 = vpack.c.b16 %v3472, %v3471
        %v3476 = vpack.c.b16 %v3474, %v3473
        %v3480 = vsel %vm414, %v3461, 0
        %3482 = vmatprep.subr.bf16.mxu0 0
        %3483 = vmatpush1.bf16.msra.mxu0 %v3475
        %3484 = vmatprep.subr.bf16.mxu0 0
        %3485 = vmatpush1.bf16.msra.mxu0 %v3476
        %3486 = vmatprep.subr.bf16.mxu0 0
        %3487 = vmatpush1.bf16.msra.mxu0 0
        %3488 = vmatprep.subr.bf16.mxu0 0
        %3489 = vmatpush1.bf16.msra.mxu0 0
        %3490 = vmatprep.subr.bf16.mxu0 0
        %3491 = vmatpush1.bf16.msra.mxu0 0
        %3492 = vmatprep.subr.bf16.mxu0 0
        %3493 = vmatpush1.bf16.msra.mxu0 0
        %3494 = vmatprep.subr.bf16.mxu0 0
        %3495 = vmatpush1.bf16.msra.mxu0 0
        %3496 = vmatprep.subr.bf16.mxu0 0
        %3497 = vmatpush1.bf16.msra.mxu0 0
        %3498 = vmatprep.subr.bf16.mxu0 0
        %3499 = vmatpush1.bf16.msra.mxu0 0
        %3500 = vmatprep.subr.bf16.mxu0 0
        %3501 = vmatpush1.bf16.msra.mxu0 0
        %3502 = vmatprep.subr.bf16.mxu0 0
        %3503 = vmatpush1.bf16.msra.mxu0 0
        %3504 = vmatprep.subr.bf16.mxu0 0
        %3505 = vmatpush1.bf16.msra.mxu0 0
        %3506 = vmatprep.subr.bf16.mxu0 0
        %3507 = vmatpush1.bf16.msra.mxu0 0
        %3508 = vmatprep.subr.bf16.mxu0 0
        %3509 = vmatpush1.bf16.msra.mxu0 0
        %3510 = vmatprep.subr.bf16.mxu0 0
        %3511 = vmatpush1.bf16.msra.mxu0 0
        %3512 = vmatprep.subr.bf16.mxu0 0
        %3513 = vmatpush1.bf16.msra.mxu0 0
        %3514 = vmatprep.mubr.bf16.mxu0 0
        %3515 = vmatmul.mubr.bf16.gmra.mrb[0].mxu0 %v3480
        %v3516 = vpop.f32.mrb[0].mxu0
        %v3517 = vadd.f32 %v3466, %v3516
        %v3518 = vpop.f32.mrb[0].mxu0
        %v3519 = vpop.f32.mrb[0].mxu0
        %v3520 = vpop.f32.mrb[0].mxu0
        %3521 = vdwg.mxu0
        %v3522 = vadd.f32 %v3104, %v3517
        %v3523 = vsel %vm414, %v3522, 0.0
        %3524 = vadd.xlane.f32.xlu0 %v3523
        %v3525 = vpop.xlane.xlu0 %3524
        %v3526 = vmul.f32 %v3522, %v3522
        %v3527 = vsel %vm414, %v3526, 0.0
        %3528 = vadd.xlane.f32.xlu0 %v3527
        %v3529 = vpop.xlane.xlu0 %3528
        %v3530 = vmul.f32 %v3525, 0.03125
        %v3531 = vmul.f32 %v3529, 0.03125
        %v3532 = vmul.f32 %v3530, %v3530
        %v3533 = vsub.f32 %v3531, %v3532
        %v3534 = vsub.f32 %v3522, %v3530
        %v3535 = vadd.f32 %v3533, 1e-12
        %v3536 = vrsqrt.pop %v3535
        %v3537 = vmul.f32 %v3534, %v3536
        %v3538 = vld [vmem:[%s5 + $0x2a] sm:$0x1]
        %v3539 = vlaneseq
        %v3540 = vshrl.u32 %v3539, 7
        %v3541 = vsub.s32 0, %v3540
        %v3542 = vrot.slane %v3538, %v3541
        %v3543 = vmul.f32 %v3537, %v3542
        %v3544 = vld [vmem:[%s5 + $0x2b] sm:$0x1]
        %v3545 = vlaneseq
        %v3546 = vshrl.u32 %v3545, 7
        %v3547 = vsub.s32 0, %v3546
        %v3548 = vrot.slane %v3544, %v3547
        %v3549 = vadd.f32 %v3543, %v3548
        %v3550 = vld [vmem:[#allocation2 + $0x1b8] sm:$0xf]
        %v3551 = vld [vmem:[#allocation2 + $0x1bc] sm:$0xf]
        %v3552 = vld [vmem:[#allocation2 + $0x1c0] sm:$0xf]
        %v3553 = vld [vmem:[#allocation2 + $0x1c4] sm:$0xf]
        %v3554 = vpack.c.bf16 %v3549, %v3549
        %v3555 = vld [vmem:[%s5 + $0x26] sm:$0x1]
        %v3556 = vlaneseq
        %v3557 = vshrl.u32 %v3556, 7
        %v3558 = vsub.s32 0, %v3557
        %v3559 = vrot.slane %v3555, %v3558
        %v3564 = vunpack.c.l.b16 %v3550
        %v3565 = vunpack.c.l.b16 %v3551
        %v3566 = vunpack.c.l.b16 %v3552
        %v3567 = vunpack.c.l.b16 %v3553
        %v3568 = vpack.c.b16 %v3565, %v3564
        %v3569 = vpack.c.b16 %v3567, %v3566
        %v3573 = vsel %vm414, %v3554, 0
        %3575 = vmatprep.subr.bf16.mxu0 0
        %3576 = vmatpush1.bf16.msra.mxu0 %v3568
        %3577 = vmatprep.subr.bf16.mxu0 0
        %3578 = vmatpush1.bf16.msra.mxu0 %v3569
        %3579 = vmatprep.subr.bf16.mxu0 0
        %3580 = vmatpush1.bf16.msra.mxu0 0
        %3581 = vmatprep.subr.bf16.mxu0 0
        %3582 = vmatpush1.bf16.msra.mxu0 0
        %3583 = vmatprep.subr.bf16.mxu0 0
        %3584 = vmatpush1.bf16.msra.mxu0 0
        %3585 = vmatprep.subr.bf16.mxu0 0
        %3586 = vmatpush1.bf16.msra.mxu0 0
        %3587 = vmatprep.subr.bf16.mxu0 0
        %3588 = vmatpush1.bf16.msra.mxu0 0
        %3589 = vmatprep.subr.bf16.mxu0 0
        %3590 = vmatpush1.bf16.msra.mxu0 0
        %3591 = vmatprep.subr.bf16.mxu0 0
        %3592 = vmatpush1.bf16.msra.mxu0 0
        %3593 = vmatprep.subr.bf16.mxu0 0
        %3594 = vmatpush1.bf16.msra.mxu0 0
        %3595 = vmatprep.subr.bf16.mxu0 0
        %3596 = vmatpush1.bf16.msra.mxu0 0
        %3597 = vmatprep.subr.bf16.mxu0 0
        %3598 = vmatpush1.bf16.msra.mxu0 0
        %3599 = vmatprep.subr.bf16.mxu0 0
        %3600 = vmatpush1.bf16.msra.mxu0 0
        %3601 = vmatprep.subr.bf16.mxu0 0
        %3602 = vmatpush1.bf16.msra.mxu0 0
        %3603 = vmatprep.subr.bf16.mxu0 0
        %3604 = vmatpush1.bf16.msra.mxu0 0
        %3605 = vmatprep.subr.bf16.mxu0 0
        %3606 = vmatpush1.bf16.msra.mxu0 0
        %3607 = vmatprep.mubr.bf16.mxu0 0
        %3608 = vmatmul.mubr.bf16.gmra.mrb[0].mxu0 %v3573
        %v3609 = vpop.f32.mrb[0].mxu0
        %v3610 = vadd.f32 %v3559, %v3609
        %v3611 = vpop.f32.mrb[0].mxu0
        %v3612 = vpop.f32.mrb[0].mxu0
        %v3613 = vpop.f32.mrb[0].mxu0
        %3614 = vdwg.mxu0
        %v3615 = vmul.f32 %v3610, 0.5
        %v3616 = vmul.f32 %v3610, 0.044715
        %v3617 = vmul.f32 %v3616, %v3610
        %v3618 = vmul.f32 %v3617, %v3610
        %v3619 = vadd.f32 %v3610, %v3618
        %v3620 = vmul.f32 %v3619, 0.7978846
        %v3621 = vtanh.pop %v3620
        %v3622 = vadd.f32 %v3621, 1.0
        %v3623 = vmul.f32 %v3615, %v3622
        %v3624 = vld [vmem:[#allocation2 + $0x1c8] sm:$0xf]
        %v3625 = vld [vmem:[#allocation2 + $0x1cc] sm:$0xf]
        %v3626 = vld [vmem:[#allocation2 + $0x1d0] sm:$0xf]
        %v3627 = vld [vmem:[#allocation2 + $0x1d4] sm:$0xf]
        %v3628 = vld [vmem:[#allocation2 + $0x1d8] sm:$0xf]
        %v3629 = vld [vmem:[#allocation2 + $0x1dc] sm:$0xf]
        %v3630 = vld [vmem:[#allocation2 + $0x1e0] sm:$0xf]
        %v3631 = vld [vmem:[#allocation2 + $0x1e4] sm:$0xf]
        %v3632 = vpack.c.bf16 %v3623, %v3623
        %v3633 = vld [vmem:[%s5 + $0x27] sm:$0x1]
        %v3634 = vlaneseq
        %v3635 = vshrl.u32 %v3634, 7
        %v3636 = vsub.s32 0, %v3635
        %v3637 = vrot.slane %v3633, %v3636
        %v3646 = vunpack.c.l.b16 %v3624
        %v3647 = vunpack.c.l.b16 %v3625
        %v3648 = vunpack.c.l.b16 %v3626
        %v3649 = vunpack.c.l.b16 %v3627
        %v3650 = vunpack.c.l.b16 %v3628
        %v3651 = vunpack.c.l.b16 %v3629
        %v3652 = vunpack.c.l.b16 %v3630
        %v3653 = vunpack.c.l.b16 %v3631
        %v3654 = vpack.c.b16 %v3647, %v3646
        %v3655 = vpack.c.b16 %v3649, %v3648
        %v3656 = vpack.c.b16 %v3651, %v3650
        %v3657 = vpack.c.b16 %v3653, %v3652
        %v3663 = vsel %vm370, %v3632, 0
        %3665 = vmatprep.subr.bf16.mxu0 0
        %3666 = vmatpush1.bf16.msra.mxu0 %v3654
        %3667 = vmatprep.subr.bf16.mxu0 0
        %3668 = vmatpush1.bf16.msra.mxu0 %v3655
        %3669 = vmatprep.subr.bf16.mxu0 0
        %3670 = vmatpush1.bf16.msra.mxu0 %v3656
        %3671 = vmatprep.subr.bf16.mxu0 0
        %3672 = vmatpush1.bf16.msra.mxu0 %v3657
        %3673 = vmatprep.subr.bf16.mxu0 0
        %3674 = vmatpush1.bf16.msra.mxu0 0
        %3675 = vmatprep.subr.bf16.mxu0 0
        %3676 = vmatpush1.bf16.msra.mxu0 0
        %3677 = vmatprep.subr.bf16.mxu0 0
        %3678 = vmatpush1.bf16.msra.mxu0 0
        %3679 = vmatprep.subr.bf16.mxu0 0
        %3680 = vmatpush1.bf16.msra.mxu0 0
        %3681 = vmatprep.subr.bf16.mxu0 0
        %3682 = vmatpush1.bf16.msra.mxu0 0
        %3683 = vmatprep.subr.bf16.mxu0 0
        %3684 = vmatpush1.bf16.msra.mxu0 0
        %3685 = vmatprep.subr.bf16.mxu0 0
        %3686 = vmatpush1.bf16.msra.mxu0 0
        %3687 = vmatprep.subr.bf16.mxu0 0
        %3688 = vmatpush1.bf16.msra.mxu0 0
        %3689 = vmatprep.subr.bf16.mxu0 0
        %3690 = vmatpush1.bf16.msra.mxu0 0
        %3691 = vmatprep.subr.bf16.mxu0 0
        %3692 = vmatpush1.bf16.msra.mxu0 0
        %3693 = vmatprep.subr.bf16.mxu0 0
        %3694 = vmatpush1.bf16.msra.mxu0 0
        %3695 = vmatprep.subr.bf16.mxu0 0
        %3696 = vmatpush1.bf16.msra.mxu0 0
        %3697 = vmatprep.mubr.bf16.mxu0 0
        %3698 = vmatmul.mubr.bf16.gmra.mrb[0].mxu0 %v3663
        %v3699 = vpop.f32.mrb[0].mxu0
        %v3700 = vadd.f32 %v3637, %v3699
        %v3701 = vpop.f32.mrb[0].mxu0
        %v3702 = vpop.f32.mrb[0].mxu0
        %v3703 = vpop.f32.mrb[0].mxu0
        %3704 = vdwg.mxu0
        %v3705 = vadd.f32 %v3549, %v3700
        %v3706 = vsel %vm414, %v3705, 0.0
        %3707 = vadd.xlane.f32.xlu0 %v3706
        %v3708 = vpop.xlane.xlu0 %3707
        %v3709 = vmul.f32 %v3705, %v3705
        %v3710 = vsel %vm414, %v3709, 0.0
        %3711 = vadd.xlane.f32.xlu0 %v3710
        %v3712 = vpop.xlane.xlu0 %3711
        %v3713 = vmul.f32 %v3708, 0.03125
        %v3714 = vmul.f32 %v3712, 0.03125
        %v3715 = vmul.f32 %v3713, %v3713
        %v3716 = vsub.f32 %v3714, %v3715
        %v3717 = vsub.f32 %v3705, %v3713
        %v3718 = vadd.f32 %v3716, 1e-12
        %v3719 = vrsqrt.pop %v3718
        %v3720 = vmul.f32 %v3717, %v3719
        %v3721 = vld [vmem:[%s5 + $0x2c] sm:$0x1]
        %v3722 = vlaneseq
        %v3723 = vshrl.u32 %v3722, 7
        %v3724 = vsub.s32 0, %v3723
        %v3725 = vrot.slane %v3721, %v3724
        %v3726 = vmul.f32 %v3720, %v3725
        %v3727 = vld [vmem:[%s5 + $0x2d] sm:$0x1]
        %v3728 = vlaneseq
        %v3729 = vshrl.u32 %v3728, 7
        %v3730 = vsub.s32 0, %v3729
        %v3731 = vrot.slane %v3727, %v3730
        %v3732 = vadd.f32 %v3726, %v3731
        %v3733 = vld [vmem:[#allocation2 + $0x1e8] sm:$0xf]
        %v3734 = vld [vmem:[#allocation2 + $0x1ec] sm:$0xf]
        %v3735 = vld [vmem:[#allocation2 + $0x1f0] sm:$0xf]
        %v3736 = vld [vmem:[#allocation2 + $0x1f4] sm:$0xf]
        %v3737 = vpack.c.bf16 %v3732, %v3732
        %v3738 = vld [vmem:[%s5 + $0x2e] sm:$0x1]
        %v3739 = vlaneseq
        %v3740 = vshrl.u32 %v3739, 7
        %v3741 = vsub.s32 0, %v3740
        %v3742 = vrot.slane %v3738, %v3741
        %v3747 = vunpack.c.l.b16 %v3733
        %v3748 = vunpack.c.l.b16 %v3734
        %v3749 = vunpack.c.l.b16 %v3735
        %v3750 = vunpack.c.l.b16 %v3736
        %v3751 = vpack.c.b16 %v3748, %v3747
        %v3752 = vpack.c.b16 %v3750, %v3749
        %v3756 = vsel %vm414, %v3737, 0
        %3758 = vmatprep.subr.bf16.mxu0 0
        %3759 = vmatpush1.bf16.msra.mxu0 %v3751
        %3760 = vmatprep.subr.bf16.mxu0 0
        %3761 = vmatpush1.bf16.msra.mxu0 %v3752
        %3762 = vmatprep.subr.bf16.mxu0 0
        %3763 = vmatpush1.bf16.msra.mxu0 0
        %3764 = vmatprep.subr.bf16.mxu0 0
        %3765 = vmatpush1.bf16.msra.mxu0 0
        %3766 = vmatprep.subr.bf16.mxu0 0
        %3767 = vmatpush1.bf16.msra.mxu0 0
        %3768 = vmatprep.subr.bf16.mxu0 0
        %3769 = vmatpush1.bf16.msra.mxu0 0
        %3770 = vmatprep.subr.bf16.mxu0 0
        %3771 = vmatpush1.bf16.msra.mxu0 0
        %3772 = vmatprep.subr.bf16.mxu0 0
        %3773 = vmatpush1.bf16.msra.mxu0 0
        %3774 = vmatprep.subr.bf16.mxu0 0
        %3775 = vmatpush1.bf16.msra.mxu0 0
        %3776 = vmatprep.subr.bf16.mxu0 0
        %3777 = vmatpush1.bf16.msra.mxu0 0
        %3778 = vmatprep.subr.bf16.mxu0 0
        %3779 = vmatpush1.bf16.msra.mxu0 0
        %3780 = vmatprep.subr.bf16.mxu0 0
        %3781 = vmatpush1.bf16.msra.mxu0 0
        %3782 = vmatprep.subr.bf16.mxu0 0
        %3783 = vmatpush1.bf16.msra.mxu0 0
        %3784 = vmatprep.subr.bf16.mxu0 0
        %3785 = vmatpush1.bf16.msra.mxu0 0
        %3786 = vmatprep.subr.bf16.mxu0 0
        %3787 = vmatpush1.bf16.msra.mxu0 0
        %3788 = vmatprep.subr.bf16.mxu0 0
        %3789 = vmatpush1.bf16.msra.mxu0 0
        %3790 = vmatprep.mubr.bf16.mxu0 0
        %3791 = vmatmul.mubr.bf16.gmra.mrb[0].mxu0 %v3756
        %v3792 = vpop.f32.mrb[0].mxu0
        %v3793 = vadd.f32 %v3742, %v3792
        %v3794 = vpop.f32.mrb[0].mxu0
        %v3795 = vpop.f32.mrb[0].mxu0
        %v3796 = vpop.f32.mrb[0].mxu0
        %3797 = vdwg.mxu0
        %3798 = vst [vmem:[%s306] sm:$0xff] %v3793
        %p3799 = scmp.lt.s32.totalorder %s18, 1
        %s3800 = scalar_select %p3799, %s18, 1
        %s3801 = smul.addr %s3800, 8
        %s3802 = scalar_lea.vmem %s6, %s3801
        // Predicated region
        $region49: #{rrs_forward.1} parent=43 // pred_check
          %p3803 = pneg %p182
        $region50: #{rrs_forward.1} parent=43 // pred_check_branch
          %3805 = sbr.rel (%p3803) target = $region52
        $region51: #{rrs_forward.1} parent=43 // pred_region
          _
        $region52: #{rrs_forward.1} parent=43 // pred_fallthru
          _
      $region44: #{rrs_forward.1} parent=5 // pred_fallthru
        _
      %p3806 = scmp.le.s32.totalorder 2, %s13
      // Predicated region
      $region53: #{rrs_forward.1} parent=5 // pred_check
        %p3807 = pneg %p3806
      $region54: #{rrs_forward.1} parent=5 // pred_check_branch
        %3809 = sbr.rel (%p3807) target = $region56
      $region55: #{rrs_forward.1} parent=5 // pred_region
        %s3810 = ssub.s32 %s13, 2
        // Predicated region
        $region57: #{rrs_forward.1} parent=55 // pred_check
          %p3811 = pneg %p188
        $region58: #{rrs_forward.1} parent=55 // pred_check_branch
          %3813 = sbr.rel (%p3811) target = $region60
        $region59: #{rrs_forward.1} parent=55 // pred_region
          %p3814 = scmp.lt.s32.totalorder %s19, 1
          %s3815 = scalar_select %p3814, %s19, 1
          %s3816 = smul.addr %s3815, 8
          %s3817 = scalar_lea.vmem %s6, %s3816
        $region60: #{rrs_forward.1} parent=55 // pred_fallthru
          _
      $region56: #{rrs_forward.1} parent=5 // pred_fallthru
        _
    $region6: #{rrs_forward.1} parent=1 // loop_footer
      %s17 = sadd.s32 1, %s13
    $region7: #{rrs_forward.1} parent=1 // loop_footer_branch
      %12 = sbr.rel target = $region3
    $region8: #{rrs_forward.1} parent=1 // loop_exit
      _
    %3818 = vsyncpa [#allocation3], 1
    %s3819 = scalar_lea.sflag [#allocation3], 1
    %3820 = vsyncpa %s3819, 1

</llo_original>
